<compile_context>
chip_gen: v7x
topology: tpu7x:2x2x1
jax: 0.10.0
libtpu: 0.0.40
codegen_flags: <defaults>
</compile_context>

<pallas_src>
import jax
import jax.numpy as jnp
import numpy as np
from jax.experimental import pallas as pl
from jax.experimental.pallas import tpu as pltpu

_LANE = 128


def _round_up(n, m):
    return ((n + m - 1) // m) * m


# ---------------------------------------------------------------------------
# Kernel: one (image, row-tile) per grid step.
# ---------------------------------------------------------------------------
def _bottleneck_kernel(x_ref, x_hbm_ref, w1d_ref, b1d_ref, w2_ref, b2_ref,
                       w3_ref, b3_ref, out_ref, hpad_ref, hx_ref, sem_ref):
    """All convs are MXU matmuls on lane-padded channels.

    x_ref:     (TILE_H, W, Cin_p) bf16   activation row-tile (batch squeezed)
    x_hbm_ref: (N, H, W, Cin_p)   bf16   full activation in HBM (halo DMAs)
    w1d_ref:   (Cin_p, width_p+planes_p) conv1 + downsample merged (BN folded)
    w2_ref:    (9, width_p, width_p)     conv2 taps, index = 3*dy + dx
    w3_ref:    (width_p, planes_p)
    b*_ref:    (1, C) f32 biases (BN scales already folded into weights)
    hpad_ref:  VMEM (TILE_H+2, W, width_p) H-padded h1 (halo rows included)
    hx_ref:    VMEM (2, W, Cin_p)          halo-row landing buffer
    sem_ref:   DMA semaphores (2,)
    """
    n = pl.program_id(0)
    r = pl.program_id(1)
    n_row_tiles = pl.num_programs(1)

    tile_h, W, cin_p = x_ref.shape
    H = x_hbm_ref.shape[1]
    width_p = w2_ref.shape[2]
    planes_p = w3_ref.shape[1]
    cdt = w1d_ref.dtype                       # matmul dtype (bf16)

    # ---- kick off the two halo-row DMAs (overlap with the conv1 matmul) -----
    # Source rows are clamped into the image; out-of-image halos are zeroed
    # below, so the clamped fetch is harmless.
    top_src = jnp.maximum(r * tile_h - 1, 0)
    bot_src = jnp.minimum(r * tile_h + tile_h, H - 1)
    top_cp = pltpu.make_async_copy(x_hbm_ref.at[n, top_src], hx_ref.at[0],
                                   sem_ref.at[0])
    bot_cp = pltpu.make_async_copy(x_hbm_ref.at[n, bot_src], hx_ref.at[1],
                                   sem_ref.at[1])
    top_cp.start()
    bot_cp.start()

    # ---- conv1 (1x1) + downsample conv (1x1) as ONE matmul -------------------
    x2d = x_ref[...].reshape(tile_h * W, cin_p)                       # bf16
    comb = jnp.dot(x2d, w1d_ref[...],
                   preferred_element_type=jnp.float32) + b1d_ref[...]
    h1 = jnp.maximum(comb[:, :width_p], 0.0)          # main branch (HW, width_p)
    idn = comb[:, width_p:].astype(cdt)               # skip branch, bf16 liveness

    hpad_ref[1:tile_h + 1, :, :] = h1.astype(cdt).reshape(tile_h, W, width_p)

    # ---- halo rows: conv1 only (skip branch never needs the halo) ------------
    top_cp.wait()
    bot_cp.wait()
    halo2d = hx_ref[...].reshape(2 * W, cin_p)
    halo_h1 = jnp.maximum(
        jnp.dot(halo2d, w1d_ref[:, :width_p],
                preferred_element_type=jnp.float32) + b1d_ref[:, :width_p],
        0.0).astype(cdt).reshape(2, W, width_p)
    hpad_ref[0, :, :] = halo_h1[0]
    hpad_ref[tile_h + 1, :, :] = halo_h1[1]

    zrow = jnp.zeros((W, width_p), cdt)

    @pl.when(r == 0)
    def _():                                   # top image border: zero padding
        hpad_ref[0, :, :] = zrow

    @pl.when(r == n_row_tiles - 1)
    def _():                                   # bottom image border
        hpad_ref[tile_h + 1, :, :] = zrow

    # ---- conv2 (3x3, pad=1): 9 direct K=width_p matmuls ----------------------
    hfull = hpad_ref[...]                                 # (tile_h+2, W, width_p)
    zcol = jnp.zeros((tile_h + 2, 1, width_p), cdt)
    variants = (
        jnp.concatenate([zcol, hfull[:, :W - 1, :]], axis=1),   # dx=0: col x-1
        hfull,                                                  # dx=1: col x
        jnp.concatenate([hfull[:, 1:, :], zcol], axis=1),       # dx=2: col x+1
    )
    acc = None
    for dy in range(3):
        for dx in range(3):
            tap = variants[dx][dy:dy + tile_h].reshape(tile_h * W, width_p)
            part = jnp.dot(tap, w2_ref[3 * dy + dx],
                           preferred_element_type=jnp.float32)
            acc = part if acc is None else acc + part
    h2 = jnp.maximum(acc + b2_ref[...], 0.0)              # (HW, width_p) f32

    # ---- conv3 (1x1) + bias, residual add, final ReLU -------------------------
    h3 = jnp.dot(h2.astype(cdt), w3_ref[...],
                 preferred_element_type=jnp.float32) + b3_ref[...]
    out = jnp.maximum(h3 + idn.astype(jnp.float32), 0.0)
    out_ref[...] = out.reshape(tile_h, W, planes_p).astype(out_ref.dtype)


# ---------------------------------------------------------------------------
# Wrappers
# ---------------------------------------------------------------------------
def _pick_tile_h(H, W, cin_p, width_p, planes_p, budget_bytes=8 << 20):
    """Largest divisor of H whose per-step activation working set fits budget."""
    cb = 2  # bf16
    per_row = W * (2 * cin_p * cb          # x block (double-buffered)
                   + 2 * planes_p * 4      # out block (double-buffered)
                   + (width_p + planes_p) * 4   # comb
                   + planes_p * cb              # idn
                   + 2 * width_p * 4            # acc / h2
                   + 4 * width_p * cb)          # hpad + dx variants
    best = 1
    for t in range(1, H + 1):
        if H % t == 0 and t * per_row <= budget_bytes:
            best = t
    return best


def _vmem_limit_bytes(tile_h, W, cin_p, width_p, planes_p, cbytes):
    hw = tile_h * W
    act = 2 * hw * cin_p * cbytes + 2 * hw * planes_p * 4
    wts = (cin_p * (width_p + planes_p) + 9 * width_p * width_p
           + width_p * planes_p) * cbytes * 2     # weights (still 2x-buffered)
    bias = (2 * (width_p + planes_p) + width_p + planes_p) * 4 * 2
    scratch = ((tile_h + 2) * W * width_p + 2 * W * cin_p) * cbytes
    temps = (hw * (width_p + planes_p) * 4        # comb
             + hw * planes_p * cbytes             # idn (bf16)
             + 2 * hw * width_p * 4               # acc / h2
             + 3 * (tile_h + 2) * W * width_p * cbytes)   # conv2 dx variants
    est = act + wts + bias + scratch + temps
    try:
        cap = int(pltpu.get_tpu_info().vmem_capacity_bytes)
    except Exception:
        cap = 64 * 1024 * 1024                    # conservative (v7x per-core)
    cap = int(cap * 0.85)                         # headroom for Mosaic scratch
    return int(min(cap, max(32 * 1024 * 1024, 2 * est)))


def bottleneck_forward_nhwc(x_nhwc, params, tile_h=None):
    """Native entry point: x (N, H, W, Cin) -> (N, H, W, planes) f32."""
    dims = params["dims"]
    N, H, W, cin = x_nhwc.shape
    cin_p, width_p = dims["inplanes_p"], dims["width_p"]
    planes, planes_p = dims["planes"], dims["planes_p"]
    cdt = params["w1d"].dtype
    cbytes = jnp.dtype(cdt).itemsize

    # bf16 activation I/O: halves the dominant HBM->VMEM DMA.
    x = x_nhwc.astype(cdt)
    if cin_p != cin:
        x = jnp.pad(x, ((0, 0), (0, 0), (0, 0), (0, cin_p - cin)))

    if tile_h is None:
        tile_h = _pick_tile_h(H, W, cin_p, width_p, planes_p)
    assert H % tile_h == 0, "tile_h must divide H"
    n_row_tiles = H // tile_h

    weights = [params[k] for k in ("w1d", "b1d", "w2", "b2", "w3", "b3")]

    def full_spec(a):
        return pl.BlockSpec(a.shape, lambda n, r, _nd=a.ndim: (0,) * _nd)

    in_specs = [
        pl.BlockSpec((pl.Squeezed(), tile_h, W, cin_p),
                     lambda n, r: (n, r, 0, 0)),
        pl.BlockSpec(memory_space=pl.ANY),        # raw HBM view for halo DMAs
    ] + [full_spec(a) for a in weights]

    out_p = pl.pallas_call(
        _bottleneck_kernel,
        out_shape=jax.ShapeDtypeStruct((N, H, W, planes_p), jnp.float32),
        grid_spec=pltpu.PrefetchScalarGridSpec(
            num_scalar_prefetch=0,
            grid=(N, n_row_tiles),
            in_specs=in_specs,
            out_specs=pl.BlockSpec((pl.Squeezed(), tile_h, W, planes_p),
                                   lambda n, r: (n, r, 0, 0)),
            scratch_shapes=[
                pltpu.VMEM((tile_h + 2, W, width_p), cdt),
                pltpu.VMEM((2, W, cin_p), cdt),
                pltpu.SemaphoreType.DMA((2,)),
            ],
        ),
        compiler_params=pltpu.CompilerParams(
            dimension_semantics=("parallel", "parallel"),
            vmem_limit_bytes=_vmem_limit_bytes(tile_h, W, cin_p, width_p,
                                               planes_p, cbytes)),
    )(x, x, *weights)

    if planes_p != planes:
        out_p = out_p[..., :planes]
    return out_p


def bottleneck_forward_nchw(x_nchw, params, tile_h=None):
    """Compatibility wrapper for the PyTorch NCHW layout.  Prefer the NHWC
    entry point inside a model to avoid these two boundary transposes."""
    x = jnp.transpose(x_nchw, (0, 2, 3, 1))
    y = bottleneck_forward_nhwc(x, params, tile_h=tile_h)
    return jnp.transpose(y, (0, 3, 1, 2))


# ---------------------------------------------------------------------------
# Parameter prep: fold BN into weights, convert to matmul layout, lane-pad, bf16.
# ---------------------------------------------------------------------------
def prepare_params(raw, eps=1e-5, compute_dtype=jnp.bfloat16):
    w1 = jnp.asarray(raw["conv1_w"], jnp.float32)   # (width,  Cin,   1, 1)
    w2 = jnp.asarray(raw["conv2_w"], jnp.float32)   # (width,  width, 3, 3)
    w3 = jnp.asarray(raw["conv3_w"], jnp.float32)   # (planes, width, 1, 1)
    width, inplanes = int(w1.shape[0]), int(w1.shape[1])
    planes = int(w3.shape[0])
    inplanes_p = _round_up(inplanes, _LANE)
    width_p = _round_up(width, _LANE)
    planes_p = _round_up(planes, _LANE)

    def fold(bn):
        scale = bn["g"] / jnp.sqrt(bn["v"] + eps)
        return scale, bn["b"] - bn["m"] * scale

    def mat1x1(w, scale, cin, cin_p, cout, cout_p):
        m = (w[:, :, 0, 0] * scale[:, None]).T                 # (cin, cout)
        return jnp.zeros((cin_p, cout_p), jnp.float32).at[:cin, :cout].set(m)

    def vec(b, c, cp):
        return jnp.zeros((1, cp), jnp.float32).at[0, :c].set(b)

    s1, b1 = fold(raw["bn1"])
    s2, b2 = fold(raw["bn2"])
    s3, b3 = fold(raw["bn3"])

    w1m = mat1x1(w1, s1, inplanes, inplanes_p, width, width_p)

    if "down_w" in raw:
        wd = jnp.asarray(raw["down_w"], jnp.float32)
        sd, bd = fold(raw["bnd"])
        wdm = mat1x1(wd, sd, inplanes, inplanes_p, planes, planes_p)
        bdv = vec(bd, planes, planes_p)
    else:
        # Identity downsample is only valid when shapes match (stride == 1).
        assert inplanes == planes, "identity downsample needs inplanes == planes"
        eye = jnp.eye(inplanes, dtype=jnp.float32)
        wdm = jnp.zeros((inplanes_p, planes_p),
                        jnp.float32).at[:inplanes, :planes].set(eye)
        bdv = jnp.zeros((1, planes_p), jnp.float32)

    # Merge conv1 and downsample conv along the output axis.
    w1d = jnp.concatenate([w1m, wdm], axis=1).astype(compute_dtype)
    b1d = jnp.concatenate([vec(b1, width, width_p), bdv], axis=1)

    # conv2: fold bn2 scale into output channels; 9 separate (K=width_p) taps.
    w2f = w2 * s2[:, None, None, None]
    taps = []
    for dy in range(3):
        for dx in range(3):
            t = w2f[:, :, dy, dx].T                            # (in, out)
            taps.append(jnp.zeros((width_p, width_p),
                                  jnp.float32).at[:width, :width].set(t))
    w2m = jnp.stack(taps, axis=0).astype(compute_dtype)        # (9, wp, wp)

    w3m = mat1x1(w3, s3, width, width_p, planes, planes_p).astype(compute_dtype)

    return {
        "w1d": w1d, "b1d": b1d,
        "w2": w2m, "b2": vec(b2, width, width_p),
        "w3": w3m, "b3": vec(b3, planes, planes_p),
        "dims": dict(inplanes=inplanes, inplanes_p=inplanes_p,
                     width=width, width_p=width_p,
                     planes=planes, planes_p=planes_p),
    }


# ---------------------------------------------------------------------------
# Deterministic synthetic parameters in PyTorch layout + pure-JAX reference.
# ---------------------------------------------------------------------------
def init_raw_params(key, inplanes, planes, base_width=64, groups=1):
    width = int(planes * (base_width / 64.0)) * groups
    ks = jax.random.split(key, 8)

    def conv_w(k, cout, cin, kh, kw):
        return (0.1 * jax.random.normal(k, (cout, cin, kh, kw))).astype(jnp.float32)

    def bn_p(k, c):
        k1, k2, k3, k4 = jax.random.split(k, 4)
        return dict(
            g=(1.0 + 0.1 * jax.random.normal(k1, (c,))).astype(jnp.float32),
            b=(0.1 * jax.random.normal(k2, (c,))).astype(jnp.float32),
            m=(0.1 * jax.random.normal(k3, (c,))).astype(jnp.float32),
            v=(jax.nn.softplus(jax.random.normal(k4, (c,))) + 0.5).astype(jnp.float32),
        )

    return {
        "conv1_w": conv_w(ks[0], width, inplanes, 1, 1),
        "conv2_w": conv_w(ks[1], width, width, 3, 3),
        "conv3_w": conv_w(ks[2], planes, width, 1, 1),
        "down_w": conv_w(ks[3], planes, inplanes, 1, 1),
        "bn1": bn_p(ks[4], width), "bn2": bn_p(ks[5], width),
        "bn3": bn_p(ks[6], planes), "bnd": bn_p(ks[7], planes),
    }


def reference_forward(x_nchw, raw, eps=1e-5):
    """Pure-JAX NCHW reference matching the PyTorch module (inference-mode BN)."""
    def conv(v, w, pad):
        return jax.lax.conv_general_dilated(
            v, w, window_strides=(1, 1), padding=((pad, pad), (pad, pad)),
            dimension_numbers=("NCHW", "OIHW", "NCHW"))

    def bn(v, p):
        inv = 1.0 / jnp.sqrt(p["v"] + eps)
        return ((v - p["m"][None, :, None, None]) * (p["g"] * inv)[None, :, None, None]
                + p["b"][None, :, None, None])

    x = x_nchw.astype(jnp.float32)
    h = jax.nn.relu(bn(conv(x, raw["conv1_w"], 0), raw["bn1"]))
    h = jax.nn.relu(bn(conv(h, raw["conv2_w"], 1), raw["bn2"]))
    h = bn(conv(h, raw["conv3_w"], 0), raw["bn3"])
    if "down_w" in raw:
        idn = bn(conv(x, raw["down_w"], 0), raw["bnd"])
    else:
        idn = x
    return jax.nn.relu(h + idn)


if __name__ == "__main__":
    key = jax.random.PRNGKey(0)
    k_x, k_p = jax.random.split(key)

    N, inplanes, H, W = 2, 4, 16, 16
    planes = 8  # inplanes != planes -> downsample = conv1x1 + BN

    x = jax.random.normal(k_x, (N, inplanes, H, W), dtype=jnp.float32)
    raw = init_raw_params(k_p, inplanes, planes)
    params = prepare_params(raw)

    # tile_h=8 -> 2 row tiles per image: exercises the halo-DMA path.
    out = jax.block_until_ready(bottleneck_forward_nchw(x, params, tile_h=8))
    ref = jax.block_until_ready(reference_forward(x, raw))

    # bf16 activations/weights in the MXU vs f32 reference -> loose tolerance.
    np.testing.assert_allclose(np.asarray(out), np.asarray(ref),
                               rtol=3e-2, atol=3e-2)
    assert out.shape == (N, planes, H, W)
    print("KERNEL_OK")
</pallas_src>

<mosaic_0001>
module attributes {stable_mosaic.version = 11 : i64} {
  func.func @_bottleneck_kernel(%arg0: i32, %arg1: i32, %arg2: memref<1x8x16x128xbf16, #tpu.memory_space<vmem>>, %arg3: memref<2x16x16x128xbf16, #tpu.memory_space<any>>, %arg4: memref<128x256xbf16, #tpu.memory_space<vmem>>, %arg5: memref<1x256xf32, #tpu.memory_space<vmem>>, %arg6: memref<9x128x128xbf16, #tpu.memory_space<vmem>>, %arg7: memref<1x128xf32, #tpu.memory_space<vmem>>, %arg8: memref<128x128xbf16, #tpu.memory_space<vmem>>, %arg9: memref<1x128xf32, #tpu.memory_space<vmem>>, %arg10: memref<1x8x16x128xf32, #tpu.memory_space<vmem>>, %arg11: memref<10x16x128xbf16, #tpu.memory_space<vmem>>, %arg12: memref<2x16x128xbf16, #tpu.memory_space<vmem>>, %arg13: memref<2x!tpu.dma_semaphore, #tpu.memory_space<semaphore_mem>>) attributes {dimension_semantics = [#tpu.dimension_semantics<parallel>, #tpu.dimension_semantics<parallel>], iteration_bounds = array<i64: 2, 2>, scalar_prefetch = 0 : i64, scratch_operands = 3 : i64, tpu.core_type = #tpu.core_type<tc>, window_params = [{transform_indices = @transform_0, window_bounds = array<i64: 1, 8, 16, 128>}, {}, {pipeline_mode = #tpu.pipeline_mode<synchronous>, transform_indices = @transform_2, window_bounds = array<i64: 128, 256>}, {pipeline_mode = #tpu.pipeline_mode<synchronous>, transform_indices = @transform_3, window_bounds = array<i64: 1, 256>}, {pipeline_mode = #tpu.pipeline_mode<synchronous>, transform_indices = @transform_4, window_bounds = array<i64: 9, 128, 128>}, {pipeline_mode = #tpu.pipeline_mode<synchronous>, transform_indices = @transform_5, window_bounds = array<i64: 1, 128>}, {pipeline_mode = #tpu.pipeline_mode<synchronous>, transform_indices = @transform_6, window_bounds = array<i64: 128, 128>}, {pipeline_mode = #tpu.pipeline_mode<synchronous>, transform_indices = @transform_7, window_bounds = array<i64: 1, 128>}, {transform_indices = @transform_8, window_bounds = array<i64: 1, 8, 16, 128>}]} {
    %c8_i32 = arith.constant 8 : i32
    %0 = arith.muli %arg1, %c8_i32 : i32
    %c1_i32 = arith.constant 1 : i32
    %1 = arith.subi %0, %c1_i32 : i32
    %c0_i32 = arith.constant 0 : i32
    %2 = arith.maxsi %1, %c0_i32 : i32
    %c8_i32_0 = arith.constant 8 : i32
    %3 = arith.muli %arg1, %c8_i32_0 : i32
    %c8_i32_1 = arith.constant 8 : i32
    %4 = arith.addi %3, %c8_i32_1 : i32
    %c15_i32 = arith.constant 15 : i32
    %5 = arith.minsi %4, %c15_i32 : i32
    %c0_i32_2 = arith.constant 0 : i32
    %c0_i32_3 = arith.constant 0 : i32
    %c0_i32_4 = arith.constant 0 : i32
    %c0_i32_5 = arith.constant 0 : i32
    %6 = tpu.memref_slice %arg3[%arg0, %2, %c0_i32_4, %c0_i32_5] : memref<2x16x16x128xbf16, #tpu.memory_space<any>> -> memref<1x1x16x128xbf16, #tpu.memory_space<any>>
    %7 = tpu.memref_squeeze %6 : memref<1x1x16x128xbf16, #tpu.memory_space<any>> -> memref<16x128xbf16, #tpu.memory_space<any>>
    %c0_i32_6 = arith.constant 0 : i32
    %c0_i32_7 = arith.constant 0 : i32
    %8 = tpu.memref_slice %arg12[%c0_i32_2, %c0_i32_6, %c0_i32_7] : memref<2x16x128xbf16, #tpu.memory_space<vmem>> -> memref<1x16x128xbf16, #tpu.memory_space<vmem>>
    %9 = tpu.memref_squeeze %8 : memref<1x16x128xbf16, #tpu.memory_space<vmem>> -> memref<16x128xbf16, #tpu.memory_space<vmem>>
    %10 = tpu.memref_slice %arg13[%c0_i32_3] : memref<2x!tpu.dma_semaphore, #tpu.memory_space<semaphore_mem>> -> memref<1x!tpu.dma_semaphore, #tpu.memory_space<semaphore_mem>>
    %11 = tpu.memref_squeeze %10 : memref<1x!tpu.dma_semaphore, #tpu.memory_space<semaphore_mem>> -> memref<!tpu.dma_semaphore, #tpu.memory_space<semaphore_mem>>
    tpu.enqueue_dma source(%7 : memref<16x128xbf16, #tpu.memory_space<any>>) target(%9 : memref<16x128xbf16, #tpu.memory_space<vmem>>) target_semaphore(%11 : memref<!tpu.dma_semaphore, #tpu.memory_space<semaphore_mem>>)
    %c1_i32_8 = arith.constant 1 : i32
    %c1_i32_9 = arith.constant 1 : i32
    %c0_i32_10 = arith.constant 0 : i32
    %c0_i32_11 = arith.constant 0 : i32
    %12 = tpu.memref_slice %arg3[%arg0, %5, %c0_i32_10, %c0_i32_11] : memref<2x16x16x128xbf16, #tpu.memory_space<any>> -> memref<1x1x16x128xbf16, #tpu.memory_space<any>>
    %13 = tpu.memref_squeeze %12 : memref<1x1x16x128xbf16, #tpu.memory_space<any>> -> memref<16x128xbf16, #tpu.memory_space<any>>
    %c0_i32_12 = arith.constant 0 : i32
    %c0_i32_13 = arith.constant 0 : i32
    %14 = tpu.memref_slice %arg12[%c1_i32_8, %c0_i32_12, %c0_i32_13] : memref<2x16x128xbf16, #tpu.memory_space<vmem>> -> memref<1x16x128xbf16, #tpu.memory_space<vmem>>
    %15 = tpu.memref_squeeze %14 : memref<1x16x128xbf16, #tpu.memory_space<vmem>> -> memref<16x128xbf16, #tpu.memory_space<vmem>>
    %16 = tpu.memref_slice %arg13[%c1_i32_9] : memref<2x!tpu.dma_semaphore, #tpu.memory_space<semaphore_mem>> -> memref<1x!tpu.dma_semaphore, #tpu.memory_space<semaphore_mem>>
    %17 = tpu.memref_squeeze %16 : memref<1x!tpu.dma_semaphore, #tpu.memory_space<semaphore_mem>> -> memref<!tpu.dma_semaphore, #tpu.memory_space<semaphore_mem>>
    tpu.enqueue_dma source(%13 : memref<16x128xbf16, #tpu.memory_space<any>>) target(%15 : memref<16x128xbf16, #tpu.memory_space<vmem>>) target_semaphore(%17 : memref<!tpu.dma_semaphore, #tpu.memory_space<semaphore_mem>>)
    %c0 = arith.constant 0 : index
    %c0_14 = arith.constant 0 : index
    %c0_15 = arith.constant 0 : index
    %c0_16 = arith.constant 0 : index
    %18 = vector.load %arg2[%c0, %c0_14, %c0_15, %c0_16] : memref<1x8x16x128xbf16, #tpu.memory_space<vmem>>, vector<1x8x16x128xbf16>
    %19 = vector.shape_cast %18 : vector<1x8x16x128xbf16> to vector<8x16x128xbf16>
    %20 = vector.shape_cast %19 : vector<8x16x128xbf16> to vector<128x128xbf16>
    %c0_17 = arith.constant 0 : index
    %c0_18 = arith.constant 0 : index
    %21 = vector.load %arg4[%c0_17, %c0_18] : memref<128x256xbf16, #tpu.memory_space<vmem>>, vector<128x256xbf16>
    %cst = arith.constant dense<0.000000e+00> : vector<128x256xf32>
    %22 = tpu.matmul %20, %21, %cst {dimension_numbers = #tpu.dot_dimension_numbers<[1], [0], [0], [1], [0, 0, 1, 1], [], []>} : vector<128x128xbf16>, vector<128x256xbf16>, vector<128x256xf32> -> vector<128x256xf32>
    %c0_19 = arith.constant 0 : index
    %c0_20 = arith.constant 0 : index
    %23 = vector.load %arg5[%c0_19, %c0_20] : memref<1x256xf32, #tpu.memory_space<vmem>>, vector<1x256xf32>
    %24 = vector.broadcast %23 : vector<1x256xf32> to vector<128x256xf32>
    %25 = arith.addf %22, %24 : vector<128x256xf32>
    %26 = vector.extract_strided_slice %25 {offsets = [0, 0], sizes = [128, 128], strides = [1, 1]} : vector<128x256xf32> to vector<128x128xf32>
    %cst_21 = arith.constant 0.000000e+00 : f32
    %27 = vector.broadcast %cst_21 : f32 to vector<128x128xf32>
    %28 = arith.maximumf %26, %27 : vector<128x128xf32>
    %29 = vector.extract_strided_slice %25 {offsets = [0, 128], sizes = [128, 128], strides = [1, 1]} : vector<128x256xf32> to vector<128x128xf32>
    %30 = arith.truncf %29 : vector<128x128xf32> to vector<128x128xbf16>
    %31 = arith.truncf %28 : vector<128x128xf32> to vector<128x128xbf16>
    %32 = vector.shape_cast %31 : vector<128x128xbf16> to vector<8x16x128xbf16>
    %c1 = arith.constant 1 : index
    %c0_22 = arith.constant 0 : index
    %c0_23 = arith.constant 0 : index
    %33 = vector.load %arg11[%c1, %c0_22, %c0_23] : memref<10x16x128xbf16, #tpu.memory_space<vmem>>, vector<8x16x128xbf16>
    tpu.vector_store %arg11[%c1, %c0_22, %c0_23], %32 {strides = array<i32>} : memref<10x16x128xbf16, #tpu.memory_space<vmem>>, vector<8x16x128xbf16>,
    %c0_i32_24 = arith.constant 0 : i32
    %c0_i32_25 = arith.constant 0 : i32
    %c0_i32_26 = arith.constant 0 : i32
    %c0_i32_27 = arith.constant 0 : i32
    %34 = tpu.memref_slice %arg3[%arg0, %2, %c0_i32_26, %c0_i32_27] : memref<2x16x16x128xbf16, #tpu.memory_space<any>> -> memref<1x1x16x128xbf16, #tpu.memory_space<any>>
    %35 = tpu.memref_squeeze %34 : memref<1x1x16x128xbf16, #tpu.memory_space<any>> -> memref<16x128xbf16, #tpu.memory_space<any>>
    %c0_i32_28 = arith.constant 0 : i32
    %c0_i32_29 = arith.constant 0 : i32
    %36 = tpu.memref_slice %arg12[%c0_i32_24, %c0_i32_28, %c0_i32_29] : memref<2x16x128xbf16, #tpu.memory_space<vmem>> -> memref<1x16x128xbf16, #tpu.memory_space<vmem>>
    %37 = tpu.memref_squeeze %36 : memref<1x16x128xbf16, #tpu.memory_space<vmem>> -> memref<16x128xbf16, #tpu.memory_space<vmem>>
    %38 = tpu.memref_slice %arg13[%c0_i32_25] : memref<2x!tpu.dma_semaphore, #tpu.memory_space<semaphore_mem>> -> memref<1x!tpu.dma_semaphore, #tpu.memory_space<semaphore_mem>>
    %39 = tpu.memref_squeeze %38 : memref<1x!tpu.dma_semaphore, #tpu.memory_space<semaphore_mem>> -> memref<!tpu.dma_semaphore, #tpu.memory_space<semaphore_mem>>
    tpu.wait_dma2 semaphore(%39 : memref<!tpu.dma_semaphore, #tpu.memory_space<semaphore_mem>>) src(%35 : memref<16x128xbf16, #tpu.memory_space<any>>) dst(%37 : memref<16x128xbf16, #tpu.memory_space<vmem>>)
    %c1_i32_30 = arith.constant 1 : i32
    %c1_i32_31 = arith.constant 1 : i32
    %c0_i32_32 = arith.constant 0 : i32
    %c0_i32_33 = arith.constant 0 : i32
    %40 = tpu.memref_slice %arg3[%arg0, %5, %c0_i32_32, %c0_i32_33] : memref<2x16x16x128xbf16, #tpu.memory_space<any>> -> memref<1x1x16x128xbf16, #tpu.memory_space<any>>
    %41 = tpu.memref_squeeze %40 : memref<1x1x16x128xbf16, #tpu.memory_space<any>> -> memref<16x128xbf16, #tpu.memory_space<any>>
    %c0_i32_34 = arith.constant 0 : i32
    %c0_i32_35 = arith.constant 0 : i32
    %42 = tpu.memref_slice %arg12[%c1_i32_30, %c0_i32_34, %c0_i32_35] : memref<2x16x128xbf16, #tpu.memory_space<vmem>> -> memref<1x16x128xbf16, #tpu.memory_space<vmem>>
    %43 = tpu.memref_squeeze %42 : memref<1x16x128xbf16, #tpu.memory_space<vmem>> -> memref<16x128xbf16, #tpu.memory_space<vmem>>
    %44 = tpu.memref_slice %arg13[%c1_i32_31] : memref<2x!tpu.dma_semaphore, #tpu.memory_space<semaphore_mem>> -> memref<1x!tpu.dma_semaphore, #tpu.memory_space<semaphore_mem>>
    %45 = tpu.memref_squeeze %44 : memref<1x!tpu.dma_semaphore, #tpu.memory_space<semaphore_mem>> -> memref<!tpu.dma_semaphore, #tpu.memory_space<semaphore_mem>>
    tpu.wait_dma2 semaphore(%45 : memref<!tpu.dma_semaphore, #tpu.memory_space<semaphore_mem>>) src(%41 : memref<16x128xbf16, #tpu.memory_space<any>>) dst(%43 : memref<16x128xbf16, #tpu.memory_space<vmem>>)
    %c0_36 = arith.constant 0 : index
    %c0_37 = arith.constant 0 : index
    %c0_38 = arith.constant 0 : index
    %46 = vector.load %arg12[%c0_36, %c0_37, %c0_38] : memref<2x16x128xbf16, #tpu.memory_space<vmem>>, vector<2x16x128xbf16>
    %47 = vector.shape_cast %46 : vector<2x16x128xbf16> to vector<32x128xbf16>
    %c0_39 = arith.constant 0 : index
    %c0_40 = arith.constant 0 : index
    %48 = vector.load %arg4[%c0_39, %c0_40] : memref<128x256xbf16, #tpu.memory_space<vmem>>, vector<128x128xbf16>
    %cst_41 = arith.constant dense<0.000000e+00> : vector<32x128xf32>
    %49 = tpu.matmul %47, %48, %cst_41 {dimension_numbers = #tpu.dot_dimension_numbers<[1], [0], [0], [1], [0, 0, 1, 1], [], []>} : vector<32x128xbf16>, vector<128x128xbf16>, vector<32x128xf32> -> vector<32x128xf32>
    %c0_42 = arith.constant 0 : index
    %c0_43 = arith.constant 0 : index
    %50 = vector.load %arg5[%c0_42, %c0_43] : memref<1x256xf32, #tpu.memory_space<vmem>>, vector<1x128xf32>
    %51 = vector.broadcast %50 : vector<1x128xf32> to vector<32x128xf32>
    %52 = arith.addf %49, %51 : vector<32x128xf32>
    %cst_44 = arith.constant 0.000000e+00 : f32
    %53 = vector.broadcast %cst_44 : f32 to vector<32x128xf32>
    %54 = arith.maximumf %52, %53 : vector<32x128xf32>
    %55 = arith.truncf %54 : vector<32x128xf32> to vector<32x128xbf16>
    %56 = vector.shape_cast %55 : vector<32x128xbf16> to vector<2x16x128xbf16>
    %57 = vector.extract_strided_slice %56 {offsets = [0, 0, 0], sizes = [1, 16, 128], strides = [1, 1, 1]} : vector<2x16x128xbf16> to vector<1x16x128xbf16>
    %58 = vector.shape_cast %57 : vector<1x16x128xbf16> to vector<16x128xbf16>
    %c0_45 = arith.constant 0 : index
    %c0_46 = arith.constant 0 : index
    %c0_47 = arith.constant 0 : index
    %59 = vector.load %arg11[%c0_45, %c0_46, %c0_47] : memref<10x16x128xbf16, #tpu.memory_space<vmem>>, vector<1x16x128xbf16>
    %60 = vector.shape_cast %59 : vector<1x16x128xbf16> to vector<16x128xbf16>
    %61 = vector.shape_cast %58 : vector<16x128xbf16> to vector<1x16x128xbf16>
    tpu.vector_store %arg11[%c0_45, %c0_46, %c0_47], %61 {strides = array<i32>} : memref<10x16x128xbf16, #tpu.memory_space<vmem>>, vector<1x16x128xbf16>,
    %62 = vector.extract_strided_slice %56 {offsets = [1, 0, 0], sizes = [1, 16, 128], strides = [1, 1, 1]} : vector<2x16x128xbf16> to vector<1x16x128xbf16>
    %63 = vector.shape_cast %62 : vector<1x16x128xbf16> to vector<16x128xbf16>
    %c9 = arith.constant 9 : index
    %c0_48 = arith.constant 0 : index
    %c0_49 = arith.constant 0 : index
    %64 = vector.load %arg11[%c9, %c0_48, %c0_49] : memref<10x16x128xbf16, #tpu.memory_space<vmem>>, vector<1x16x128xbf16>
    %65 = vector.shape_cast %64 : vector<1x16x128xbf16> to vector<16x128xbf16>
    %66 = vector.shape_cast %63 : vector<16x128xbf16> to vector<1x16x128xbf16>
    tpu.vector_store %arg11[%c9, %c0_48, %c0_49], %66 {strides = array<i32>} : memref<10x16x128xbf16, #tpu.memory_space<vmem>>, vector<1x16x128xbf16>,
    %cst_50 = arith.constant 0.000000e+00 : bf16
    %67 = vector.broadcast %cst_50 : bf16 to vector<16x128xbf16>
    %c0_i32_51 = arith.constant 0 : i32
    %68 = arith.cmpi eq, %arg1, %c0_i32_51 : i32
    %69 = arith.extui %68 : i1 to i32
    %c0_i32_52 = arith.constant 0 : i32
    %70 = arith.cmpi ne, %69, %c0_i32_52 : i32
    scf.if %70 {
      %c0_101 = arith.constant 0 : index
      %c0_102 = arith.constant 0 : index
      %c0_103 = arith.constant 0 : index
      %152 = vector.load %arg11[%c0_101, %c0_102, %c0_103] : memref<10x16x128xbf16, #tpu.memory_space<vmem>>, vector<1x16x128xbf16>
      %153 = vector.shape_cast %152 : vector<1x16x128xbf16> to vector<16x128xbf16>
      %154 = vector.shape_cast %67 : vector<16x128xbf16> to vector<1x16x128xbf16>
      tpu.vector_store %arg11[%c0_101, %c0_102, %c0_103], %154 {strides = array<i32>} : memref<10x16x128xbf16, #tpu.memory_space<vmem>>, vector<1x16x128xbf16>,
    } else {
    }
    %c1_i32_53 = arith.constant 1 : i32
    %71 = arith.cmpi eq, %arg1, %c1_i32_53 : i32
    %72 = arith.extui %71 : i1 to i32
    %c0_i32_54 = arith.constant 0 : i32
    %73 = arith.cmpi ne, %72, %c0_i32_54 : i32
    scf.if %73 {
      %c9_101 = arith.constant 9 : index
      %c0_102 = arith.constant 0 : index
      %c0_103 = arith.constant 0 : index
      %152 = vector.load %arg11[%c9_101, %c0_102, %c0_103] : memref<10x16x128xbf16, #tpu.memory_space<vmem>>, vector<1x16x128xbf16>
      %153 = vector.shape_cast %152 : vector<1x16x128xbf16> to vector<16x128xbf16>
      %154 = vector.shape_cast %67 : vector<16x128xbf16> to vector<1x16x128xbf16>
      tpu.vector_store %arg11[%c9_101, %c0_102, %c0_103], %154 {strides = array<i32>} : memref<10x16x128xbf16, #tpu.memory_space<vmem>>, vector<1x16x128xbf16>,
    } else {
    }
    %c0_55 = arith.constant 0 : index
    %c0_56 = arith.constant 0 : index
    %c0_57 = arith.constant 0 : index
    %74 = vector.load %arg11[%c0_55, %c0_56, %c0_57] : memref<10x16x128xbf16, #tpu.memory_space<vmem>>, vector<10x16x128xbf16>
    %cst_58 = arith.constant 0.000000e+00 : bf16
    %75 = vector.broadcast %cst_58 : bf16 to vector<10x1x128xbf16>
    %76 = vector.extract_strided_slice %74 {offsets = [0, 0, 0], sizes = [10, 15, 128], strides = [1, 1, 1]} : vector<10x16x128xbf16> to vector<10x15x128xbf16>
    %77 = tpu.concatenate %75, %76 in 1 : vector<10x1x128xbf16>, vector<10x15x128xbf16> -> vector<10x16x128xbf16>
    %78 = vector.extract_strided_slice %74 {offsets = [0, 1, 0], sizes = [10, 15, 128], strides = [1, 1, 1]} : vector<10x16x128xbf16> to vector<10x15x128xbf16>
    %79 = tpu.concatenate %78, %75 in 1 : vector<10x15x128xbf16>, vector<10x1x128xbf16> -> vector<10x16x128xbf16>
    %80 = vector.extract_strided_slice %77 {offsets = [0, 0, 0], sizes = [8, 16, 128], strides = [1, 1, 1]} : vector<10x16x128xbf16> to vector<8x16x128xbf16>
    %81 = vector.shape_cast %80 : vector<8x16x128xbf16> to vector<128x128xbf16>
    %c0_59 = arith.constant 0 : index
    %c0_60 = arith.constant 0 : index
    %c0_61 = arith.constant 0 : index
    %82 = vector.load %arg6[%c0_59, %c0_60, %c0_61] : memref<9x128x128xbf16, #tpu.memory_space<vmem>>, vector<1x128x128xbf16>
    %83 = vector.shape_cast %82 : vector<1x128x128xbf16> to vector<128x128xbf16>
    %cst_62 = arith.constant dense<0.000000e+00> : vector<128x128xf32>
    %84 = tpu.matmul %81, %83, %cst_62 {dimension_numbers = #tpu.dot_dimension_numbers<[1], [0], [0], [1], [0, 0, 1, 1], [], []>} : vector<128x128xbf16>, vector<128x128xbf16>, vector<128x128xf32> -> vector<128x128xf32>
    %85 = vector.extract_strided_slice %74 {offsets = [0, 0, 0], sizes = [8, 16, 128], strides = [1, 1, 1]} : vector<10x16x128xbf16> to vector<8x16x128xbf16>
    %86 = vector.shape_cast %85 : vector<8x16x128xbf16> to vector<128x128xbf16>
    %c1_63 = arith.constant 1 : index
    %c0_64 = arith.constant 0 : index
    %c0_65 = arith.constant 0 : index
    %87 = vector.load %arg6[%c1_63, %c0_64, %c0_65] : memref<9x128x128xbf16, #tpu.memory_space<vmem>>, vector<1x128x128xbf16>
    %88 = vector.shape_cast %87 : vector<1x128x128xbf16> to vector<128x128xbf16>
    %cst_66 = arith.constant dense<0.000000e+00> : vector<128x128xf32>
    %89 = tpu.matmul %86, %88, %cst_66 {dimension_numbers = #tpu.dot_dimension_numbers<[1], [0], [0], [1], [0, 0, 1, 1], [], []>} : vector<128x128xbf16>, vector<128x128xbf16>, vector<128x128xf32> -> vector<128x128xf32>
    %90 = arith.addf %84, %89 : vector<128x128xf32>
    %91 = vector.extract_strided_slice %79 {offsets = [0, 0, 0], sizes = [8, 16, 128], strides = [1, 1, 1]} : vector<10x16x128xbf16> to vector<8x16x128xbf16>
    %92 = vector.shape_cast %91 : vector<8x16x128xbf16> to vector<128x128xbf16>
    %c2 = arith.constant 2 : index
    %c0_67 = arith.constant 0 : index
    %c0_68 = arith.constant 0 : index
    %93 = vector.load %arg6[%c2, %c0_67, %c0_68] : memref<9x128x128xbf16, #tpu.memory_space<vmem>>, vector<1x128x128xbf16>
    %94 = vector.shape_cast %93 : vector<1x128x128xbf16> to vector<128x128xbf16>
    %cst_69 = arith.constant dense<0.000000e+00> : vector<128x128xf32>
    %95 = tpu.matmul %92, %94, %cst_69 {dimension_numbers = #tpu.dot_dimension_numbers<[1], [0], [0], [1], [0, 0, 1, 1], [], []>} : vector<128x128xbf16>, vector<128x128xbf16>, vector<128x128xf32> -> vector<128x128xf32>
    %96 = arith.addf %90, %95 : vector<128x128xf32>
    %97 = vector.extract_strided_slice %77 {offsets = [1, 0, 0], sizes = [8, 16, 128], strides = [1, 1, 1]} : vector<10x16x128xbf16> to vector<8x16x128xbf16>
    %98 = vector.shape_cast %97 : vector<8x16x128xbf16> to vector<128x128xbf16>
    %c3 = arith.constant 3 : index
    %c0_70 = arith.constant 0 : index
    %c0_71 = arith.constant 0 : index
    %99 = vector.load %arg6[%c3, %c0_70, %c0_71] : memref<9x128x128xbf16, #tpu.memory_space<vmem>>, vector<1x128x128xbf16>
    %100 = vector.shape_cast %99 : vector<1x128x128xbf16> to vector<128x128xbf16>
    %cst_72 = arith.constant dense<0.000000e+00> : vector<128x128xf32>
    %101 = tpu.matmul %98, %100, %cst_72 {dimension_numbers = #tpu.dot_dimension_numbers<[1], [0], [0], [1], [0, 0, 1, 1], [], []>} : vector<128x128xbf16>, vector<128x128xbf16>, vector<128x128xf32> -> vector<128x128xf32>
    %102 = arith.addf %96, %101 : vector<128x128xf32>
    %103 = vector.extract_strided_slice %74 {offsets = [1, 0, 0], sizes = [8, 16, 128], strides = [1, 1, 1]} : vector<10x16x128xbf16> to vector<8x16x128xbf16>
    %104 = vector.shape_cast %103 : vector<8x16x128xbf16> to vector<128x128xbf16>
    %c4 = arith.constant 4 : index
    %c0_73 = arith.constant 0 : index
    %c0_74 = arith.constant 0 : index
    %105 = vector.load %arg6[%c4, %c0_73, %c0_74] : memref<9x128x128xbf16, #tpu.memory_space<vmem>>, vector<1x128x128xbf16>
    %106 = vector.shape_cast %105 : vector<1x128x128xbf16> to vector<128x128xbf16>
    %cst_75 = arith.constant dense<0.000000e+00> : vector<128x128xf32>
    %107 = tpu.matmul %104, %106, %cst_75 {dimension_numbers = #tpu.dot_dimension_numbers<[1], [0], [0], [1], [0, 0, 1, 1], [], []>} : vector<128x128xbf16>, vector<128x128xbf16>, vector<128x128xf32> -> vector<128x128xf32>
    %108 = arith.addf %102, %107 : vector<128x128xf32>
    %109 = vector.extract_strided_slice %79 {offsets = [1, 0, 0], sizes = [8, 16, 128], strides = [1, 1, 1]} : vector<10x16x128xbf16> to vector<8x16x128xbf16>
    %110 = vector.shape_cast %109 : vector<8x16x128xbf16> to vector<128x128xbf16>
    %c5 = arith.constant 5 : index
    %c0_76 = arith.constant 0 : index
    %c0_77 = arith.constant 0 : index
    %111 = vector.load %arg6[%c5, %c0_76, %c0_77] : memref<9x128x128xbf16, #tpu.memory_space<vmem>>, vector<1x128x128xbf16>
    %112 = vector.shape_cast %111 : vector<1x128x128xbf16> to vector<128x128xbf16>
    %cst_78 = arith.constant dense<0.000000e+00> : vector<128x128xf32>
    %113 = tpu.matmul %110, %112, %cst_78 {dimension_numbers = #tpu.dot_dimension_numbers<[1], [0], [0], [1], [0, 0, 1, 1], [], []>} : vector<128x128xbf16>, vector<128x128xbf16>, vector<128x128xf32> -> vector<128x128xf32>
    %114 = arith.addf %108, %113 : vector<128x128xf32>
    %115 = vector.extract_strided_slice %77 {offsets = [2, 0, 0], sizes = [8, 16, 128], strides = [1, 1, 1]} : vector<10x16x128xbf16> to vector<8x16x128xbf16>
    %116 = vector.shape_cast %115 : vector<8x16x128xbf16> to vector<128x128xbf16>
    %c6 = arith.constant 6 : index
    %c0_79 = arith.constant 0 : index
    %c0_80 = arith.constant 0 : index
    %117 = vector.load %arg6[%c6, %c0_79, %c0_80] : memref<9x128x128xbf16, #tpu.memory_space<vmem>>, vector<1x128x128xbf16>
    %118 = vector.shape_cast %117 : vector<1x128x128xbf16> to vector<128x128xbf16>
    %cst_81 = arith.constant dense<0.000000e+00> : vector<128x128xf32>
    %119 = tpu.matmul %116, %118, %cst_81 {dimension_numbers = #tpu.dot_dimension_numbers<[1], [0], [0], [1], [0, 0, 1, 1], [], []>} : vector<128x128xbf16>, vector<128x128xbf16>, vector<128x128xf32> -> vector<128x128xf32>
    %120 = arith.addf %114, %119 : vector<128x128xf32>
    %121 = vector.extract_strided_slice %74 {offsets = [2, 0, 0], sizes = [8, 16, 128], strides = [1, 1, 1]} : vector<10x16x128xbf16> to vector<8x16x128xbf16>
    %122 = vector.shape_cast %121 : vector<8x16x128xbf16> to vector<128x128xbf16>
    %c7 = arith.constant 7 : index
    %c0_82 = arith.constant 0 : index
    %c0_83 = arith.constant 0 : index
    %123 = vector.load %arg6[%c7, %c0_82, %c0_83] : memref<9x128x128xbf16, #tpu.memory_space<vmem>>, vector<1x128x128xbf16>
    %124 = vector.shape_cast %123 : vector<1x128x128xbf16> to vector<128x128xbf16>
    %cst_84 = arith.constant dense<0.000000e+00> : vector<128x128xf32>
    %125 = tpu.matmul %122, %124, %cst_84 {dimension_numbers = #tpu.dot_dimension_numbers<[1], [0], [0], [1], [0, 0, 1, 1], [], []>} : vector<128x128xbf16>, vector<128x128xbf16>, vector<128x128xf32> -> vector<128x128xf32>
    %126 = arith.addf %120, %125 : vector<128x128xf32>
    %127 = vector.extract_strided_slice %79 {offsets = [2, 0, 0], sizes = [8, 16, 128], strides = [1, 1, 1]} : vector<10x16x128xbf16> to vector<8x16x128xbf16>
    %128 = vector.shape_cast %127 : vector<8x16x128xbf16> to vector<128x128xbf16>
    %c8 = arith.constant 8 : index
    %c0_85 = arith.constant 0 : index
    %c0_86 = arith.constant 0 : index
    %129 = vector.load %arg6[%c8, %c0_85, %c0_86] : memref<9x128x128xbf16, #tpu.memory_space<vmem>>, vector<1x128x128xbf16>
    %130 = vector.shape_cast %129 : vector<1x128x128xbf16> to vector<128x128xbf16>
    %cst_87 = arith.constant dense<0.000000e+00> : vector<128x128xf32>
    %131 = tpu.matmul %128, %130, %cst_87 {dimension_numbers = #tpu.dot_dimension_numbers<[1], [0], [0], [1], [0, 0, 1, 1], [], []>} : vector<128x128xbf16>, vector<128x128xbf16>, vector<128x128xf32> -> vector<128x128xf32>
    %132 = arith.addf %126, %131 : vector<128x128xf32>
    %c0_88 = arith.constant 0 : index
    %c0_89 = arith.constant 0 : index
    %133 = vector.load %arg7[%c0_88, %c0_89] : memref<1x128xf32, #tpu.memory_space<vmem>>, vector<1x128xf32>
    %134 = vector.broadcast %133 : vector<1x128xf32> to vector<128x128xf32>
    %135 = arith.addf %132, %134 : vector<128x128xf32>
    %cst_90 = arith.constant 0.000000e+00 : f32
    %136 = vector.broadcast %cst_90 : f32 to vector<128x128xf32>
    %137 = arith.maximumf %135, %136 : vector<128x128xf32>
    %138 = arith.truncf %137 : vector<128x128xf32> to vector<128x128xbf16>
    %c0_91 = arith.constant 0 : index
    %c0_92 = arith.constant 0 : index
    %139 = vector.load %arg8[%c0_91, %c0_92] : memref<128x128xbf16, #tpu.memory_space<vmem>>, vector<128x128xbf16>
    %cst_93 = arith.constant dense<0.000000e+00> : vector<128x128xf32>
    %140 = tpu.matmul %138, %139, %cst_93 {dimension_numbers = #tpu.dot_dimension_numbers<[1], [0], [0], [1], [0, 0, 1, 1], [], []>} : vector<128x128xbf16>, vector<128x128xbf16>, vector<128x128xf32> -> vector<128x128xf32>
    %c0_94 = arith.constant 0 : index
    %c0_95 = arith.constant 0 : index
    %141 = vector.load %arg9[%c0_94, %c0_95] : memref<1x128xf32, #tpu.memory_space<vmem>>, vector<1x128xf32>
    %142 = vector.broadcast %141 : vector<1x128xf32> to vector<128x128xf32>
    %143 = arith.addf %140, %142 : vector<128x128xf32>
    %144 = arith.extf %30 : vector<128x128xbf16> to vector<128x128xf32>
    %145 = arith.addf %143, %144 : vector<128x128xf32>
    %cst_96 = arith.constant 0.000000e+00 : f32
    %146 = vector.broadcast %cst_96 : f32 to vector<128x128xf32>
    %147 = arith.maximumf %145, %146 : vector<128x128xf32>
    %148 = vector.shape_cast %147 : vector<128x128xf32> to vector<8x16x128xf32>
    %c0_97 = arith.constant 0 : index
    %c0_98 = arith.constant 0 : index
    %c0_99 = arith.constant 0 : index
    %c0_100 = arith.constant 0 : index
    %149 = vector.load %arg10[%c0_97, %c0_98, %c0_99, %c0_100] : memref<1x8x16x128xf32, #tpu.memory_space<vmem>>, vector<1x8x16x128xf32>
    %150 = vector.shape_cast %149 : vector<1x8x16x128xf32> to vector<8x16x128xf32>
    %151 = vector.shape_cast %148 : vector<8x16x128xf32> to vector<1x8x16x128xf32>
    tpu.vector_store %arg10[%c0_97, %c0_98, %c0_99, %c0_100], %151 {strides = array<i32>} : memref<1x8x16x128xf32, #tpu.memory_space<vmem>>, vector<1x8x16x128xf32>,
    return
  }
  func.func @transform_0(%arg0: i32, %arg1: i32) -> (i32, i32, i32, i32) {
    %c0_i32 = arith.constant 0 : i32
    %c0_i32_0 = arith.constant 0 : i32
    %c0_i32_1 = arith.constant 0 : i32
    return %arg0, %arg1, %c0_i32, %c0_i32_0 : i32, i32, i32, i32
  }
  func.func @transform_2(%arg0: i32, %arg1: i32) -> (i32, i32) {
    %c0_i32 = arith.constant 0 : i32
    %c0_i32_0 = arith.constant 0 : i32
    %c0_i32_1 = arith.constant 0 : i32
    return %c0_i32, %c0_i32_0 : i32, i32
  }
  func.func @transform_3(%arg0: i32, %arg1: i32) -> (i32, i32) {
    %c0_i32 = arith.constant 0 : i32
    %c0_i32_0 = arith.constant 0 : i32
    %c0_i32_1 = arith.constant 0 : i32
    return %c0_i32, %c0_i32_0 : i32, i32
  }
  func.func @transform_4(%arg0: i32, %arg1: i32) -> (i32, i32, i32) {
    %c0_i32 = arith.constant 0 : i32
    %c0_i32_0 = arith.constant 0 : i32
    %c0_i32_1 = arith.constant 0 : i32
    %c0_i32_2 = arith.constant 0 : i32
    return %c0_i32, %c0_i32_0, %c0_i32_1 : i32, i32, i32
  }
  func.func @transform_5(%arg0: i32, %arg1: i32) -> (i32, i32) {
    %c0_i32 = arith.constant 0 : i32
    %c0_i32_0 = arith.constant 0 : i32
    %c0_i32_1 = arith.constant 0 : i32
    return %c0_i32, %c0_i32_0 : i32, i32
  }
  func.func @transform_6(%arg0: i32, %arg1: i32) -> (i32, i32) {
    %c0_i32 = arith.constant 0 : i32
    %c0_i32_0 = arith.constant 0 : i32
    %c0_i32_1 = arith.constant 0 : i32
    return %c0_i32, %c0_i32_0 : i32, i32
  }
  func.func @transform_7(%arg0: i32, %arg1: i32) -> (i32, i32) {
    %c0_i32 = arith.constant 0 : i32
    %c0_i32_0 = arith.constant 0 : i32
    %c0_i32_1 = arith.constant 0 : i32
    return %c0_i32, %c0_i32_0 : i32, i32
  }
  func.func @transform_8(%arg0: i32, %arg1: i32) -> (i32, i32, i32, i32) {
    %c0_i32 = arith.constant 0 : i32
    %c0_i32_0 = arith.constant 0 : i32
    %c0_i32_1 = arith.constant 0 : i32
    return %arg0, %arg1, %c0_i32, %c0_i32_0 : i32, i32, i32, i32
  }
}

</mosaic_0001>

<llo_original>
// kernel: tpu_custom_call.1
$region0: #{tpu_custom_call.1}
  #allocation0 [shape = 'u32[]', space=smem, size = 0x4, offset = 0x4, fixed_abs, tag = 'smem constant byte address 0x4 - core index']
  #allocation1 [shape = 'u32[144,128]{1,0:T(1,128)}', space=vmem, size = 0x12000, scoped, tag = 'internal scratch']
  #allocation2 [shape = 'bf16[10,16,128]{2,1,0:T(16,128)(2,1)}', space=vmem, size = 0xa000, scoped, tag = 'scratch operand']
  #allocation3 [shape = 'bf16[2,16,128]{2,1,0:T(16,128)(2,1)}', space=vmem, size = 0x2000, scoped, tag = 'scratch operand']
  #allocation4 [shape = 's32[2]{0}', space=sflag, size = 0x8, scoped, tag = 'scratch operand']
  #allocation14 [shape = 's32[]', space=sflag, size = 0x4, offset = 0, fixed_abs, tag = 'sflag constant byte address 0x0 - dummy sync flag']
  #allocation15 [shape = 's32[]', space=sflag, size = 0x4, offset = 0, fixed_abs, tag = 'sflag constant byte address 0x0 - dummy sync flag']
  #allocation16 [shape = 'u32[]', space=smem, size = 0x4, offset = 0x44, fixed_abs, tag = 'smem constant byte address 0x44 - assertion arg 0']
  #allocation17 [shape = 'u32[]', space=smem, size = 0x4, offset = 0x48, fixed_abs, tag = 'smem constant byte address 0x48 - assertion arg 1']
  #allocation18 [shape = 's32[]', space=sflag, size = 0x4, offset = 0, fixed_abs, tag = 'sflag constant byte address 0x0 - dummy sync flag']
  #allocation19 [shape = 's32[]', space=sflag, size = 0x4, offset = 0, fixed_abs, tag = 'sflag constant byte address 0x0 - dummy sync flag']
  %s0 = inlined_call_operand.hbm [shape: bf16[2,16,16,128], index: 0, kind: input, shape index: {}]
  %s1 = inlined_call_operand.hbm [shape: bf16[2,16,16,128], index: 1, kind: input, shape index: {}]
  %s2 = inlined_call_operand.hbm [shape: bf16[128,256], index: 2, kind: input, shape index: {}]
  %s3 = inlined_call_operand.vmem [shape: f32[1,256], index: 3, kind: input, shape index: {}]
  %s4 = inlined_call_operand.hbm [shape: bf16[9,128,128], index: 4, kind: input, shape index: {}]
  %s5 = inlined_call_operand.vmem [shape: f32[1,128], index: 5, kind: input, shape index: {}]
  %s6 = inlined_call_operand.hbm [shape: bf16[128,128], index: 6, kind: input, shape index: {}]
  %s7 = inlined_call_operand.vmem [shape: f32[1,128], index: 7, kind: input, shape index: {}]
  %s8 = inlined_call_operand.hbm [shape: f32[2,16,16,128], index: 8, kind: output, shape index: {}]
  %s9 = sld [smem:[#allocation0]]
  $region93: #{tpu_custom_call.1} parent=0
    _
  %s11 = ssub.s32 1, %s9
  %s12 = scalar_select 0, %s11, %s9
  $region1: #{tpu_custom_call.1} parent=0
    #allocation5 [shape = 'u8[65536]{0}', space=vmem, size = 0x10000, scoped, tag = 'input window, operand 0']
    #allocation6 [shape = 's32[2]{0}', space=sflag, size = 0x8, scoped, tag = 'scoped memory for tpu_custom_call.1']
    #allocation7 [shape = 's32[2]{0}', space=sflag, size = 0x8, scoped, tag = 'scoped memory for tpu_custom_call.1']
    #allocation8 [shape = 'u8[65536]{0}', space=vmem, size = 0x10000, scoped, tag = 'input window, operand 2, single buffered']
    #allocation9 [shape = 's32[1]{0}', space=sflag, size = 0x4, scoped, tag = 'scoped memory for tpu_custom_call.1']
    #allocation10 [shape = 'u8[294912]{0}', space=vmem, size = 0x48000, scoped, tag = 'input window, operand 4, single buffered']
    #allocation11 [shape = 'u8[32768]{0}', space=vmem, size = 0x8000, scoped, tag = 'input window, operand 6, single buffered']
    #allocation12 [shape = 's32[1]{0}', space=sflag, size = 0x4, scoped, tag = 'scoped memory for tpu_custom_call.1']
    #allocation13 [shape = 'u8[131072]{0}', space=vmem, size = 0x20000, scoped, tag = 'output window, operand 0']
    %13 = vsyncpa [#allocation6], 0
    %s14 = scalar_lea.sflag [#allocation6], 1
    %15 = vsyncpa %s14, 0
    %16 = vsyncpa [#allocation9], 0
    %17 = vsyncpa [#allocation12], 0
    %18 = vsyncpa [#allocation7], 0
    %s19 = scalar_lea.sflag [#allocation7], 1
    %20 = vsyncpa %s19, 0
    loop: start=0, step=1, limit=6
    $region2: #{tpu_custom_call.1} parent=1 // loop_pre_header
      _
    $region3: #{tpu_custom_call.1} parent=1 // loop_header
      %s22 = sphi 0, %s26
      %p23 = scmp.ge.s32.totalorder %s22, 6
      %s29 = sphi 0, %s41
      %s30 = sphi 0, %s37
      %s31 = sphi 0, %s29
      %s32 = sphi 0, %s30
      %s33 = sphi 0, %s31
      %s34 = sphi 0, %s32
      %s46 = sphi 0, %s48
      %s49 = sphi 0, %s46
      %s50 = sphi 0, %s49
      %s66 = sphi 0, %s50
      %s70 = sphi 0, %s70
      %s72 = sphi 0, %s70
      %s73 = sphi 0, %s72
      %s87 = sphi 0, %s73
      %s91 = sphi 0, %s91
      %s93 = sphi 0, %s91
      %s94 = sphi 0, %s93
      %s108 = sphi 0, %s94
      %s112 = sphi 0, %s112
      %s114 = sphi 0, %s112
      %s115 = sphi 0, %s114
      %s129 = sphi 0, %s115
      %s133 = sphi 0, %s133
      %s135 = sphi 0, %s133
      %s136 = sphi 0, %s135
      %s150 = sphi 0, %s136
      %s154 = sphi 0, %s154
      %s156 = sphi 0, %s154
      %s157 = sphi 0, %s156
      %s171 = sphi 0, %s157
      %s175 = sphi 0, %s175
      %s177 = sphi 0, %s175
      %s178 = sphi 0, %s177
      %s192 = sphi 0, %s178
      %s200 = sphi 0, %s202
      %s203 = sphi 0, %s200
      %s204 = sphi 0, %s203
      %s220 = sphi 0, %s204
    $region4: #{tpu_custom_call.1} parent=1 // loop_header_branch
      %25 = sbr.rel (%p23) target = $region8
    $region5: #{tpu_custom_call.1} parent=1 // loop_body
      %s27 = ssub.s32 %s22, 1
      %s28 = ssub.s32 %s22, 2
      %s35 = sadd.s32 1, %s30
      %p36 = scmp.ge.s32.totalorder %s35, 2
      %s37 = scalar_select %p36, 0, %s35
      %s38 = sadd.s32 1, %s29
      %s39 = scalar_select %p36, %s38, %s29
      %p40 = scmp.ge.s32.totalorder %s39, 2
      %s41 = scalar_select %p40, 0, %s39
      %s42 = ssub.s32 %s29, %s41
      %s43 = ssub.s32 %s30, %s37
      %s44 = sor.u32 %s42, %s43
      %p45 = scmp.eq.s32.totalorder %s44, 0
      %s47 = sadd.s32 %s46, 1
      %s48 = scalar_select %p45, %s46, %s47
      %p51 = pneg %p45
      %p52 = scmp.eq.s32.totalorder %s22, 3
      %p53 = por %p51, %p52
      %p54 = scmp.ne.s32.totalorder %s46, %s49
      %p55 = scmp.eq.s32.totalorder %s22, 0
      %p56 = por %p54, %p55
      %p57 = scmp.ne.s32.totalorder %s46, %s49
      %p58 = scmp.eq.s32.totalorder %s27, 3
      %p59 = por %p57, %p58
      %p60 = scmp.ne.s32.totalorder %s49, %s50
      %p61 = scmp.eq.s32.totalorder %s27, 0
      %p62 = por %p60, %p61
      %p63 = scmp.ne.s32.totalorder %s49, %s50
      %p64 = scmp.eq.s32.totalorder %s28, 3
      %p65 = por %p63, %p64
      %p67 = scmp.ne.s32.totalorder %s50, %s66
      %p68 = scmp.eq.s32.totalorder %s28, 0
      %p69 = por %p67, %p68
      %s71 = sadd.s32 %s70, 1
      %p74 = scmp.eq.s32.totalorder %s22, 3
      %p75 = scmp.ne.s32.totalorder %s70, %s72
      %p76 = scmp.eq.s32.totalorder %s22, 0
      %p77 = por %p75, %p76
      %p78 = scmp.ne.s32.totalorder %s70, %s72
      %p79 = scmp.eq.s32.totalorder %s27, 3
      %p80 = por %p78, %p79
      %p81 = scmp.ne.s32.totalorder %s72, %s73
      %p82 = scmp.eq.s32.totalorder %s27, 0
      %p83 = por %p81, %p82
      %p84 = scmp.ne.s32.totalorder %s72, %s73
      %p85 = scmp.eq.s32.totalorder %s28, 3
      %p86 = por %p84, %p85
      %p88 = scmp.ne.s32.totalorder %s73, %s87
      %p89 = scmp.eq.s32.totalorder %s28, 0
      %p90 = por %p88, %p89
      %s92 = sadd.s32 %s91, 1
      %p95 = scmp.eq.s32.totalorder %s22, 3
      %p96 = scmp.ne.s32.totalorder %s91, %s93
      %p97 = scmp.eq.s32.totalorder %s22, 0
      %p98 = por %p96, %p97
      %p99 = scmp.ne.s32.totalorder %s91, %s93
      %p100 = scmp.eq.s32.totalorder %s27, 3
      %p101 = por %p99, %p100
      %p102 = scmp.ne.s32.totalorder %s93, %s94
      %p103 = scmp.eq.s32.totalorder %s27, 0
      %p104 = por %p102, %p103
      %p105 = scmp.ne.s32.totalorder %s93, %s94
      %p106 = scmp.eq.s32.totalorder %s28, 3
      %p107 = por %p105, %p106
      %p109 = scmp.ne.s32.totalorder %s94, %s108
      %p110 = scmp.eq.s32.totalorder %s28, 0
      %p111 = por %p109, %p110
      %s113 = sadd.s32 %s112, 1
      %p116 = scmp.eq.s32.totalorder %s22, 3
      %p117 = scmp.ne.s32.totalorder %s112, %s114
      %p118 = scmp.eq.s32.totalorder %s22, 0
      %p119 = por %p117, %p118
      %p120 = scmp.ne.s32.totalorder %s112, %s114
      %p121 = scmp.eq.s32.totalorder %s27, 3
      %p122 = por %p120, %p121
      %p123 = scmp.ne.s32.totalorder %s114, %s115
      %p124 = scmp.eq.s32.totalorder %s27, 0
      %p125 = por %p123, %p124
      %p126 = scmp.ne.s32.totalorder %s114, %s115
      %p127 = scmp.eq.s32.totalorder %s28, 3
      %p128 = por %p126, %p127
      %p130 = scmp.ne.s32.totalorder %s115, %s129
      %p131 = scmp.eq.s32.totalorder %s28, 0
      %p132 = por %p130, %p131
      %s134 = sadd.s32 %s133, 1
      %p137 = scmp.eq.s32.totalorder %s22, 3
      %p138 = scmp.ne.s32.totalorder %s133, %s135
      %p139 = scmp.eq.s32.totalorder %s22, 0
      %p140 = por %p138, %p139
      %p141 = scmp.ne.s32.totalorder %s133, %s135
      %p142 = scmp.eq.s32.totalorder %s27, 3
      %p143 = por %p141, %p142
      %p144 = scmp.ne.s32.totalorder %s135, %s136
      %p145 = scmp.eq.s32.totalorder %s27, 0
      %p146 = por %p144, %p145
      %p147 = scmp.ne.s32.totalorder %s135, %s136
      %p148 = scmp.eq.s32.totalorder %s28, 3
      %p149 = por %p147, %p148
      %p151 = scmp.ne.s32.totalorder %s136, %s150
      %p152 = scmp.eq.s32.totalorder %s28, 0
      %p153 = por %p151, %p152
      %s155 = sadd.s32 %s154, 1
      %p158 = scmp.eq.s32.totalorder %s22, 3
      %p159 = scmp.ne.s32.totalorder %s154, %s156
      %p160 = scmp.eq.s32.totalorder %s22, 0
      %p161 = por %p159, %p160
      %p162 = scmp.ne.s32.totalorder %s154, %s156
      %p163 = scmp.eq.s32.totalorder %s27, 3
      %p164 = por %p162, %p163
      %p165 = scmp.ne.s32.totalorder %s156, %s157
      %p166 = scmp.eq.s32.totalorder %s27, 0
      %p167 = por %p165, %p166
      %p168 = scmp.ne.s32.totalorder %s156, %s157
      %p169 = scmp.eq.s32.totalorder %s28, 3
      %p170 = por %p168, %p169
      %p172 = scmp.ne.s32.totalorder %s157, %s171
      %p173 = scmp.eq.s32.totalorder %s28, 0
      %p174 = por %p172, %p173
      %s176 = sadd.s32 %s175, 1
      %p179 = scmp.eq.s32.totalorder %s22, 3
      %p180 = scmp.ne.s32.totalorder %s175, %s177
      %p181 = scmp.eq.s32.totalorder %s22, 0
      %p182 = por %p180, %p181
      %p183 = scmp.ne.s32.totalorder %s175, %s177
      %p184 = scmp.eq.s32.totalorder %s27, 3
      %p185 = por %p183, %p184
      %p186 = scmp.ne.s32.totalorder %s177, %s178
      %p187 = scmp.eq.s32.totalorder %s27, 0
      %p188 = por %p186, %p187
      %p189 = scmp.ne.s32.totalorder %s177, %s178
      %p190 = scmp.eq.s32.totalorder %s28, 3
      %p191 = por %p189, %p190
      %p193 = scmp.ne.s32.totalorder %s178, %s192
      %p194 = scmp.eq.s32.totalorder %s28, 0
      %p195 = por %p193, %p194
      %s196 = ssub.s32 %s29, %s41
      %s197 = ssub.s32 %s30, %s37
      %s198 = sor.u32 %s196, %s197
      %p199 = scmp.eq.s32.totalorder %s198, 0
      %s201 = sadd.s32 %s200, 1
      %s202 = scalar_select %p199, %s200, %s201
      %p205 = pneg %p199
      %p206 = scmp.eq.s32.totalorder %s22, 3
      %p207 = por %p205, %p206
      %p208 = scmp.ne.s32.totalorder %s200, %s203
      %p209 = scmp.eq.s32.totalorder %s22, 0
      %p210 = por %p208, %p209
      %p211 = scmp.ne.s32.totalorder %s200, %s203
      %p212 = scmp.eq.s32.totalorder %s27, 3
      %p213 = por %p211, %p212
      %p214 = scmp.ne.s32.totalorder %s203, %s204
      %p215 = scmp.eq.s32.totalorder %s27, 0
      %p216 = por %p214, %p215
      %p217 = scmp.ne.s32.totalorder %s203, %s204
      %p218 = scmp.eq.s32.totalorder %s28, 3
      %p219 = por %p217, %p218
      %p221 = scmp.ne.s32.totalorder %s204, %s220
      %p222 = scmp.eq.s32.totalorder %s28, 0
      %p223 = por %p221, %p222
      %p224 = scmp.le.s32.totalorder 1, %s22
      %p225 = scmp.lt.s32.totalorder %s22, 5
      %p226 = pnand %p224, %p225
      %p227 = pneg %p226
      // Predicated region
      $region9: #{tpu_custom_call.1} parent=5 // pred_check
        _
      $region10: #{tpu_custom_call.1} parent=5 // pred_check_branch
        %229 = sbr.rel (%p226) target = $region12
      $region11: #{tpu_custom_call.1} parent=5 // pred_region
        %s230 = ssub.s32 %s22, 1
        // Predicated region
        $region13: #{tpu_custom_call.1} parent=11 // pred_check
          %p231 = pneg %p83
        $region14: #{tpu_custom_call.1} parent=11 // pred_check_branch
          %233 = sbr.rel (%p231) target = $region16
        $region15: #{tpu_custom_call.1} parent=11 // pred_region
          %s235 = ssub.s32 2048, 2048
          %236 = vsyncadd [#allocation9], %s235
          %s237 = sshll.u32 [#allocation8], 4
          %s238 = int_to_ptr.vmem [resolvable:$true] %s237
          %243 = dma.hbm_to_vmem [thread:$0]  %s2, 2048, %s238, [#allocation9], 128, 128, 8
        $region16: #{tpu_custom_call.1} parent=11 // pred_fallthru
          _
        // Predicated region
        $region17: #{tpu_custom_call.1} parent=11 // pred_check
          %p244 = pneg %p104
        $region18: #{tpu_custom_call.1} parent=11 // pred_check_branch
          %246 = sbr.rel (%p244) target = $region20
        $region19: #{tpu_custom_call.1} parent=11 // pred_region
          _
        $region20: #{tpu_custom_call.1} parent=11 // pred_fallthru
          _
        // Predicated region
        $region21: #{tpu_custom_call.1} parent=11 // pred_check
          %p247 = pneg %p125
        $region22: #{tpu_custom_call.1} parent=11 // pred_check_branch
          %249 = sbr.rel (%p247) target = $region24
        $region23: #{tpu_custom_call.1} parent=11 // pred_region
          %s251 = ssub.s32 9216, 9216
          %252 = vsyncadd [#allocation9], %s251
          %s253 = sshll.u32 [#allocation10], 4
          %s254 = int_to_ptr.vmem [resolvable:$true] %s253
          %259 = dma.hbm_to_vmem [thread:$0]  %s4, 9216, %s254, [#allocation9], 64, 64, 4
        $region24: #{tpu_custom_call.1} parent=11 // pred_fallthru
          _
        // Predicated region
        $region25: #{tpu_custom_call.1} parent=11 // pred_check
          %p260 = pneg %p146
        $region26: #{tpu_custom_call.1} parent=11 // pred_check_branch
          %262 = sbr.rel (%p260) target = $region28
        $region27: #{tpu_custom_call.1} parent=11 // pred_region
          _
        $region28: #{tpu_custom_call.1} parent=11 // pred_fallthru
          _
        // Predicated region
        $region29: #{tpu_custom_call.1} parent=11 // pred_check
          %p263 = pneg %p167
        $region30: #{tpu_custom_call.1} parent=11 // pred_check_branch
          %265 = sbr.rel (%p263) target = $region32
        $region31: #{tpu_custom_call.1} parent=11 // pred_region
          %s267 = ssub.s32 1024, 1024
          %268 = vsyncadd [#allocation12], %s267
          %s269 = sshll.u32 [#allocation11], 4
          %s270 = int_to_ptr.vmem [resolvable:$true] %s269
          %275 = dma.hbm_to_vmem [thread:$0]  %s6, 1024, %s270, [#allocation12], 64, 64, 4
        $region32: #{tpu_custom_call.1} parent=11 // pred_fallthru
          _
        // Predicated region
        $region33: #{tpu_custom_call.1} parent=11 // pred_check
          %p276 = pneg %p188
        $region34: #{tpu_custom_call.1} parent=11 // pred_check_branch
          %278 = sbr.rel (%p276) target = $region36
        $region35: #{tpu_custom_call.1} parent=11 // pred_region
          _
        $region36: #{tpu_custom_call.1} parent=11 // pred_fallthru
          _
      $region12: #{tpu_custom_call.1} parent=5 // pred_fallthru
        _
      %p279 = scmp.lt.s32.totalorder %s22, 4
      // Predicated region
      $region37: #{tpu_custom_call.1} parent=5 // pred_check
        %p280 = pneg %p279
      $region38: #{tpu_custom_call.1} parent=5 // pred_check_branch
        %282 = sbr.rel (%p280) target = $region40
      $region39: #{tpu_custom_call.1} parent=5 // pred_region
        // Predicated region
        $region41: #{tpu_custom_call.1} parent=39 // pred_check
          %p283 = pneg %p56
        $region42: #{tpu_custom_call.1} parent=39 // pred_check_branch
          %285 = sbr.rel (%p283) target = $region44
        $region43: #{tpu_custom_call.1} parent=39 // pred_region
          %s286 = sand.u32 %s46, 1
          %s287 = scalar_lea.sflag [#allocation6], %s286
          %s288 = sand.u32 %s46, 1
          %s289 = smul.addr %s288, 64
          %s290 = scalar_lea.vmem [#allocation5], %s289
          %s291 = smul.u32 8, %s30
          %s293 = ssub.s32 1024, 1024
          %294 = vsyncadd %s287, %s293
          %s295 = smul.addr %s291, 2
          %s296 = smul.addr %s29, 32
          %s297 = sadd.s32 %s295, %s296
          %s298 = smul.addr %s297, 64
          %s299 = scalar_lea.hbm %s0, %s298
          %s300 = sshll.u32 %s290, 4
          %s301 = int_to_ptr.vmem [resolvable:$true] %s300
          %306 = dma.hbm_to_vmem [thread:$0]  %s299, 1024, %s301, %s287, 64, 64, 4
        $region44: #{tpu_custom_call.1} parent=39 // pred_fallthru
          _
      $region40: #{tpu_custom_call.1} parent=5 // pred_fallthru
        _
      %p307 = scmp.le.s32.totalorder 1, %s22
      %p308 = scmp.lt.s32.totalorder %s22, 5
      %p309 = pnand %p307, %p308
      %p310 = pneg %p309
      // Predicated region
      $region45: #{tpu_custom_call.1} parent=5 // pred_check
        _
      $region46: #{tpu_custom_call.1} parent=5 // pred_check_branch
        %312 = sbr.rel (%p309) target = $region48
      $region47: #{tpu_custom_call.1} parent=5 // pred_region
        %s313 = ssub.s32 %s22, 1
        %s314 = sand.u32 %s49, 1
        %s315 = scalar_lea.sflag [#allocation6], %s314
        %s316 = sand.u32 %s49, 1
        %s317 = smul.addr %s316, 64
        %s318 = scalar_lea.vmem [#allocation5], %s317
        // Predicated region
        $region49: #{tpu_custom_call.1} parent=47 // pred_check
          %p319 = pneg %p62
        $region50: #{tpu_custom_call.1} parent=47 // pred_check_branch
          %321 = sbr.rel (%p319) target = $region52
        $region51: #{tpu_custom_call.1} parent=47 // pred_region
          %322 = dma.done %s315, 1024
        $region52: #{tpu_custom_call.1} parent=47 // pred_fallthru
          _
        // Predicated region
        $region53: #{tpu_custom_call.1} parent=47 // pred_check
          %p323 = pneg %p83
        $region54: #{tpu_custom_call.1} parent=47 // pred_check_branch
          %325 = sbr.rel (%p323) target = $region56
        $region55: #{tpu_custom_call.1} parent=47 // pred_region
          %326 = dma.done [#allocation9], 2048
        $region56: #{tpu_custom_call.1} parent=47 // pred_fallthru
          _
        // Predicated region
        $region57: #{tpu_custom_call.1} parent=47 // pred_check
          %p327 = pneg %p125
        $region58: #{tpu_custom_call.1} parent=47 // pred_check_branch
          %329 = sbr.rel (%p327) target = $region60
        $region59: #{tpu_custom_call.1} parent=47 // pred_region
          %330 = dma.done [#allocation9], 9216
        $region60: #{tpu_custom_call.1} parent=47 // pred_fallthru
          _
        // Predicated region
        $region61: #{tpu_custom_call.1} parent=47 // pred_check
          %p331 = pneg %p167
        $region62: #{tpu_custom_call.1} parent=47 // pred_check_branch
          %333 = sbr.rel (%p331) target = $region64
        $region63: #{tpu_custom_call.1} parent=47 // pred_region
          %334 = dma.done [#allocation12], 1024
        $region64: #{tpu_custom_call.1} parent=47 // pred_fallthru
          _
        %s335 = sand.u32 %s49, 1
        %s336 = scalar_lea.sflag [#allocation6], %s335
        %s337 = sand.u32 %s49, 1
        %s338 = smul.addr %s337, 64
        %s339 = scalar_lea.vmem [#allocation5], %s338
        %p340 = pneg %p62
        %p341 = pneg %p59
        %p342 = pneg %p83
        %p343 = pneg %p80
        %p344 = pneg %p104
        %p345 = pneg %p101
        %p346 = pneg %p125
        %p347 = pneg %p122
        %p348 = pneg %p146
        %p349 = pneg %p143
        %p350 = pneg %p167
        %p351 = pneg %p164
        %p352 = pneg %p188
        %p353 = pneg %p185
        %p354 = pneg %p216
        %p355 = pneg %p213
        %s356 = sand.u32 %s203, 1
        %s357 = scalar_lea.sflag [#allocation7], %s356
        %s358 = sand.u32 %s203, 1
        %s359 = smul.addr %s358, 128
        %s360 = scalar_lea.vmem [#allocation13], %s359
        %s361 = smul.u32 8, %s32
        %s362 = smul.u32 8, %s32
        %s364 = smul.u32 %s32, 8
        %s365 = ssub.s32 %s364, 1
        %p366 = scmp.gt.s32.totalorder %s365, 0
        %s367 = scalar_select %p366, %s365, 0
        %s368 = sadd.s32 %s364, 8
        %p369 = scmp.lt.s32.totalorder %s368, 15
        %s370 = scalar_select %p369, %s368, 15
        %s371 = smul.u32 %s367, 2
        %s372 = smul.u32 %s31, 32
        %s373 = sadd.s32 %s371, %s372
        %s374 = smul.addr %s373, 64
        %s375 = scalar_lea.hbm %s1, %s374
        // Predicated region
        $region65: #{tpu_custom_call.1} parent=47 // pred_check
          _
        $region66: #{tpu_custom_call.1} parent=47 // pred_check_branch
          %377 = sbr.rel target = $region68
        $region67: #{tpu_custom_call.1} parent=47 // pred_region
          %378 = sst [smem:[#allocation16]] [#allocation15]
          %379 = sst [smem:[#allocation17]] [#allocation14]
        $region68: #{tpu_custom_call.1} parent=47 // pred_fallthru
          _
        %381 = shalt.err (0)
        %s383 = sshll.u32 [#allocation3], 4
        %s384 = int_to_ptr.vmem [resolvable:$true] %s383
        %386 = dma.hbm_to_vmem [thread:$0]  %s375, 128, %s384, [#allocation4]
        %s387 = smul.u32 %s370, 2
        %s388 = sadd.s32 %s387, %s372
        %s389 = smul.addr %s388, 64
        %s390 = scalar_lea.hbm %s1, %s389
        %s391 = scalar_lea.vmem [#allocation3], 8
        %s392 = scalar_lea.sflag [#allocation4], 1
        // Predicated region
        $region69: #{tpu_custom_call.1} parent=47 // pred_check
          _
        $region70: #{tpu_custom_call.1} parent=47 // pred_check_branch
          %394 = sbr.rel target = $region72
        $region71: #{tpu_custom_call.1} parent=47 // pred_region
          %395 = sst [smem:[#allocation16]] [#allocation19]
          %396 = sst [smem:[#allocation17]] [#allocation18]
        $region72: #{tpu_custom_call.1} parent=47 // pred_fallthru
          _
        %398 = shalt.err (0)
        %s400 = sshll.u32 %s391, 4
        %s401 = int_to_ptr.vmem [resolvable:$true] %s400
        %403 = dma.hbm_to_vmem [thread:$0]  %s390, 128, %s401, %s392
        %v404 = vld [vmem:[%s318] sm:$0xf]
        %v405 = vld [vmem:[%s318 + $0x4] sm:$0xf]
        %v406 = vld [vmem:[%s318 + $0x8] sm:$0xf]
        %v407 = vld [vmem:[%s318 + $0xc] sm:$0xf]
        %v408 = vld [vmem:[%s318 + $0x10] sm:$0xf]
        %v409 = vld [vmem:[%s318 + $0x14] sm:$0xf]
        %v410 = vld [vmem:[%s318 + $0x18] sm:$0xf]
        %v411 = vld [vmem:[%s318 + $0x1c] sm:$0xf]
        %v412 = vld [vmem:[%s318 + $0x20] sm:$0xf]
        %v413 = vld [vmem:[%s318 + $0x24] sm:$0xf]
        %v414 = vld [vmem:[%s318 + $0x28] sm:$0xf]
        %v415 = vld [vmem:[%s318 + $0x2c] sm:$0xf]
        %v416 = vld [vmem:[%s318 + $0x30] sm:$0xf]
        %v417 = vld [vmem:[%s318 + $0x34] sm:$0xf]
        %v418 = vld [vmem:[%s318 + $0x38] sm:$0xf]
        %v419 = vld [vmem:[%s318 + $0x3c] sm:$0xf]
        %v420 = vld [vmem:[#allocation8] sm:$0xff]
        %v421 = vld [vmem:[#allocation8 + $0x8] sm:$0xff]
        %v422 = vld [vmem:[#allocation8 + $0x10] sm:$0xff]
        %v423 = vld [vmem:[#allocation8 + $0x18] sm:$0xff]
        %v424 = vld [vmem:[#allocation8 + $0x20] sm:$0xff]
        %v425 = vld [vmem:[#allocation8 + $0x28] sm:$0xff]
        %v426 = vld [vmem:[#allocation8 + $0x30] sm:$0xff]
        %v427 = vld [vmem:[#allocation8 + $0x38] sm:$0xff]
        %v428 = vld [vmem:[#allocation8 + $0x40] sm:$0xff]
        %v429 = vld [vmem:[#allocation8 + $0x48] sm:$0xff]
        %v430 = vld [vmem:[#allocation8 + $0x50] sm:$0xff]
        %v431 = vld [vmem:[#allocation8 + $0x58] sm:$0xff]
        %v432 = vld [vmem:[#allocation8 + $0x60] sm:$0xff]
        %v433 = vld [vmem:[#allocation8 + $0x68] sm:$0xff]
        %v434 = vld [vmem:[#allocation8 + $0x70] sm:$0xff]
        %v435 = vld [vmem:[#allocation8 + $0x78] sm:$0xff]
        %v436 = vld [vmem:[%s3] sm:$0x3]
        %v438 = vlaneseq
        %v439 = vshrl.u32 %v438, 7
        %v440 = vsub.s32 0, %v439
        %v441 = vrot.slane %v436, %v440
        %v442 = vlaneseq
        %v443 = vshrl.u32 %v442, 7
        %v444 = vsub.s32 1, %v443
        %v445 = vrot.slane %v436, %v444
        %v464 = vunpack.c.l.b16 %v404
        %v465 = vunpack.c.l.b16 %v405
        %v466 = vunpack.c.l.b16 %v406
        %v467 = vunpack.c.l.b16 %v407
        %v468 = vunpack.c.l.b16 %v408
        %v469 = vunpack.c.l.b16 %v409
        %v470 = vunpack.c.l.b16 %v410
        %v471 = vunpack.c.l.b16 %v411
        %v472 = vunpack.c.l.b16 %v412
        %v473 = vunpack.c.l.b16 %v413
        %v474 = vunpack.c.l.b16 %v414
        %v475 = vunpack.c.l.b16 %v415
        %v476 = vunpack.c.l.b16 %v416
        %v477 = vunpack.c.l.b16 %v417
        %v478 = vunpack.c.l.b16 %v418
        %v479 = vunpack.c.l.b16 %v419
        %v480 = vpack.c.b16 %v465, %v464
        %v481 = vpack.c.b16 %v467, %v466
        %v482 = vpack.c.b16 %v469, %v468
        %v483 = vpack.c.b16 %v471, %v470
        %v484 = vpack.c.b16 %v473, %v472
        %v485 = vpack.c.b16 %v475, %v474
        %v486 = vpack.c.b16 %v477, %v476
        %v487 = vpack.c.b16 %v479, %v478
        %v512 = vunpack.c.l.b16 %v420
        %v513 = vunpack.c.h.b16 %v420
        %v514 = vunpack.c.l.b16 %v421
        %v515 = vunpack.c.h.b16 %v421
        %v516 = vunpack.c.l.b16 %v422
        %v517 = vunpack.c.h.b16 %v422
        %v518 = vunpack.c.l.b16 %v423
        %v519 = vunpack.c.h.b16 %v423
        %v520 = vunpack.c.l.b16 %v424
        %v521 = vunpack.c.h.b16 %v424
        %v522 = vunpack.c.l.b16 %v425
        %v523 = vunpack.c.h.b16 %v425
        %v524 = vunpack.c.l.b16 %v426
        %v525 = vunpack.c.h.b16 %v426
        %v526 = vunpack.c.l.b16 %v427
        %v527 = vunpack.c.h.b16 %v427
        %v528 = vunpack.c.l.b16 %v428
        %v529 = vunpack.c.h.b16 %v428
        %v530 = vunpack.c.l.b16 %v429
        %v531 = vunpack.c.h.b16 %v429
        %v532 = vunpack.c.l.b16 %v430
        %v533 = vunpack.c.h.b16 %v430
        %v534 = vunpack.c.l.b16 %v431
        %v535 = vunpack.c.h.b16 %v431
        %v536 = vunpack.c.l.b16 %v432
        %v537 = vunpack.c.h.b16 %v432
        %v538 = vunpack.c.l.b16 %v433
        %v539 = vunpack.c.h.b16 %v433
        %v540 = vunpack.c.l.b16 %v434
        %v541 = vunpack.c.h.b16 %v434
        %v542 = vunpack.c.l.b16 %v435
        %v543 = vunpack.c.h.b16 %v435
        %v544 = vpack.c.b16 %v514, %v512
        %v545 = vpack.c.b16 %v515, %v513
        %v546 = vpack.c.b16 %v518, %v516
        %v547 = vpack.c.b16 %v519, %v517
        %v548 = vpack.c.b16 %v522, %v520
        %v549 = vpack.c.b16 %v523, %v521
        %v550 = vpack.c.b16 %v526, %v524
        %v551 = vpack.c.b16 %v527, %v525
        %v552 = vpack.c.b16 %v530, %v528
        %v553 = vpack.c.b16 %v531, %v529
        %v554 = vpack.c.b16 %v534, %v532
        %v555 = vpack.c.b16 %v535, %v533
        %v556 = vpack.c.b16 %v538, %v536
        %v557 = vpack.c.b16 %v539, %v537
        %v558 = vpack.c.b16 %v542, %v540
        %v559 = vpack.c.b16 %v543, %v541
        %576 = vmatprep.subr.bf16.mxu0 %v545
        %577 = vmatpush1.bf16.msra.mxu0 %v544
        %578 = vmatprep.subr.bf16.mxu0 %v547
        %579 = vmatpush1.bf16.msra.mxu0 %v546
        %580 = vmatprep.subr.bf16.mxu0 %v549
        %581 = vmatpush1.bf16.msra.mxu0 %v548
        %582 = vmatprep.subr.bf16.mxu0 %v551
        %583 = vmatpush1.bf16.msra.mxu0 %v550
        %584 = vmatprep.subr.bf16.mxu0 %v553
        %585 = vmatpush1.bf16.msra.mxu0 %v552
        %586 = vmatprep.subr.bf16.mxu0 %v555
        %587 = vmatpush1.bf16.msra.mxu0 %v554
        %588 = vmatprep.subr.bf16.mxu0 %v557
        %589 = vmatpush1.bf16.msra.mxu0 %v556
        %590 = vmatprep.subr.bf16.mxu0 %v559
        %591 = vmatpush1.bf16.msra.mxu0 %v558
        %592 = vmatprep.subr.bf16.mxu0 0
        %593 = vmatpush1.bf16.msra.mxu0 0
        %594 = vmatprep.subr.bf16.mxu0 0
        %595 = vmatpush1.bf16.msra.mxu0 0
        %596 = vmatprep.subr.bf16.mxu0 0
        %597 = vmatpush1.bf16.msra.mxu0 0
        %598 = vmatprep.subr.bf16.mxu0 0
        %599 = vmatpush1.bf16.msra.mxu0 0
        %600 = vmatprep.subr.bf16.mxu0 0
        %601 = vmatpush1.bf16.msra.mxu0 0
        %602 = vmatprep.subr.bf16.mxu0 0
        %603 = vmatpush1.bf16.msra.mxu0 0
        %604 = vmatprep.subr.bf16.mxu0 0
        %605 = vmatpush1.bf16.msra.mxu0 0
        %606 = vmatprep.subr.bf16.mxu0 0
        %607 = vmatpush1.bf16.msra.mxu0 0
        %608 = vmatprep.mubr.bf16.mxu0 0
        %609 = vmatmul.mubr.bf16.gmra.mrb[0].mxu0 %v480
        %v610 = vpop.f32.mrb[0].mxu0
        %v611 = vadd.f32 %v441, %v610
        %v612 = vpop.f32.mrb[0].mxu0
        %v613 = vadd.f32 %v445, %v612
        %v614 = vpop.f32.mrb[0].mxu0
        %v615 = vadd.f32 %v441, %v614
        %v616 = vpop.f32.mrb[0].mxu0
        %v617 = vadd.f32 %v445, %v616
        %618 = vmatprep.mubr.bf16.mxu0 0
        %619 = vmatmul.mubr.bf16.gmra.mrb[0].mxu0 %v481
        %v620 = vpop.f32.mrb[0].mxu0
        %v621 = vadd.f32 %v441, %v620
        %v622 = vpop.f32.mrb[0].mxu0
        %v623 = vadd.f32 %v445, %v622
        %v624 = vpop.f32.mrb[0].mxu0
        %v625 = vadd.f32 %v441, %v624
        %v626 = vpop.f32.mrb[0].mxu0
        %v627 = vadd.f32 %v445, %v626
        %628 = vmatprep.mubr.bf16.mxu0 0
        %629 = vmatmul.mubr.bf16.gmra.mrb[0].mxu0 %v482
        %v630 = vpop.f32.mrb[0].mxu0
        %v631 = vadd.f32 %v441, %v630
        %v632 = vpop.f32.mrb[0].mxu0
        %v633 = vadd.f32 %v445, %v632
        %v634 = vpop.f32.mrb[0].mxu0
        %v635 = vadd.f32 %v441, %v634
        %v636 = vpop.f32.mrb[0].mxu0
        %v637 = vadd.f32 %v445, %v636
        %638 = vmatprep.mubr.bf16.mxu0 0
        %639 = vmatmul.mubr.bf16.gmra.mrb[0].mxu0 %v483
        %v640 = vpop.f32.mrb[0].mxu0
        %v641 = vadd.f32 %v441, %v640
        %v642 = vpop.f32.mrb[0].mxu0
        %v643 = vadd.f32 %v445, %v642
        %v644 = vpop.f32.mrb[0].mxu0
        %v645 = vadd.f32 %v441, %v644
        %v646 = vpop.f32.mrb[0].mxu0
        %v647 = vadd.f32 %v445, %v646
        %648 = vmatprep.mubr.bf16.mxu0 0
        %649 = vmatmul.mubr.bf16.gmra.mrb[0].mxu0 %v484
        %v650 = vpop.f32.mrb[0].mxu0
        %v651 = vadd.f32 %v441, %v650
        %v652 = vpop.f32.mrb[0].mxu0
        %v653 = vadd.f32 %v445, %v652
        %v654 = vpop.f32.mrb[0].mxu0
        %v655 = vadd.f32 %v441, %v654
        %v656 = vpop.f32.mrb[0].mxu0
        %v657 = vadd.f32 %v445, %v656
        %658 = vmatprep.mubr.bf16.mxu0 0
        %659 = vmatmul.mubr.bf16.gmra.mrb[0].mxu0 %v485
        %v660 = vpop.f32.mrb[0].mxu0
        %v661 = vadd.f32 %v441, %v660
        %v662 = vpop.f32.mrb[0].mxu0
        %v663 = vadd.f32 %v445, %v662
        %v664 = vpop.f32.mrb[0].mxu0
        %v665 = vadd.f32 %v441, %v664
        %v666 = vpop.f32.mrb[0].mxu0
        %v667 = vadd.f32 %v445, %v666
        %668 = vmatprep.mubr.bf16.mxu0 0
        %669 = vmatmul.mubr.bf16.gmra.mrb[0].mxu0 %v486
        %v670 = vpop.f32.mrb[0].mxu0
        %v671 = vadd.f32 %v441, %v670
        %v672 = vpop.f32.mrb[0].mxu0
        %v673 = vadd.f32 %v445, %v672
        %v674 = vpop.f32.mrb[0].mxu0
        %v675 = vadd.f32 %v441, %v674
        %v676 = vpop.f32.mrb[0].mxu0
        %v677 = vadd.f32 %v445, %v676
        %678 = vmatprep.mubr.bf16.mxu0 0
        %679 = vmatmul.mubr.bf16.gmra.mrb[0].mxu0 %v487
        %v680 = vpop.f32.mrb[0].mxu0
        %v681 = vadd.f32 %v441, %v680
        %v682 = vpop.f32.mrb[0].mxu0
        %v683 = vadd.f32 %v445, %v682
        %v684 = vpop.f32.mrb[0].mxu0
        %v685 = vadd.f32 %v441, %v684
        %v686 = vpop.f32.mrb[0].mxu0
        %v687 = vadd.f32 %v445, %v686
        %688 = vdwg.mxu0
        %v689 = vmax.f32 %v611, 0.0
        %v690 = vmax.f32 %v615, 0.0
        %v691 = vmax.f32 %v621, 0.0
        %v692 = vmax.f32 %v625, 0.0
        %v693 = vmax.f32 %v631, 0.0
        %v694 = vmax.f32 %v635, 0.0
        %v695 = vmax.f32 %v641, 0.0
        %v696 = vmax.f32 %v645, 0.0
        %v697 = vmax.f32 %v651, 0.0
        %v698 = vmax.f32 %v655, 0.0
        %v699 = vmax.f32 %v661, 0.0
        %v700 = vmax.f32 %v665, 0.0
        %v701 = vmax.f32 %v671, 0.0
        %v702 = vmax.f32 %v675, 0.0
        %v703 = vmax.f32 %v681, 0.0
        %v704 = vmax.f32 %v685, 0.0
        %v705 = vpack.c.bf16 %v617, %v613
        %v706 = vpack.c.bf16 %v627, %v623
        %v707 = vpack.c.bf16 %v637, %v633
        %v708 = vpack.c.bf16 %v647, %v643
        %v709 = vpack.c.bf16 %v657, %v653
        %v710 = vpack.c.bf16 %v667, %v663
        %v711 = vpack.c.bf16 %v677, %v673
        %v712 = vpack.c.bf16 %v687, %v683
        %v713 = vpack.c.bf16 %v690, %v689
        %v714 = vpack.c.bf16 %v692, %v691
        %v715 = vpack.c.bf16 %v694, %v693
        %v716 = vpack.c.bf16 %v696, %v695
        %v717 = vpack.c.bf16 %v698, %v697
        %v718 = vpack.c.bf16 %v700, %v699
        %v719 = vpack.c.bf16 %v702, %v701
        %v720 = vpack.c.bf16 %v704, %v703
        %s721 = scalar_lea.vmem [#allocation2], 8
        %722 = vst [vmem:[%s721] sm:$0xff] %v713
        %723 = vst [vmem:[%s721 + $0x8] sm:$0xff] %v714
        %724 = vst [vmem:[%s721 + $0x10] sm:$0xff] %v715
        %725 = vst [vmem:[%s721 + $0x18] sm:$0xff] %v716
        %726 = vst [vmem:[%s721 + $0x20] sm:$0xff] %v717
        %727 = vst [vmem:[%s721 + $0x28] sm:$0xff] %v718
        %728 = vst [vmem:[%s721 + $0x30] sm:$0xff] %v719
        %729 = vst [vmem:[%s721 + $0x38] sm:$0xff] %v720
        %s730 = smul.u32 4, 2
        %s731 = smul.u32 %s730, 1
        %s732 = sshll.u32 %s731, 4
        %733 = dma.done [#allocation4], %s732
        %s734 = sshll.u32 %s731, 4
        %735 = dma.done %s392, %s734
        %v736 = vld [vmem:[#allocation3] sm:$0xff]
        %v737 = vld [vmem:[#allocation3 + $0x8] sm:$0xff]
        %v738 = vld [vmem:[#allocation8] sm:$0xf]
        %v739 = vld [vmem:[#allocation8 + $0x8] sm:$0xf]
        %v740 = vld [vmem:[#allocation8 + $0x10] sm:$0xf]
        %v741 = vld [vmem:[#allocation8 + $0x18] sm:$0xf]
        %v742 = vld [vmem:[#allocation8 + $0x20] sm:$0xf]
        %v743 = vld [vmem:[#allocation8 + $0x28] sm:$0xf]
        %v744 = vld [vmem:[#allocation8 + $0x30] sm:$0xf]
        %v745 = vld [vmem:[#allocation8 + $0x38] sm:$0xf]
        %v746 = vld [vmem:[#allocation8 + $0x40] sm:$0xf]
        %v747 = vld [vmem:[#allocation8 + $0x48] sm:$0xf]
        %v748 = vld [vmem:[#allocation8 + $0x50] sm:$0xf]
        %v749 = vld [vmem:[#allocation8 + $0x58] sm:$0xf]
        %v750 = vld [vmem:[#allocation8 + $0x60] sm:$0xf]
        %v751 = vld [vmem:[#allocation8 + $0x68] sm:$0xf]
        %v752 = vld [vmem:[#allocation8 + $0x70] sm:$0xf]
        %v753 = vld [vmem:[#allocation8 + $0x78] sm:$0xf]
        %v754 = vld [vmem:[%s3] sm:$0x1]
        %v756 = vlaneseq
        %v757 = vshrl.u32 %v756, 7
        %v758 = vsub.s32 0, %v757
        %v759 = vrot.slane %v754, %v758
        %v777 = vunpack.c.l.b16 %v738
        %v778 = vunpack.c.l.b16 %v739
        %v779 = vunpack.c.l.b16 %v740
        %v780 = vunpack.c.l.b16 %v741
        %v781 = vunpack.c.l.b16 %v742
        %v782 = vunpack.c.l.b16 %v743
        %v783 = vunpack.c.l.b16 %v744
        %v784 = vunpack.c.l.b16 %v745
        %v785 = vunpack.c.l.b16 %v746
        %v786 = vunpack.c.l.b16 %v747
        %v787 = vunpack.c.l.b16 %v748
        %v788 = vunpack.c.l.b16 %v749
        %v789 = vunpack.c.l.b16 %v750
        %v790 = vunpack.c.l.b16 %v751
        %v791 = vunpack.c.l.b16 %v752
        %v792 = vunpack.c.l.b16 %v753
        %v793 = vpack.c.b16 %v778, %v777
        %v794 = vpack.c.b16 %v780, %v779
        %v795 = vpack.c.b16 %v782, %v781
        %v796 = vpack.c.b16 %v784, %v783
        %v797 = vpack.c.b16 %v786, %v785
        %v798 = vpack.c.b16 %v788, %v787
        %v799 = vpack.c.b16 %v790, %v789
        %v800 = vpack.c.b16 %v792, %v791
        %809 = vmatprep.subr.bf16.mxu0 0
        %810 = vmatpush1.bf16.msra.mxu0 %v793
        %811 = vmatprep.subr.bf16.mxu0 0
        %812 = vmatpush1.bf16.msra.mxu0 %v794
        %813 = vmatprep.subr.bf16.mxu0 0
        %814 = vmatpush1.bf16.msra.mxu0 %v795
        %815 = vmatprep.subr.bf16.mxu0 0
        %816 = vmatpush1.bf16.msra.mxu0 %v796
        %817 = vmatprep.subr.bf16.mxu0 0
        %818 = vmatpush1.bf16.msra.mxu0 %v797
        %819 = vmatprep.subr.bf16.mxu0 0
        %820 = vmatpush1.bf16.msra.mxu0 %v798
        %821 = vmatprep.subr.bf16.mxu0 0
        %822 = vmatpush1.bf16.msra.mxu0 %v799
        %823 = vmatprep.subr.bf16.mxu0 0
        %824 = vmatpush1.bf16.msra.mxu0 %v800
        %825 = vmatprep.subr.bf16.mxu0 0
        %826 = vmatpush1.bf16.msra.mxu0 0
        %827 = vmatprep.subr.bf16.mxu0 0
        %828 = vmatpush1.bf16.msra.mxu0 0
        %829 = vmatprep.subr.bf16.mxu0 0
        %830 = vmatpush1.bf16.msra.mxu0 0
        %831 = vmatprep.subr.bf16.mxu0 0
        %832 = vmatpush1.bf16.msra.mxu0 0
        %833 = vmatprep.subr.bf16.mxu0 0
        %834 = vmatpush1.bf16.msra.mxu0 0
        %835 = vmatprep.subr.bf16.mxu0 0
        %836 = vmatpush1.bf16.msra.mxu0 0
        %837 = vmatprep.subr.bf16.mxu0 0
        %838 = vmatpush1.bf16.msra.mxu0 0
        %839 = vmatprep.subr.bf16.mxu0 0
        %840 = vmatpush1.bf16.msra.mxu0 0
        %841 = vmatprep.mubr.bf16.mxu0 0
        %842 = vmatmul.mubr.bf16.gmra.mrb[0].mxu0 %v736
        %v843 = vpop.f32.mrb[0].mxu0
        %v844 = vadd.f32 %v759, %v843
        %v845 = vpop.f32.mrb[0].mxu0
        %v846 = vpop.f32.mrb[0].mxu0
        %v847 = vadd.f32 %v759, %v846
        %v848 = vpop.f32.mrb[0].mxu0
        %849 = vmatprep.mubr.bf16.mxu0 0
        %850 = vmatmul.mubr.bf16.gmra.mrb[0].mxu0 %v737
        %v851 = vpop.f32.mrb[0].mxu0
        %v852 = vadd.f32 %v759, %v851
        %v853 = vpop.f32.mrb[0].mxu0
        %v854 = vpop.f32.mrb[0].mxu0
        %v855 = vadd.f32 %v759, %v854
        %v856 = vpop.f32.mrb[0].mxu0
        %857 = vdwg.mxu0
        %v858 = vmax.f32 %v844, 0.0
        %v859 = vmax.f32 %v847, 0.0
        %v860 = vmax.f32 %v852, 0.0
        %v861 = vmax.f32 %v855, 0.0
        %v862 = vpack.c.bf16 %v859, %v858
        %v863 = vpack.c.bf16 %v861, %v860
        %864 = vst [vmem:[#allocation2] sm:$0xff] %v862
        %s865 = scalar_lea.vmem [#allocation2], 72
        %866 = vst [vmem:[%s865] sm:$0xff] %v863
        %p867 = scmp.eq.s32.totalorder %s32, 0
        // Predicated region
        $region73: #{tpu_custom_call.1} parent=47 // pred_check
          %p868 = pneg %p867
        $region74: #{tpu_custom_call.1} parent=47 // pred_check_branch
          %870 = sbr.rel (%p868) target = $region76
        $region75: #{tpu_custom_call.1} parent=47 // pred_region
          %871 = vst [vmem:[#allocation2] sm:$0xff] 0
        $region76: #{tpu_custom_call.1} parent=47 // pred_fallthru
          _
        %p872 = scmp.eq.s32.totalorder %s32, 1
        // Predicated region
        $region77: #{tpu_custom_call.1} parent=47 // pred_check
          %p873 = pneg %p872
        $region78: #{tpu_custom_call.1} parent=47 // pred_check_branch
          %875 = sbr.rel (%p873) target = $region80
        $region79: #{tpu_custom_call.1} parent=47 // pred_region
          %876 = vst [vmem:[%s865] sm:$0xff] 0
        $region80: #{tpu_custom_call.1} parent=47 // pred_fallthru
          _
        %v877 = vld [vmem:[#allocation2] sm:$0xff]
        %v878 = vld [vmem:[#allocation2 + $0x8] sm:$0xff]
        %v879 = vld [vmem:[#allocation2 + $0x10] sm:$0xff]
        %v880 = vld [vmem:[#allocation2 + $0x18] sm:$0xff]
        %v881 = vld [vmem:[#allocation2 + $0x20] sm:$0xff]
        %v882 = vld [vmem:[#allocation2 + $0x28] sm:$0xff]
        %v883 = vld [vmem:[#allocation2 + $0x30] sm:$0xff]
        %v884 = vld [vmem:[#allocation2 + $0x38] sm:$0xff]
        %v885 = vld [vmem:[#allocation2 + $0x40] sm:$0xff]
        %v886 = vld [vmem:[#allocation2 + $0x48] sm:$0xff]
        %v888 = vshrl.u32 %v877, 16
        %v890 = vrot.slane %v888, 7
        %v891 = vshll.u32 %v877, 16
        %v893 = vor.u32 %v890, %v891
        %v895 = vshrl.u32 %v878, 16
        %v897 = vrot.slane %v895, 7
        %v898 = vshll.u32 %v878, 16
        %v900 = vor.u32 %v897, %v898
        %v902 = vshrl.u32 %v879, 16
        %v904 = vrot.slane %v902, 7
        %v905 = vshll.u32 %v879, 16
        %v907 = vor.u32 %v904, %v905
        %v909 = vshrl.u32 %v880, 16
        %v911 = vrot.slane %v909, 7
        %v912 = vshll.u32 %v880, 16
        %v914 = vor.u32 %v911, %v912
        %v916 = vshrl.u32 %v881, 16
        %v918 = vrot.slane %v916, 7
        %v919 = vshll.u32 %v881, 16
        %v921 = vor.u32 %v918, %v919
        %v923 = vshrl.u32 %v882, 16
        %v925 = vrot.slane %v923, 7
        %v926 = vshll.u32 %v882, 16
        %v928 = vor.u32 %v925, %v926
        %v930 = vshrl.u32 %v883, 16
        %v932 = vrot.slane %v930, 7
        %v933 = vshll.u32 %v883, 16
        %v935 = vor.u32 %v932, %v933
        %v937 = vshrl.u32 %v884, 16
        %v939 = vrot.slane %v937, 7
        %v940 = vshll.u32 %v884, 16
        %v942 = vor.u32 %v939, %v940
        %v944 = vshrl.u32 %v885, 16
        %v946 = vrot.slane %v944, 7
        %v947 = vshll.u32 %v885, 16
        %v949 = vor.u32 %v946, %v947
        %v951 = vshrl.u32 %v886, 16
        %v953 = vrot.slane %v951, 7
        %v954 = vshll.u32 %v886, 16
        %v956 = vor.u32 %v953, %v954
        %vm967 = vcmask 1040384
        %vm968 = vsmask.f32 256
        %vm969 = vmand %vm967, %vm968
        %v970 = vsel %vm969, 0, %v893
        %v971 = vsel %vm969, 0, %v900
        %v972 = vsel %vm969, 0, %v907
        %v973 = vsel %vm969, 0, %v914
        %v974 = vsel %vm969, 0, %v921
        %v975 = vsel %vm969, 0, %v928
        %v976 = vsel %vm969, 0, %v935
        %v977 = vsel %vm969, 0, %v942
        %v978 = vsel %vm969, 0, %v949
        %v979 = vsel %vm969, 0, %v956
        %v980 = vrot.slane %v891, 1
        %v981 = vor.u32 %v888, %v980
        %v982 = vrot.slane %v898, 1
        %v983 = vor.u32 %v895, %v982
        %v984 = vrot.slane %v905, 1
        %v985 = vor.u32 %v902, %v984
        %v986 = vrot.slane %v912, 1
        %v987 = vor.u32 %v909, %v986
        %v988 = vrot.slane %v919, 1
        %v989 = vor.u32 %v916, %v988
        %v990 = vrot.slane %v926, 1
        %v991 = vor.u32 %v923, %v990
        %v992 = vrot.slane %v933, 1
        %v993 = vor.u32 %v930, %v992
        %v994 = vrot.slane %v940, 1
        %v995 = vor.u32 %v937, %v994
        %v996 = vrot.slane %v947, 1
        %v997 = vor.u32 %v944, %v996
        %v998 = vrot.slane %v954, 1
        %v999 = vor.u32 %v951, %v998
        %vm1010 = vcmask 1047552
        %vm1011 = vsmask.f32 7424
        %vm1012 = vmand %vm1010, %vm1011
        %v1013 = vsel %vm1012, %v981, 0
        %v1014 = vsel %vm1012, %v983, 0
        %v1015 = vsel %vm1012, %v985, 0
        %v1016 = vsel %vm1012, %v987, 0
        %v1017 = vsel %vm1012, %v989, 0
        %v1018 = vsel %vm1012, %v991, 0
        %v1019 = vsel %vm1012, %v993, 0
        %v1020 = vsel %vm1012, %v995, 0
        %v1021 = vsel %vm1012, %v997, 0
        %v1022 = vsel %vm1012, %v999, 0
        %v1023 = vld [vmem:[#allocation10] sm:$0xf]
        %v1024 = vld [vmem:[#allocation10 + $0x4] sm:$0xf]
        %v1025 = vld [vmem:[#allocation10 + $0x8] sm:$0xf]
        %v1026 = vld [vmem:[#allocation10 + $0xc] sm:$0xf]
        %v1027 = vld [vmem:[#allocation10 + $0x10] sm:$0xf]
        %v1028 = vld [vmem:[#allocation10 + $0x14] sm:$0xf]
        %v1029 = vld [vmem:[#allocation10 + $0x18] sm:$0xf]
        %v1030 = vld [vmem:[#allocation10 + $0x1c] sm:$0xf]
        %v1031 = vld [vmem:[#allocation10 + $0x20] sm:$0xf]
        %v1032 = vld [vmem:[#allocation10 + $0x24] sm:$0xf]
        %v1033 = vld [vmem:[#allocation10 + $0x28] sm:$0xf]
        %v1034 = vld [vmem:[#allocation10 + $0x2c] sm:$0xf]
        %v1035 = vld [vmem:[#allocation10 + $0x30] sm:$0xf]
        %v1036 = vld [vmem:[#allocation10 + $0x34] sm:$0xf]
        %v1037 = vld [vmem:[#allocation10 + $0x38] sm:$0xf]
        %v1038 = vld [vmem:[#allocation10 + $0x3c] sm:$0xf]
        %s1039 = scalar_lea.vmem [#allocation10], 64
        %v1040 = vld [vmem:[%s1039] sm:$0xf]
        %v1041 = vld [vmem:[%s1039 + $0x4] sm:$0xf]
        %v1042 = vld [vmem:[%s1039 + $0x8] sm:$0xf]
        %v1043 = vld [vmem:[%s1039 + $0xc] sm:$0xf]
        %v1044 = vld [vmem:[%s1039 + $0x10] sm:$0xf]
        %v1045 = vld [vmem:[%s1039 + $0x14] sm:$0xf]
        %v1046 = vld [vmem:[%s1039 + $0x18] sm:$0xf]
        %v1047 = vld [vmem:[%s1039 + $0x1c] sm:$0xf]
        %v1048 = vld [vmem:[%s1039 + $0x20] sm:$0xf]
        %v1049 = vld [vmem:[%s1039 + $0x24] sm:$0xf]
        %v1050 = vld [vmem:[%s1039 + $0x28] sm:$0xf]
        %v1051 = vld [vmem:[%s1039 + $0x2c] sm:$0xf]
        %v1052 = vld [vmem:[%s1039 + $0x30] sm:$0xf]
        %v1053 = vld [vmem:[%s1039 + $0x34] sm:$0xf]
        %v1054 = vld [vmem:[%s1039 + $0x38] sm:$0xf]
        %v1055 = vld [vmem:[%s1039 + $0x3c] sm:$0xf]
        %v1072 = vunpack.c.l.b16 %v1040
        %v1073 = vunpack.c.l.b16 %v1041
        %v1074 = vunpack.c.l.b16 %v1042
        %v1075 = vunpack.c.l.b16 %v1043
        %v1076 = vunpack.c.l.b16 %v1044
        %v1077 = vunpack.c.l.b16 %v1045
        %v1078 = vunpack.c.l.b16 %v1046
        %v1079 = vunpack.c.l.b16 %v1047
        %v1080 = vunpack.c.l.b16 %v1048
        %v1081 = vunpack.c.l.b16 %v1049
        %v1082 = vunpack.c.l.b16 %v1050
        %v1083 = vunpack.c.l.b16 %v1051
        %v1084 = vunpack.c.l.b16 %v1052
        %v1085 = vunpack.c.l.b16 %v1053
        %v1086 = vunpack.c.l.b16 %v1054
        %v1087 = vunpack.c.l.b16 %v1055
        %v1088 = vpack.c.b16 %v1073, %v1072
        %v1089 = vpack.c.b16 %v1075, %v1074
        %v1090 = vpack.c.b16 %v1077, %v1076
        %v1091 = vpack.c.b16 %v1079, %v1078
        %v1092 = vpack.c.b16 %v1081, %v1080
        %v1093 = vpack.c.b16 %v1083, %v1082
        %v1094 = vpack.c.b16 %v1085, %v1084
        %v1095 = vpack.c.b16 %v1087, %v1086
        %1104 = vmatprep.subr.bf16.mxu0 0
        %1105 = vmatpush1.bf16.msra.mxu0 %v1088
        %1106 = vmatprep.subr.bf16.mxu0 0
        %1107 = vmatpush1.bf16.msra.mxu0 %v1089
        %1108 = vmatprep.subr.bf16.mxu0 0
        %1109 = vmatpush1.bf16.msra.mxu0 %v1090
        %1110 = vmatprep.subr.bf16.mxu0 0
        %1111 = vmatpush1.bf16.msra.mxu0 %v1091
        %1112 = vmatprep.subr.bf16.mxu0 0
        %1113 = vmatpush1.bf16.msra.mxu0 %v1092
        %1114 = vmatprep.subr.bf16.mxu0 0
        %1115 = vmatpush1.bf16.msra.mxu0 %v1093
        %1116 = vmatprep.subr.bf16.mxu0 0
        %1117 = vmatpush1.bf16.msra.mxu0 %v1094
        %1118 = vmatprep.subr.bf16.mxu0 0
        %1119 = vmatpush1.bf16.msra.mxu0 %v1095
        %1120 = vmatprep.subr.bf16.mxu0 0
        %1121 = vmatpush1.bf16.msra.mxu0 0
        %1122 = vmatprep.subr.bf16.mxu0 0
        %1123 = vmatpush1.bf16.msra.mxu0 0
        %1124 = vmatprep.subr.bf16.mxu0 0
        %1125 = vmatpush1.bf16.msra.mxu0 0
        %1126 = vmatprep.subr.bf16.mxu0 0
        %1127 = vmatpush1.bf16.msra.mxu0 0
        %1128 = vmatprep.subr.bf16.mxu0 0
        %1129 = vmatpush1.bf16.msra.mxu0 0
        %1130 = vmatprep.subr.bf16.mxu0 0
        %1131 = vmatpush1.bf16.msra.mxu0 0
        %1132 = vmatprep.subr.bf16.mxu0 0
        %1133 = vmatpush1.bf16.msra.mxu0 0
        %1134 = vmatprep.subr.bf16.mxu0 0
        %1135 = vmatpush1.bf16.msra.mxu0 0
        %1136 = vmatprep.mubr.bf16.mxu0 0
        %1137 = vmatmul.mubr.bf16.gmra.mrb[0].mxu0 %v877
        %v1138 = vpop.f32.mrb[0].mxu0
        %v1139 = vadd.f32 0.0, %v1138
        %v1140 = vpop.f32.mrb[0].mxu0
        %v1141 = vpop.f32.mrb[0].mxu0
        %v1142 = vadd.f32 0.0, %v1141
        %v1143 = vpop.f32.mrb[0].mxu0
        %1144 = vmatprep.mubr.bf16.mxu0 0
        %1145 = vmatmul.mubr.bf16.gmra.mrb[0].mxu0 %v878
        %v1146 = vpop.f32.mrb[0].mxu0
        %v1147 = vadd.f32 0.0, %v1146
        %v1148 = vpop.f32.mrb[0].mxu0
        %v1149 = vpop.f32.mrb[0].mxu0
        %v1150 = vadd.f32 0.0, %v1149
        %v1151 = vpop.f32.mrb[0].mxu0
        %1152 = vmatprep.mubr.bf16.mxu0 0
        %1153 = vmatmul.mubr.bf16.gmra.mrb[0].mxu0 %v879
        %v1154 = vpop.f32.mrb[0].mxu0
        %v1155 = vadd.f32 0.0, %v1154
        %v1156 = vpop.f32.mrb[0].mxu0
        %v1157 = vpop.f32.mrb[0].mxu0
        %v1158 = vadd.f32 0.0, %v1157
        %v1159 = vpop.f32.mrb[0].mxu0
        %1160 = vmatprep.mubr.bf16.mxu0 0
        %1161 = vmatmul.mubr.bf16.gmra.mrb[0].mxu0 %v880
        %v1162 = vpop.f32.mrb[0].mxu0
        %v1163 = vadd.f32 0.0, %v1162
        %v1164 = vpop.f32.mrb[0].mxu0
        %v1165 = vpop.f32.mrb[0].mxu0
        %v1166 = vadd.f32 0.0, %v1165
        %v1167 = vpop.f32.mrb[0].mxu0
        %1168 = vmatprep.mubr.bf16.mxu0 0
        %1169 = vmatmul.mubr.bf16.gmra.mrb[0].mxu0 %v881
        %v1170 = vpop.f32.mrb[0].mxu0
        %v1171 = vadd.f32 0.0, %v1170
        %v1172 = vpop.f32.mrb[0].mxu0
        %v1173 = vpop.f32.mrb[0].mxu0
        %v1174 = vadd.f32 0.0, %v1173
        %v1175 = vpop.f32.mrb[0].mxu0
        %1176 = vmatprep.mubr.bf16.mxu0 0
        %1177 = vmatmul.mubr.bf16.gmra.mrb[0].mxu0 %v882
        %v1178 = vpop.f32.mrb[0].mxu0
        %v1179 = vadd.f32 0.0, %v1178
        %v1180 = vpop.f32.mrb[0].mxu0
        %v1181 = vpop.f32.mrb[0].mxu0
        %v1182 = vadd.f32 0.0, %v1181
        %v1183 = vpop.f32.mrb[0].mxu0
        %1184 = vmatprep.mubr.bf16.mxu0 0
        %1185 = vmatmul.mubr.bf16.gmra.mrb[0].mxu0 %v883
        %v1186 = vpop.f32.mrb[0].mxu0
        %v1187 = vadd.f32 0.0, %v1186
        %v1188 = vpop.f32.mrb[0].mxu0
        %v1189 = vpop.f32.mrb[0].mxu0
        %v1190 = vadd.f32 0.0, %v1189
        %v1191 = vpop.f32.mrb[0].mxu0
        %1192 = vmatprep.mubr.bf16.mxu0 0
        %1193 = vmatmul.mubr.bf16.gmra.mrb[0].mxu0 %v884
        %v1194 = vpop.f32.mrb[0].mxu0
        %v1195 = vadd.f32 0.0, %v1194
        %v1196 = vpop.f32.mrb[0].mxu0
        %v1197 = vpop.f32.mrb[0].mxu0
        %v1198 = vadd.f32 0.0, %v1197
        %v1199 = vpop.f32.mrb[0].mxu0
        %1200 = vdwg.mxu0
        %v1217 = vunpack.c.l.b16 %v1023
        %v1218 = vunpack.c.l.b16 %v1024
        %v1219 = vunpack.c.l.b16 %v1025
        %v1220 = vunpack.c.l.b16 %v1026
        %v1221 = vunpack.c.l.b16 %v1027
        %v1222 = vunpack.c.l.b16 %v1028
        %v1223 = vunpack.c.l.b16 %v1029
        %v1224 = vunpack.c.l.b16 %v1030
        %v1225 = vunpack.c.l.b16 %v1031
        %v1226 = vunpack.c.l.b16 %v1032
        %v1227 = vunpack.c.l.b16 %v1033
        %v1228 = vunpack.c.l.b16 %v1034
        %v1229 = vunpack.c.l.b16 %v1035
        %v1230 = vunpack.c.l.b16 %v1036
        %v1231 = vunpack.c.l.b16 %v1037
        %v1232 = vunpack.c.l.b16 %v1038
        %v1233 = vpack.c.b16 %v1218, %v1217
        %v1234 = vpack.c.b16 %v1220, %v1219
        %v1235 = vpack.c.b16 %v1222, %v1221
        %v1236 = vpack.c.b16 %v1224, %v1223
        %v1237 = vpack.c.b16 %v1226, %v1225
        %v1238 = vpack.c.b16 %v1228, %v1227
        %v1239 = vpack.c.b16 %v1230, %v1229
        %v1240 = vpack.c.b16 %v1232, %v1231
        %1249 = vmatprep.subr.bf16.mxu0 0
        %1250 = vmatpush1.bf16.msra.mxu0 %v1233
        %1251 = vmatprep.subr.bf16.mxu0 0
        %1252 = vmatpush1.bf16.msra.mxu0 %v1234
        %1253 = vmatprep.subr.bf16.mxu0 0
        %1254 = vmatpush1.bf16.msra.mxu0 %v1235
        %1255 = vmatprep.subr.bf16.mxu0 0
        %1256 = vmatpush1.bf16.msra.mxu0 %v1236
        %1257 = vmatprep.subr.bf16.mxu0 0
        %1258 = vmatpush1.bf16.msra.mxu0 %v1237
        %1259 = vmatprep.subr.bf16.mxu0 0
        %1260 = vmatpush1.bf16.msra.mxu0 %v1238
        %1261 = vmatprep.subr.bf16.mxu0 0
        %1262 = vmatpush1.bf16.msra.mxu0 %v1239
        %1263 = vmatprep.subr.bf16.mxu0 0
        %1264 = vmatpush1.bf16.msra.mxu0 %v1240
        %1265 = vmatprep.subr.bf16.mxu0 0
        %1266 = vmatpush1.bf16.msra.mxu0 0
        %1267 = vmatprep.subr.bf16.mxu0 0
        %1268 = vmatpush1.bf16.msra.mxu0 0
        %1269 = vmatprep.subr.bf16.mxu0 0
        %1270 = vmatpush1.bf16.msra.mxu0 0
        %1271 = vmatprep.subr.bf16.mxu0 0
        %1272 = vmatpush1.bf16.msra.mxu0 0
        %1273 = vmatprep.subr.bf16.mxu0 0
        %1274 = vmatpush1.bf16.msra.mxu0 0
        %1275 = vmatprep.subr.bf16.mxu0 0
        %1276 = vmatpush1.bf16.msra.mxu0 0
        %1277 = vmatprep.subr.bf16.mxu0 0
        %1278 = vmatpush1.bf16.msra.mxu0 0
        %1279 = vmatprep.subr.bf16.mxu0 0
        %1280 = vmatpush1.bf16.msra.mxu0 0
        %1281 = vmatprep.mubr.bf16.mxu0 0
        %1282 = vmatmul.mubr.bf16.gmra.mrb[0].mxu0 %v970
        %v1283 = vpop.f32.mrb[0].mxu0
        %v1284 = vadd.f32 %v1139, %v1283
        %v1285 = vpop.f32.mrb[0].mxu0
        %v1286 = vpop.f32.mrb[0].mxu0
        %v1287 = vadd.f32 %v1142, %v1286
        %v1288 = vpop.f32.mrb[0].mxu0
        %1289 = vmatprep.mubr.bf16.mxu0 0
        %1290 = vmatmul.mubr.bf16.gmra.mrb[0].mxu0 %v971
        %v1291 = vpop.f32.mrb[0].mxu0
        %v1292 = vadd.f32 %v1147, %v1291
        %v1293 = vpop.f32.mrb[0].mxu0
        %v1294 = vpop.f32.mrb[0].mxu0
        %v1295 = vadd.f32 %v1150, %v1294
        %v1296 = vpop.f32.mrb[0].mxu0
        %1297 = vmatprep.mubr.bf16.mxu0 0
        %1298 = vmatmul.mubr.bf16.gmra.mrb[0].mxu0 %v972
        %v1299 = vpop.f32.mrb[0].mxu0
        %v1300 = vadd.f32 %v1155, %v1299
        %v1301 = vpop.f32.mrb[0].mxu0
        %v1302 = vpop.f32.mrb[0].mxu0
        %v1303 = vadd.f32 %v1158, %v1302
        %v1304 = vpop.f32.mrb[0].mxu0
        %1305 = vmatprep.mubr.bf16.mxu0 0
        %1306 = vmatmul.mubr.bf16.gmra.mrb[0].mxu0 %v973
        %v1307 = vpop.f32.mrb[0].mxu0
        %v1308 = vadd.f32 %v1163, %v1307
        %v1309 = vpop.f32.mrb[0].mxu0
        %v1310 = vpop.f32.mrb[0].mxu0
        %v1311 = vadd.f32 %v1166, %v1310
        %v1312 = vpop.f32.mrb[0].mxu0
        %1313 = vmatprep.mubr.bf16.mxu0 0
        %1314 = vmatmul.mubr.bf16.gmra.mrb[0].mxu0 %v974
        %v1315 = vpop.f32.mrb[0].mxu0
        %v1316 = vadd.f32 %v1171, %v1315
        %v1317 = vpop.f32.mrb[0].mxu0
        %v1318 = vpop.f32.mrb[0].mxu0
        %v1319 = vadd.f32 %v1174, %v1318
        %v1320 = vpop.f32.mrb[0].mxu0
        %1321 = vmatprep.mubr.bf16.mxu0 0
        %1322 = vmatmul.mubr.bf16.gmra.mrb[0].mxu0 %v975
        %v1323 = vpop.f32.mrb[0].mxu0
        %v1324 = vadd.f32 %v1179, %v1323
        %v1325 = vpop.f32.mrb[0].mxu0
        %v1326 = vpop.f32.mrb[0].mxu0
        %v1327 = vadd.f32 %v1182, %v1326
        %v1328 = vpop.f32.mrb[0].mxu0
        %1329 = vmatprep.mubr.bf16.mxu0 0
        %1330 = vmatmul.mubr.bf16.gmra.mrb[0].mxu0 %v976
        %v1331 = vpop.f32.mrb[0].mxu0
        %v1332 = vadd.f32 %v1187, %v1331
        %v1333 = vpop.f32.mrb[0].mxu0
        %v1334 = vpop.f32.mrb[0].mxu0
        %v1335 = vadd.f32 %v1190, %v1334
        %v1336 = vpop.f32.mrb[0].mxu0
        %1337 = vmatprep.mubr.bf16.mxu0 0
        %1338 = vmatmul.mubr.bf16.gmra.mrb[0].mxu0 %v977
        %v1339 = vpop.f32.mrb[0].mxu0
        %v1340 = vadd.f32 %v1195, %v1339
        %v1341 = vpop.f32.mrb[0].mxu0
        %v1342 = vpop.f32.mrb[0].mxu0
        %v1343 = vadd.f32 %v1198, %v1342
        %v1344 = vpop.f32.mrb[0].mxu0
        %1345 = vdwg.mxu0
        %s1346 = scalar_lea.vmem [#allocation10], 128
        %v1347 = vld [vmem:[%s1346] sm:$0xf]
        %v1348 = vld [vmem:[%s1346 + $0x4] sm:$0xf]
        %v1349 = vld [vmem:[%s1346 + $0x8] sm:$0xf]
        %v1350 = vld [vmem:[%s1346 + $0xc] sm:$0xf]
        %v1351 = vld [vmem:[%s1346 + $0x10] sm:$0xf]
        %v1352 = vld [vmem:[%s1346 + $0x14] sm:$0xf]
        %v1353 = vld [vmem:[%s1346 + $0x18] sm:$0xf]
        %v1354 = vld [vmem:[%s1346 + $0x1c] sm:$0xf]
        %v1355 = vld [vmem:[%s1346 + $0x20] sm:$0xf]
        %v1356 = vld [vmem:[%s1346 + $0x24] sm:$0xf]
        %v1357 = vld [vmem:[%s1346 + $0x28] sm:$0xf]
        %v1358 = vld [vmem:[%s1346 + $0x2c] sm:$0xf]
        %v1359 = vld [vmem:[%s1346 + $0x30] sm:$0xf]
        %v1360 = vld [vmem:[%s1346 + $0x34] sm:$0xf]
        %v1361 = vld [vmem:[%s1346 + $0x38] sm:$0xf]
        %v1362 = vld [vmem:[%s1346 + $0x3c] sm:$0xf]
        %v1379 = vunpack.c.l.b16 %v1347
        %v1380 = vunpack.c.l.b16 %v1348
        %v1381 = vunpack.c.l.b16 %v1349
        %v1382 = vunpack.c.l.b16 %v1350
        %v1383 = vunpack.c.l.b16 %v1351
        %v1384 = vunpack.c.l.b16 %v1352
        %v1385 = vunpack.c.l.b16 %v1353
        %v1386 = vunpack.c.l.b16 %v1354
        %v1387 = vunpack.c.l.b16 %v1355
        %v1388 = vunpack.c.l.b16 %v1356
        %v1389 = vunpack.c.l.b16 %v1357
        %v1390 = vunpack.c.l.b16 %v1358
        %v1391 = vunpack.c.l.b16 %v1359
        %v1392 = vunpack.c.l.b16 %v1360
        %v1393 = vunpack.c.l.b16 %v1361
        %v1394 = vunpack.c.l.b16 %v1362
        %v1395 = vpack.c.b16 %v1380, %v1379
        %v1396 = vpack.c.b16 %v1382, %v1381
        %v1397 = vpack.c.b16 %v1384, %v1383
        %v1398 = vpack.c.b16 %v1386, %v1385
        %v1399 = vpack.c.b16 %v1388, %v1387
        %v1400 = vpack.c.b16 %v1390, %v1389
        %v1401 = vpack.c.b16 %v1392, %v1391
        %v1402 = vpack.c.b16 %v1394, %v1393
        %1411 = vmatprep.subr.bf16.mxu0 0
        %1412 = vmatpush1.bf16.msra.mxu0 %v1395
        %1413 = vmatprep.subr.bf16.mxu0 0
        %1414 = vmatpush1.bf16.msra.mxu0 %v1396
        %1415 = vmatprep.subr.bf16.mxu0 0
        %1416 = vmatpush1.bf16.msra.mxu0 %v1397
        %1417 = vmatprep.subr.bf16.mxu0 0
        %1418 = vmatpush1.bf16.msra.mxu0 %v1398
        %1419 = vmatprep.subr.bf16.mxu0 0
        %1420 = vmatpush1.bf16.msra.mxu0 %v1399
        %1421 = vmatprep.subr.bf16.mxu0 0
        %1422 = vmatpush1.bf16.msra.mxu0 %v1400
        %1423 = vmatprep.subr.bf16.mxu0 0
        %1424 = vmatpush1.bf16.msra.mxu0 %v1401
        %1425 = vmatprep.subr.bf16.mxu0 0
        %1426 = vmatpush1.bf16.msra.mxu0 %v1402
        %1427 = vmatprep.subr.bf16.mxu0 0
        %1428 = vmatpush1.bf16.msra.mxu0 0
        %1429 = vmatprep.subr.bf16.mxu0 0
        %1430 = vmatpush1.bf16.msra.mxu0 0
        %1431 = vmatprep.subr.bf16.mxu0 0
        %1432 = vmatpush1.bf16.msra.mxu0 0
        %1433 = vmatprep.subr.bf16.mxu0 0
        %1434 = vmatpush1.bf16.msra.mxu0 0
        %1435 = vmatprep.subr.bf16.mxu0 0
        %1436 = vmatpush1.bf16.msra.mxu0 0
        %1437 = vmatprep.subr.bf16.mxu0 0
        %1438 = vmatpush1.bf16.msra.mxu0 0
        %1439 = vmatprep.subr.bf16.mxu0 0
        %1440 = vmatpush1.bf16.msra.mxu0 0
        %1441 = vmatprep.subr.bf16.mxu0 0
        %1442 = vmatpush1.bf16.msra.mxu0 0
        %1443 = vmatprep.mubr.bf16.mxu0 0
        %1444 = vmatmul.mubr.bf16.gmra.mrb[0].mxu0 %v1013
        %v1445 = vpop.f32.mrb[0].mxu0
        %v1446 = vadd.f32 0.0, %v1445
        %v1447 = vpop.f32.mrb[0].mxu0
        %v1448 = vpop.f32.mrb[0].mxu0
        %v1449 = vadd.f32 0.0, %v1448
        %v1450 = vpop.f32.mrb[0].mxu0
        %1451 = vmatprep.mubr.bf16.mxu0 0
        %1452 = vmatmul.mubr.bf16.gmra.mrb[0].mxu0 %v1014
        %v1453 = vpop.f32.mrb[0].mxu0
        %v1454 = vadd.f32 0.0, %v1453
        %v1455 = vpop.f32.mrb[0].mxu0
        %v1456 = vpop.f32.mrb[0].mxu0
        %v1457 = vadd.f32 0.0, %v1456
        %v1458 = vpop.f32.mrb[0].mxu0
        %1459 = vmatprep.mubr.bf16.mxu0 0
        %1460 = vmatmul.mubr.bf16.gmra.mrb[0].mxu0 %v1015
        %v1461 = vpop.f32.mrb[0].mxu0
        %v1462 = vadd.f32 0.0, %v1461
        %v1463 = vpop.f32.mrb[0].mxu0
        %v1464 = vpop.f32.mrb[0].mxu0
        %v1465 = vadd.f32 0.0, %v1464
        %v1466 = vpop.f32.mrb[0].mxu0
        %1467 = vmatprep.mubr.bf16.mxu0 0
        %1468 = vmatmul.mubr.bf16.gmra.mrb[0].mxu0 %v1016
        %v1469 = vpop.f32.mrb[0].mxu0
        %v1470 = vadd.f32 0.0, %v1469
        %v1471 = vpop.f32.mrb[0].mxu0
        %v1472 = vpop.f32.mrb[0].mxu0
        %v1473 = vadd.f32 0.0, %v1472
        %v1474 = vpop.f32.mrb[0].mxu0
        %1475 = vmatprep.mubr.bf16.mxu0 0
        %1476 = vmatmul.mubr.bf16.gmra.mrb[0].mxu0 %v1017
        %v1477 = vpop.f32.mrb[0].mxu0
        %v1478 = vadd.f32 0.0, %v1477
        %v1479 = vpop.f32.mrb[0].mxu0
        %v1480 = vpop.f32.mrb[0].mxu0
        %v1481 = vadd.f32 0.0, %v1480
        %v1482 = vpop.f32.mrb[0].mxu0
        %1483 = vmatprep.mubr.bf16.mxu0 0
        %1484 = vmatmul.mubr.bf16.gmra.mrb[0].mxu0 %v1018
        %v1485 = vpop.f32.mrb[0].mxu0
        %v1486 = vadd.f32 0.0, %v1485
        %v1487 = vpop.f32.mrb[0].mxu0
        %v1488 = vpop.f32.mrb[0].mxu0
        %v1489 = vadd.f32 0.0, %v1488
        %v1490 = vpop.f32.mrb[0].mxu0
        %1491 = vmatprep.mubr.bf16.mxu0 0
        %1492 = vmatmul.mubr.bf16.gmra.mrb[0].mxu0 %v1019
        %v1493 = vpop.f32.mrb[0].mxu0
        %v1494 = vadd.f32 0.0, %v1493
        %v1495 = vpop.f32.mrb[0].mxu0
        %v1496 = vpop.f32.mrb[0].mxu0
        %v1497 = vadd.f32 0.0, %v1496
        %v1498 = vpop.f32.mrb[0].mxu0
        %1499 = vmatprep.mubr.bf16.mxu0 0
        %1500 = vmatmul.mubr.bf16.gmra.mrb[0].mxu0 %v1020
        %v1501 = vpop.f32.mrb[0].mxu0
        %v1502 = vadd.f32 0.0, %v1501
        %v1503 = vpop.f32.mrb[0].mxu0
        %v1504 = vpop.f32.mrb[0].mxu0
        %v1505 = vadd.f32 0.0, %v1504
        %v1506 = vpop.f32.mrb[0].mxu0
        %1507 = vdwg.mxu0
        %v1508 = vadd.f32 %v1284, %v1446
        %v1509 = vadd.f32 %v1287, %v1449
        %v1510 = vadd.f32 %v1292, %v1454
        %v1511 = vadd.f32 %v1295, %v1457
        %v1512 = vadd.f32 %v1300, %v1462
        %v1513 = vadd.f32 %v1303, %v1465
        %v1514 = vadd.f32 %v1308, %v1470
        %v1515 = vadd.f32 %v1311, %v1473
        %v1516 = vadd.f32 %v1316, %v1478
        %v1517 = vadd.f32 %v1319, %v1481
        %v1518 = vadd.f32 %v1324, %v1486
        %v1519 = vadd.f32 %v1327, %v1489
        %v1520 = vadd.f32 %v1332, %v1494
        %v1521 = vadd.f32 %v1335, %v1497
        %v1522 = vadd.f32 %v1340, %v1502
        %v1523 = vadd.f32 %v1343, %v1505
        %s1524 = scalar_lea.vmem [#allocation10], 192
        %v1525 = vld [vmem:[%s1524] sm:$0xf]
        %v1526 = vld [vmem:[%s1524 + $0x4] sm:$0xf]
        %v1527 = vld [vmem:[%s1524 + $0x8] sm:$0xf]
        %v1528 = vld [vmem:[%s1524 + $0xc] sm:$0xf]
        %v1529 = vld [vmem:[%s1524 + $0x10] sm:$0xf]
        %v1530 = vld [vmem:[%s1524 + $0x14] sm:$0xf]
        %v1531 = vld [vmem:[%s1524 + $0x18] sm:$0xf]
        %v1532 = vld [vmem:[%s1524 + $0x1c] sm:$0xf]
        %v1533 = vld [vmem:[%s1524 + $0x20] sm:$0xf]
        %v1534 = vld [vmem:[%s1524 + $0x24] sm:$0xf]
        %v1535 = vld [vmem:[%s1524 + $0x28] sm:$0xf]
        %v1536 = vld [vmem:[%s1524 + $0x2c] sm:$0xf]
        %v1537 = vld [vmem:[%s1524 + $0x30] sm:$0xf]
        %v1538 = vld [vmem:[%s1524 + $0x34] sm:$0xf]
        %v1539 = vld [vmem:[%s1524 + $0x38] sm:$0xf]
        %v1540 = vld [vmem:[%s1524 + $0x3c] sm:$0xf]
        %v1557 = vunpack.c.l.b16 %v1525
        %v1558 = vunpack.c.l.b16 %v1526
        %v1559 = vunpack.c.l.b16 %v1527
        %v1560 = vunpack.c.l.b16 %v1528
        %v1561 = vunpack.c.l.b16 %v1529
        %v1562 = vunpack.c.l.b16 %v1530
        %v1563 = vunpack.c.l.b16 %v1531
        %v1564 = vunpack.c.l.b16 %v1532
        %v1565 = vunpack.c.l.b16 %v1533
        %v1566 = vunpack.c.l.b16 %v1534
        %v1567 = vunpack.c.l.b16 %v1535
        %v1568 = vunpack.c.l.b16 %v1536
        %v1569 = vunpack.c.l.b16 %v1537
        %v1570 = vunpack.c.l.b16 %v1538
        %v1571 = vunpack.c.l.b16 %v1539
        %v1572 = vunpack.c.l.b16 %v1540
        %v1573 = vpack.c.b16 %v1558, %v1557
        %v1574 = vpack.c.b16 %v1560, %v1559
        %v1575 = vpack.c.b16 %v1562, %v1561
        %v1576 = vpack.c.b16 %v1564, %v1563
        %v1577 = vpack.c.b16 %v1566, %v1565
        %v1578 = vpack.c.b16 %v1568, %v1567
        %v1579 = vpack.c.b16 %v1570, %v1569
        %v1580 = vpack.c.b16 %v1572, %v1571
        %1589 = vmatprep.subr.bf16.mxu0 0
        %1590 = vmatpush1.bf16.msra.mxu0 %v1573
        %1591 = vmatprep.subr.bf16.mxu0 0
        %1592 = vmatpush1.bf16.msra.mxu0 %v1574
        %1593 = vmatprep.subr.bf16.mxu0 0
        %1594 = vmatpush1.bf16.msra.mxu0 %v1575
        %1595 = vmatprep.subr.bf16.mxu0 0
        %1596 = vmatpush1.bf16.msra.mxu0 %v1576
        %1597 = vmatprep.subr.bf16.mxu0 0
        %1598 = vmatpush1.bf16.msra.mxu0 %v1577
        %1599 = vmatprep.subr.bf16.mxu0 0
        %1600 = vmatpush1.bf16.msra.mxu0 %v1578
        %1601 = vmatprep.subr.bf16.mxu0 0
        %1602 = vmatpush1.bf16.msra.mxu0 %v1579
        %1603 = vmatprep.subr.bf16.mxu0 0
        %1604 = vmatpush1.bf16.msra.mxu0 %v1580
        %1605 = vmatprep.subr.bf16.mxu0 0
        %1606 = vmatpush1.bf16.msra.mxu0 0
        %1607 = vmatprep.subr.bf16.mxu0 0
        %1608 = vmatpush1.bf16.msra.mxu0 0
        %1609 = vmatprep.subr.bf16.mxu0 0
        %1610 = vmatpush1.bf16.msra.mxu0 0
        %1611 = vmatprep.subr.bf16.mxu0 0
        %1612 = vmatpush1.bf16.msra.mxu0 0
        %1613 = vmatprep.subr.bf16.mxu0 0
        %1614 = vmatpush1.bf16.msra.mxu0 0
        %1615 = vmatprep.subr.bf16.mxu0 0
        %1616 = vmatpush1.bf16.msra.mxu0 0
        %1617 = vmatprep.subr.bf16.mxu0 0
        %1618 = vmatpush1.bf16.msra.mxu0 0
        %1619 = vmatprep.subr.bf16.mxu0 0
        %1620 = vmatpush1.bf16.msra.mxu0 0
        %1621 = vmatprep.mubr.bf16.mxu0 0
        %1622 = vmatmul.mubr.bf16.gmra.mrb[0].mxu0 %v971
        %v1623 = vpop.f32.mrb[0].mxu0
        %v1624 = vadd.f32 0.0, %v1623
        %v1625 = vpop.f32.mrb[0].mxu0
        %v1626 = vpop.f32.mrb[0].mxu0
        %v1627 = vadd.f32 0.0, %v1626
        %v1628 = vpop.f32.mrb[0].mxu0
        %1629 = vmatprep.mubr.bf16.mxu0 0
        %1630 = vmatmul.mubr.bf16.gmra.mrb[0].mxu0 %v972
        %v1631 = vpop.f32.mrb[0].mxu0
        %v1632 = vadd.f32 0.0, %v1631
        %v1633 = vpop.f32.mrb[0].mxu0
        %v1634 = vpop.f32.mrb[0].mxu0
        %v1635 = vadd.f32 0.0, %v1634
        %v1636 = vpop.f32.mrb[0].mxu0
        %1637 = vmatprep.mubr.bf16.mxu0 0
        %1638 = vmatmul.mubr.bf16.gmra.mrb[0].mxu0 %v973
        %v1639 = vpop.f32.mrb[0].mxu0
        %v1640 = vadd.f32 0.0, %v1639
        %v1641 = vpop.f32.mrb[0].mxu0
        %v1642 = vpop.f32.mrb[0].mxu0
        %v1643 = vadd.f32 0.0, %v1642
        %v1644 = vpop.f32.mrb[0].mxu0
        %1645 = vmatprep.mubr.bf16.mxu0 0
        %1646 = vmatmul.mubr.bf16.gmra.mrb[0].mxu0 %v974
        %v1647 = vpop.f32.mrb[0].mxu0
        %v1648 = vadd.f32 0.0, %v1647
        %v1649 = vpop.f32.mrb[0].mxu0
        %v1650 = vpop.f32.mrb[0].mxu0
        %v1651 = vadd.f32 0.0, %v1650
        %v1652 = vpop.f32.mrb[0].mxu0
        %1653 = vmatprep.mubr.bf16.mxu0 0
        %1654 = vmatmul.mubr.bf16.gmra.mrb[0].mxu0 %v975
        %v1655 = vpop.f32.mrb[0].mxu0
        %v1656 = vadd.f32 0.0, %v1655
        %v1657 = vpop.f32.mrb[0].mxu0
        %v1658 = vpop.f32.mrb[0].mxu0
        %v1659 = vadd.f32 0.0, %v1658
        %v1660 = vpop.f32.mrb[0].mxu0
        %1661 = vmatprep.mubr.bf16.mxu0 0
        %1662 = vmatmul.mubr.bf16.gmra.mrb[0].mxu0 %v976
        %v1663 = vpop.f32.mrb[0].mxu0
        %v1664 = vadd.f32 0.0, %v1663
        %v1665 = vpop.f32.mrb[0].mxu0
        %v1666 = vpop.f32.mrb[0].mxu0
        %v1667 = vadd.f32 0.0, %v1666
        %v1668 = vpop.f32.mrb[0].mxu0
        %1669 = vmatprep.mubr.bf16.mxu0 0
        %1670 = vmatmul.mubr.bf16.gmra.mrb[0].mxu0 %v977
        %v1671 = vpop.f32.mrb[0].mxu0
        %v1672 = vadd.f32 0.0, %v1671
        %v1673 = vpop.f32.mrb[0].mxu0
        %v1674 = vpop.f32.mrb[0].mxu0
        %v1675 = vadd.f32 0.0, %v1674
        %v1676 = vpop.f32.mrb[0].mxu0
        %1677 = vmatprep.mubr.bf16.mxu0 0
        %1678 = vmatmul.mubr.bf16.gmra.mrb[0].mxu0 %v978
        %v1679 = vpop.f32.mrb[0].mxu0
        %v1680 = vadd.f32 0.0, %v1679
        %v1681 = vpop.f32.mrb[0].mxu0
        %v1682 = vpop.f32.mrb[0].mxu0
        %v1683 = vadd.f32 0.0, %v1682
        %v1684 = vpop.f32.mrb[0].mxu0
        %1685 = vdwg.mxu0
        %v1686 = vadd.f32 %v1508, %v1624
        %v1687 = vadd.f32 %v1509, %v1627
        %v1688 = vadd.f32 %v1510, %v1632
        %v1689 = vadd.f32 %v1511, %v1635
        %v1690 = vadd.f32 %v1512, %v1640
        %v1691 = vadd.f32 %v1513, %v1643
        %v1692 = vadd.f32 %v1514, %v1648
        %v1693 = vadd.f32 %v1515, %v1651
        %v1694 = vadd.f32 %v1516, %v1656
        %v1695 = vadd.f32 %v1517, %v1659
        %v1696 = vadd.f32 %v1518, %v1664
        %v1697 = vadd.f32 %v1519, %v1667
        %v1698 = vadd.f32 %v1520, %v1672
        %v1699 = vadd.f32 %v1521, %v1675
        %v1700 = vadd.f32 %v1522, %v1680
        %v1701 = vadd.f32 %v1523, %v1683
        %s1702 = scalar_lea.vmem [#allocation10], 256
        %v1703 = vld [vmem:[%s1702] sm:$0xf]
        %v1704 = vld [vmem:[%s1702 + $0x4] sm:$0xf]
        %v1705 = vld [vmem:[%s1702 + $0x8] sm:$0xf]
        %v1706 = vld [vmem:[%s1702 + $0xc] sm:$0xf]
        %v1707 = vld [vmem:[%s1702 + $0x10] sm:$0xf]
        %v1708 = vld [vmem:[%s1702 + $0x14] sm:$0xf]
        %v1709 = vld [vmem:[%s1702 + $0x18] sm:$0xf]
        %v1710 = vld [vmem:[%s1702 + $0x1c] sm:$0xf]
        %v1711 = vld [vmem:[%s1702 + $0x20] sm:$0xf]
        %v1712 = vld [vmem:[%s1702 + $0x24] sm:$0xf]
        %v1713 = vld [vmem:[%s1702 + $0x28] sm:$0xf]
        %v1714 = vld [vmem:[%s1702 + $0x2c] sm:$0xf]
        %v1715 = vld [vmem:[%s1702 + $0x30] sm:$0xf]
        %v1716 = vld [vmem:[%s1702 + $0x34] sm:$0xf]
        %v1717 = vld [vmem:[%s1702 + $0x38] sm:$0xf]
        %v1718 = vld [vmem:[%s1702 + $0x3c] sm:$0xf]
        %v1735 = vunpack.c.l.b16 %v1703
        %v1736 = vunpack.c.l.b16 %v1704
        %v1737 = vunpack.c.l.b16 %v1705
        %v1738 = vunpack.c.l.b16 %v1706
        %v1739 = vunpack.c.l.b16 %v1707
        %v1740 = vunpack.c.l.b16 %v1708
        %v1741 = vunpack.c.l.b16 %v1709
        %v1742 = vunpack.c.l.b16 %v1710
        %v1743 = vunpack.c.l.b16 %v1711
        %v1744 = vunpack.c.l.b16 %v1712
        %v1745 = vunpack.c.l.b16 %v1713
        %v1746 = vunpack.c.l.b16 %v1714
        %v1747 = vunpack.c.l.b16 %v1715
        %v1748 = vunpack.c.l.b16 %v1716
        %v1749 = vunpack.c.l.b16 %v1717
        %v1750 = vunpack.c.l.b16 %v1718
        %v1751 = vpack.c.b16 %v1736, %v1735
        %v1752 = vpack.c.b16 %v1738, %v1737
        %v1753 = vpack.c.b16 %v1740, %v1739
        %v1754 = vpack.c.b16 %v1742, %v1741
        %v1755 = vpack.c.b16 %v1744, %v1743
        %v1756 = vpack.c.b16 %v1746, %v1745
        %v1757 = vpack.c.b16 %v1748, %v1747
        %v1758 = vpack.c.b16 %v1750, %v1749
        %1767 = vmatprep.subr.bf16.mxu0 0
        %1768 = vmatpush1.bf16.msra.mxu0 %v1751
        %1769 = vmatprep.subr.bf16.mxu0 0
        %1770 = vmatpush1.bf16.msra.mxu0 %v1752
        %1771 = vmatprep.subr.bf16.mxu0 0
        %1772 = vmatpush1.bf16.msra.mxu0 %v1753
        %1773 = vmatprep.subr.bf16.mxu0 0
        %1774 = vmatpush1.bf16.msra.mxu0 %v1754
        %1775 = vmatprep.subr.bf16.mxu0 0
        %1776 = vmatpush1.bf16.msra.mxu0 %v1755
        %1777 = vmatprep.subr.bf16.mxu0 0
        %1778 = vmatpush1.bf16.msra.mxu0 %v1756
        %1779 = vmatprep.subr.bf16.mxu0 0
        %1780 = vmatpush1.bf16.msra.mxu0 %v1757
        %1781 = vmatprep.subr.bf16.mxu0 0
        %1782 = vmatpush1.bf16.msra.mxu0 %v1758
        %1783 = vmatprep.subr.bf16.mxu0 0
        %1784 = vmatpush1.bf16.msra.mxu0 0
        %1785 = vmatprep.subr.bf16.mxu0 0
        %1786 = vmatpush1.bf16.msra.mxu0 0
        %1787 = vmatprep.subr.bf16.mxu0 0
        %1788 = vmatpush1.bf16.msra.mxu0 0
        %1789 = vmatprep.subr.bf16.mxu0 0
        %1790 = vmatpush1.bf16.msra.mxu0 0
        %1791 = vmatprep.subr.bf16.mxu0 0
        %1792 = vmatpush1.bf16.msra.mxu0 0
        %1793 = vmatprep.subr.bf16.mxu0 0
        %1794 = vmatpush1.bf16.msra.mxu0 0
        %1795 = vmatprep.subr.bf16.mxu0 0
        %1796 = vmatpush1.bf16.msra.mxu0 0
        %1797 = vmatprep.subr.bf16.mxu0 0
        %1798 = vmatpush1.bf16.msra.mxu0 0
        %1799 = vmatprep.mubr.bf16.mxu0 0
        %1800 = vmatmul.mubr.bf16.gmra.mrb[0].mxu0 %v878
        %v1801 = vpop.f32.mrb[0].mxu0
        %v1802 = vadd.f32 0.0, %v1801
        %v1803 = vpop.f32.mrb[0].mxu0
        %v1804 = vpop.f32.mrb[0].mxu0
        %v1805 = vadd.f32 0.0, %v1804
        %v1806 = vpop.f32.mrb[0].mxu0
        %1807 = vmatprep.mubr.bf16.mxu0 0
        %1808 = vmatmul.mubr.bf16.gmra.mrb[0].mxu0 %v879
        %v1809 = vpop.f32.mrb[0].mxu0
        %v1810 = vadd.f32 0.0, %v1809
        %v1811 = vpop.f32.mrb[0].mxu0
        %v1812 = vpop.f32.mrb[0].mxu0
        %v1813 = vadd.f32 0.0, %v1812
        %v1814 = vpop.f32.mrb[0].mxu0
        %1815 = vmatprep.mubr.bf16.mxu0 0
        %1816 = vmatmul.mubr.bf16.gmra.mrb[0].mxu0 %v880
        %v1817 = vpop.f32.mrb[0].mxu0
        %v1818 = vadd.f32 0.0, %v1817
        %v1819 = vpop.f32.mrb[0].mxu0
        %v1820 = vpop.f32.mrb[0].mxu0
        %v1821 = vadd.f32 0.0, %v1820
        %v1822 = vpop.f32.mrb[0].mxu0
        %1823 = vmatprep.mubr.bf16.mxu0 0
        %1824 = vmatmul.mubr.bf16.gmra.mrb[0].mxu0 %v881
        %v1825 = vpop.f32.mrb[0].mxu0
        %v1826 = vadd.f32 0.0, %v1825
        %v1827 = vpop.f32.mrb[0].mxu0
        %v1828 = vpop.f32.mrb[0].mxu0
        %v1829 = vadd.f32 0.0, %v1828
        %v1830 = vpop.f32.mrb[0].mxu0
        %1831 = vmatprep.mubr.bf16.mxu0 0
        %1832 = vmatmul.mubr.bf16.gmra.mrb[0].mxu0 %v882
        %v1833 = vpop.f32.mrb[0].mxu0
        %v1834 = vadd.f32 0.0, %v1833
        %v1835 = vpop.f32.mrb[0].mxu0
        %v1836 = vpop.f32.mrb[0].mxu0
        %v1837 = vadd.f32 0.0, %v1836
        %v1838 = vpop.f32.mrb[0].mxu0
        %1839 = vmatprep.mubr.bf16.mxu0 0
        %1840 = vmatmul.mubr.bf16.gmra.mrb[0].mxu0 %v883
        %v1841 = vpop.f32.mrb[0].mxu0
        %v1842 = vadd.f32 0.0, %v1841
        %v1843 = vpop.f32.mrb[0].mxu0
        %v1844 = vpop.f32.mrb[0].mxu0
        %v1845 = vadd.f32 0.0, %v1844
        %v1846 = vpop.f32.mrb[0].mxu0
        %1847 = vmatprep.mubr.bf16.mxu0 0
        %1848 = vmatmul.mubr.bf16.gmra.mrb[0].mxu0 %v884
        %v1849 = vpop.f32.mrb[0].mxu0
        %v1850 = vadd.f32 0.0, %v1849
        %v1851 = vpop.f32.mrb[0].mxu0
        %v1852 = vpop.f32.mrb[0].mxu0
        %v1853 = vadd.f32 0.0, %v1852
        %v1854 = vpop.f32.mrb[0].mxu0
        %1855 = vmatprep.mubr.bf16.mxu0 0
        %1856 = vmatmul.mubr.bf16.gmra.mrb[0].mxu0 %v885
        %v1857 = vpop.f32.mrb[0].mxu0
        %v1858 = vadd.f32 0.0, %v1857
        %v1859 = vpop.f32.mrb[0].mxu0
        %v1860 = vpop.f32.mrb[0].mxu0
        %v1861 = vadd.f32 0.0, %v1860
        %v1862 = vpop.f32.mrb[0].mxu0
        %1863 = vdwg.mxu0
        %v1864 = vadd.f32 %v1686, %v1802
        %v1865 = vadd.f32 %v1687, %v1805
        %v1866 = vadd.f32 %v1688, %v1810
        %v1867 = vadd.f32 %v1689, %v1813
        %v1868 = vadd.f32 %v1690, %v1818
        %v1869 = vadd.f32 %v1691, %v1821
        %v1870 = vadd.f32 %v1692, %v1826
        %v1871 = vadd.f32 %v1693, %v1829
        %v1872 = vadd.f32 %v1694, %v1834
        %v1873 = vadd.f32 %v1695, %v1837
        %v1874 = vadd.f32 %v1696, %v1842
        %v1875 = vadd.f32 %v1697, %v1845
        %v1876 = vadd.f32 %v1698, %v1850
        %v1877 = vadd.f32 %v1699, %v1853
        %v1878 = vadd.f32 %v1700, %v1858
        %v1879 = vadd.f32 %v1701, %v1861
        %s1880 = scalar_lea.vmem [#allocation10], 320
        %v1881 = vld [vmem:[%s1880] sm:$0xf]
        %v1882 = vld [vmem:[%s1880 + $0x4] sm:$0xf]
        %v1883 = vld [vmem:[%s1880 + $0x8] sm:$0xf]
        %v1884 = vld [vmem:[%s1880 + $0xc] sm:$0xf]
        %v1885 = vld [vmem:[%s1880 + $0x10] sm:$0xf]
        %v1886 = vld [vmem:[%s1880 + $0x14] sm:$0xf]
        %v1887 = vld [vmem:[%s1880 + $0x18] sm:$0xf]
        %v1888 = vld [vmem:[%s1880 + $0x1c] sm:$0xf]
        %v1889 = vld [vmem:[%s1880 + $0x20] sm:$0xf]
        %v1890 = vld [vmem:[%s1880 + $0x24] sm:$0xf]
        %v1891 = vld [vmem:[%s1880 + $0x28] sm:$0xf]
        %v1892 = vld [vmem:[%s1880 + $0x2c] sm:$0xf]
        %v1893 = vld [vmem:[%s1880 + $0x30] sm:$0xf]
        %v1894 = vld [vmem:[%s1880 + $0x34] sm:$0xf]
        %v1895 = vld [vmem:[%s1880 + $0x38] sm:$0xf]
        %v1896 = vld [vmem:[%s1880 + $0x3c] sm:$0xf]
        %v1913 = vunpack.c.l.b16 %v1881
        %v1914 = vunpack.c.l.b16 %v1882
        %v1915 = vunpack.c.l.b16 %v1883
        %v1916 = vunpack.c.l.b16 %v1884
        %v1917 = vunpack.c.l.b16 %v1885
        %v1918 = vunpack.c.l.b16 %v1886
        %v1919 = vunpack.c.l.b16 %v1887
        %v1920 = vunpack.c.l.b16 %v1888
        %v1921 = vunpack.c.l.b16 %v1889
        %v1922 = vunpack.c.l.b16 %v1890
        %v1923 = vunpack.c.l.b16 %v1891
        %v1924 = vunpack.c.l.b16 %v1892
        %v1925 = vunpack.c.l.b16 %v1893
        %v1926 = vunpack.c.l.b16 %v1894
        %v1927 = vunpack.c.l.b16 %v1895
        %v1928 = vunpack.c.l.b16 %v1896
        %v1929 = vpack.c.b16 %v1914, %v1913
        %v1930 = vpack.c.b16 %v1916, %v1915
        %v1931 = vpack.c.b16 %v1918, %v1917
        %v1932 = vpack.c.b16 %v1920, %v1919
        %v1933 = vpack.c.b16 %v1922, %v1921
        %v1934 = vpack.c.b16 %v1924, %v1923
        %v1935 = vpack.c.b16 %v1926, %v1925
        %v1936 = vpack.c.b16 %v1928, %v1927
        %1945 = vmatprep.subr.bf16.mxu0 0
        %1946 = vmatpush1.bf16.msra.mxu0 %v1929
        %1947 = vmatprep.subr.bf16.mxu0 0
        %1948 = vmatpush1.bf16.msra.mxu0 %v1930
        %1949 = vmatprep.subr.bf16.mxu0 0
        %1950 = vmatpush1.bf16.msra.mxu0 %v1931
        %1951 = vmatprep.subr.bf16.mxu0 0
        %1952 = vmatpush1.bf16.msra.mxu0 %v1932
        %1953 = vmatprep.subr.bf16.mxu0 0
        %1954 = vmatpush1.bf16.msra.mxu0 %v1933
        %1955 = vmatprep.subr.bf16.mxu0 0
        %1956 = vmatpush1.bf16.msra.mxu0 %v1934
        %1957 = vmatprep.subr.bf16.mxu0 0
        %1958 = vmatpush1.bf16.msra.mxu0 %v1935
        %1959 = vmatprep.subr.bf16.mxu0 0
        %1960 = vmatpush1.bf16.msra.mxu0 %v1936
        %1961 = vmatprep.subr.bf16.mxu0 0
        %1962 = vmatpush1.bf16.msra.mxu0 0
        %1963 = vmatprep.subr.bf16.mxu0 0
        %1964 = vmatpush1.bf16.msra.mxu0 0
        %1965 = vmatprep.subr.bf16.mxu0 0
        %1966 = vmatpush1.bf16.msra.mxu0 0
        %1967 = vmatprep.subr.bf16.mxu0 0
        %1968 = vmatpush1.bf16.msra.mxu0 0
        %1969 = vmatprep.subr.bf16.mxu0 0
        %1970 = vmatpush1.bf16.msra.mxu0 0
        %1971 = vmatprep.subr.bf16.mxu0 0
        %1972 = vmatpush1.bf16.msra.mxu0 0
        %1973 = vmatprep.subr.bf16.mxu0 0
        %1974 = vmatpush1.bf16.msra.mxu0 0
        %1975 = vmatprep.subr.bf16.mxu0 0
        %1976 = vmatpush1.bf16.msra.mxu0 0
        %1977 = vmatprep.mubr.bf16.mxu0 0
        %1978 = vmatmul.mubr.bf16.gmra.mrb[0].mxu0 %v1014
        %v1979 = vpop.f32.mrb[0].mxu0
        %v1980 = vadd.f32 0.0, %v1979
        %v1981 = vpop.f32.mrb[0].mxu0
        %v1982 = vpop.f32.mrb[0].mxu0
        %v1983 = vadd.f32 0.0, %v1982
        %v1984 = vpop.f32.mrb[0].mxu0
        %1985 = vmatprep.mubr.bf16.mxu0 0
        %1986 = vmatmul.mubr.bf16.gmra.mrb[0].mxu0 %v1015
        %v1987 = vpop.f32.mrb[0].mxu0
        %v1988 = vadd.f32 0.0, %v1987
        %v1989 = vpop.f32.mrb[0].mxu0
        %v1990 = vpop.f32.mrb[0].mxu0
        %v1991 = vadd.f32 0.0, %v1990
        %v1992 = vpop.f32.mrb[0].mxu0
        %1993 = vmatprep.mubr.bf16.mxu0 0
        %1994 = vmatmul.mubr.bf16.gmra.mrb[0].mxu0 %v1016
        %v1995 = vpop.f32.mrb[0].mxu0
        %v1996 = vadd.f32 0.0, %v1995
        %v1997 = vpop.f32.mrb[0].mxu0
        %v1998 = vpop.f32.mrb[0].mxu0
        %v1999 = vadd.f32 0.0, %v1998
        %v2000 = vpop.f32.mrb[0].mxu0
        %2001 = vmatprep.mubr.bf16.mxu0 0
        %2002 = vmatmul.mubr.bf16.gmra.mrb[0].mxu0 %v1017
        %v2003 = vpop.f32.mrb[0].mxu0
        %v2004 = vadd.f32 0.0, %v2003
        %v2005 = vpop.f32.mrb[0].mxu0
        %v2006 = vpop.f32.mrb[0].mxu0
        %v2007 = vadd.f32 0.0, %v2006
        %v2008 = vpop.f32.mrb[0].mxu0
        %2009 = vmatprep.mubr.bf16.mxu0 0
        %2010 = vmatmul.mubr.bf16.gmra.mrb[0].mxu0 %v1018
        %v2011 = vpop.f32.mrb[0].mxu0
        %v2012 = vadd.f32 0.0, %v2011
        %v2013 = vpop.f32.mrb[0].mxu0
        %v2014 = vpop.f32.mrb[0].mxu0
        %v2015 = vadd.f32 0.0, %v2014
        %v2016 = vpop.f32.mrb[0].mxu0
        %2017 = vmatprep.mubr.bf16.mxu0 0
        %2018 = vmatmul.mubr.bf16.gmra.mrb[0].mxu0 %v1019
        %v2019 = vpop.f32.mrb[0].mxu0
        %v2020 = vadd.f32 0.0, %v2019
        %v2021 = vpop.f32.mrb[0].mxu0
        %v2022 = vpop.f32.mrb[0].mxu0
        %v2023 = vadd.f32 0.0, %v2022
        %v2024 = vpop.f32.mrb[0].mxu0
        %2025 = vmatprep.mubr.bf16.mxu0 0
        %2026 = vmatmul.mubr.bf16.gmra.mrb[0].mxu0 %v1020
        %v2027 = vpop.f32.mrb[0].mxu0
        %v2028 = vadd.f32 0.0, %v2027
        %v2029 = vpop.f32.mrb[0].mxu0
        %v2030 = vpop.f32.mrb[0].mxu0
        %v2031 = vadd.f32 0.0, %v2030
        %v2032 = vpop.f32.mrb[0].mxu0
        %2033 = vmatprep.mubr.bf16.mxu0 0
        %2034 = vmatmul.mubr.bf16.gmra.mrb[0].mxu0 %v1021
        %v2035 = vpop.f32.mrb[0].mxu0
        %v2036 = vadd.f32 0.0, %v2035
        %v2037 = vpop.f32.mrb[0].mxu0
        %v2038 = vpop.f32.mrb[0].mxu0
        %v2039 = vadd.f32 0.0, %v2038
        %v2040 = vpop.f32.mrb[0].mxu0
        %2041 = vdwg.mxu0
        %v2042 = vadd.f32 %v1864, %v1980
        %v2043 = vadd.f32 %v1865, %v1983
        %v2044 = vadd.f32 %v1866, %v1988
        %v2045 = vadd.f32 %v1867, %v1991
        %v2046 = vadd.f32 %v1868, %v1996
        %v2047 = vadd.f32 %v1869, %v1999
        %v2048 = vadd.f32 %v1870, %v2004
        %v2049 = vadd.f32 %v1871, %v2007
        %v2050 = vadd.f32 %v1872, %v2012
        %v2051 = vadd.f32 %v1873, %v2015
        %v2052 = vadd.f32 %v1874, %v2020
        %v2053 = vadd.f32 %v1875, %v2023
        %v2054 = vadd.f32 %v1876, %v2028
        %v2055 = vadd.f32 %v1877, %v2031
        %v2056 = vadd.f32 %v1878, %v2036
        %v2057 = vadd.f32 %v1879, %v2039
        %s2058 = scalar_lea.vmem [#allocation10], 384
        %v2059 = vld [vmem:[%s2058] sm:$0xf]
        %v2060 = vld [vmem:[%s2058 + $0x4] sm:$0xf]
        %v2061 = vld [vmem:[%s2058 + $0x8] sm:$0xf]
        %v2062 = vld [vmem:[%s2058 + $0xc] sm:$0xf]
        %v2063 = vld [vmem:[%s2058 + $0x10] sm:$0xf]
        %v2064 = vld [vmem:[%s2058 + $0x14] sm:$0xf]
        %v2065 = vld [vmem:[%s2058 + $0x18] sm:$0xf]
        %v2066 = vld [vmem:[%s2058 + $0x1c] sm:$0xf]
        %v2067 = vld [vmem:[%s2058 + $0x20] sm:$0xf]
        %v2068 = vld [vmem:[%s2058 + $0x24] sm:$0xf]
        %v2069 = vld [vmem:[%s2058 + $0x28] sm:$0xf]
        %v2070 = vld [vmem:[%s2058 + $0x2c] sm:$0xf]
        %v2071 = vld [vmem:[%s2058 + $0x30] sm:$0xf]
        %v2072 = vld [vmem:[%s2058 + $0x34] sm:$0xf]
        %v2073 = vld [vmem:[%s2058 + $0x38] sm:$0xf]
        %v2074 = vld [vmem:[%s2058 + $0x3c] sm:$0xf]
        %v2091 = vunpack.c.l.b16 %v2059
        %v2092 = vunpack.c.l.b16 %v2060
        %v2093 = vunpack.c.l.b16 %v2061
        %v2094 = vunpack.c.l.b16 %v2062
        %v2095 = vunpack.c.l.b16 %v2063
        %v2096 = vunpack.c.l.b16 %v2064
        %v2097 = vunpack.c.l.b16 %v2065
        %v2098 = vunpack.c.l.b16 %v2066
        %v2099 = vunpack.c.l.b16 %v2067
        %v2100 = vunpack.c.l.b16 %v2068
        %v2101 = vunpack.c.l.b16 %v2069
        %v2102 = vunpack.c.l.b16 %v2070
        %v2103 = vunpack.c.l.b16 %v2071
        %v2104 = vunpack.c.l.b16 %v2072
        %v2105 = vunpack.c.l.b16 %v2073
        %v2106 = vunpack.c.l.b16 %v2074
        %v2107 = vpack.c.b16 %v2092, %v2091
        %v2108 = vpack.c.b16 %v2094, %v2093
        %v2109 = vpack.c.b16 %v2096, %v2095
        %v2110 = vpack.c.b16 %v2098, %v2097
        %v2111 = vpack.c.b16 %v2100, %v2099
        %v2112 = vpack.c.b16 %v2102, %v2101
        %v2113 = vpack.c.b16 %v2104, %v2103
        %v2114 = vpack.c.b16 %v2106, %v2105
        %2123 = vmatprep.subr.bf16.mxu0 0
        %2124 = vmatpush1.bf16.msra.mxu0 %v2107
        %2125 = vmatprep.subr.bf16.mxu0 0
        %2126 = vmatpush1.bf16.msra.mxu0 %v2108
        %2127 = vmatprep.subr.bf16.mxu0 0
        %2128 = vmatpush1.bf16.msra.mxu0 %v2109
        %2129 = vmatprep.subr.bf16.mxu0 0
        %2130 = vmatpush1.bf16.msra.mxu0 %v2110
        %2131 = vmatprep.subr.bf16.mxu0 0
        %2132 = vmatpush1.bf16.msra.mxu0 %v2111
        %2133 = vmatprep.subr.bf16.mxu0 0
        %2134 = vmatpush1.bf16.msra.mxu0 %v2112
        %2135 = vmatprep.subr.bf16.mxu0 0
        %2136 = vmatpush1.bf16.msra.mxu0 %v2113
        %2137 = vmatprep.subr.bf16.mxu0 0
        %2138 = vmatpush1.bf16.msra.mxu0 %v2114
        %2139 = vmatprep.subr.bf16.mxu0 0
        %2140 = vmatpush1.bf16.msra.mxu0 0
        %2141 = vmatprep.subr.bf16.mxu0 0
        %2142 = vmatpush1.bf16.msra.mxu0 0
        %2143 = vmatprep.subr.bf16.mxu0 0
        %2144 = vmatpush1.bf16.msra.mxu0 0
        %2145 = vmatprep.subr.bf16.mxu0 0
        %2146 = vmatpush1.bf16.msra.mxu0 0
        %2147 = vmatprep.subr.bf16.mxu0 0
        %2148 = vmatpush1.bf16.msra.mxu0 0
        %2149 = vmatprep.subr.bf16.mxu0 0
        %2150 = vmatpush1.bf16.msra.mxu0 0
        %2151 = vmatprep.subr.bf16.mxu0 0
        %2152 = vmatpush1.bf16.msra.mxu0 0
        %2153 = vmatprep.subr.bf16.mxu0 0
        %2154 = vmatpush1.bf16.msra.mxu0 0
        %2155 = vmatprep.mubr.bf16.mxu0 0
        %2156 = vmatmul.mubr.bf16.gmra.mrb[0].mxu0 %v972
        %v2157 = vpop.f32.mrb[0].mxu0
        %v2158 = vadd.f32 0.0, %v2157
        %v2159 = vpop.f32.mrb[0].mxu0
        %v2160 = vpop.f32.mrb[0].mxu0
        %v2161 = vadd.f32 0.0, %v2160
        %v2162 = vpop.f32.mrb[0].mxu0
        %2163 = vmatprep.mubr.bf16.mxu0 0
        %2164 = vmatmul.mubr.bf16.gmra.mrb[0].mxu0 %v973
        %v2165 = vpop.f32.mrb[0].mxu0
        %v2166 = vadd.f32 0.0, %v2165
        %v2167 = vpop.f32.mrb[0].mxu0
        %v2168 = vpop.f32.mrb[0].mxu0
        %v2169 = vadd.f32 0.0, %v2168
        %v2170 = vpop.f32.mrb[0].mxu0
        %2171 = vmatprep.mubr.bf16.mxu0 0
        %2172 = vmatmul.mubr.bf16.gmra.mrb[0].mxu0 %v974
        %v2173 = vpop.f32.mrb[0].mxu0
        %v2174 = vadd.f32 0.0, %v2173
        %v2175 = vpop.f32.mrb[0].mxu0
        %v2176 = vpop.f32.mrb[0].mxu0
        %v2177 = vadd.f32 0.0, %v2176
        %v2178 = vpop.f32.mrb[0].mxu0
        %2179 = vmatprep.mubr.bf16.mxu0 0
        %2180 = vmatmul.mubr.bf16.gmra.mrb[0].mxu0 %v975
        %v2181 = vpop.f32.mrb[0].mxu0
        %v2182 = vadd.f32 0.0, %v2181
        %v2183 = vpop.f32.mrb[0].mxu0
        %v2184 = vpop.f32.mrb[0].mxu0
        %v2185 = vadd.f32 0.0, %v2184
        %v2186 = vpop.f32.mrb[0].mxu0
        %2187 = vmatprep.mubr.bf16.mxu0 0
        %2188 = vmatmul.mubr.bf16.gmra.mrb[0].mxu0 %v976
        %v2189 = vpop.f32.mrb[0].mxu0
        %v2190 = vadd.f32 0.0, %v2189
        %v2191 = vpop.f32.mrb[0].mxu0
        %v2192 = vpop.f32.mrb[0].mxu0
        %v2193 = vadd.f32 0.0, %v2192
        %v2194 = vpop.f32.mrb[0].mxu0
        %2195 = vmatprep.mubr.bf16.mxu0 0
        %2196 = vmatmul.mubr.bf16.gmra.mrb[0].mxu0 %v977
        %v2197 = vpop.f32.mrb[0].mxu0
        %v2198 = vadd.f32 0.0, %v2197
        %v2199 = vpop.f32.mrb[0].mxu0
        %v2200 = vpop.f32.mrb[0].mxu0
        %v2201 = vadd.f32 0.0, %v2200
        %v2202 = vpop.f32.mrb[0].mxu0
        %2203 = vmatprep.mubr.bf16.mxu0 0
        %2204 = vmatmul.mubr.bf16.gmra.mrb[0].mxu0 %v978
        %v2205 = vpop.f32.mrb[0].mxu0
        %v2206 = vadd.f32 0.0, %v2205
        %v2207 = vpop.f32.mrb[0].mxu0
        %v2208 = vpop.f32.mrb[0].mxu0
        %v2209 = vadd.f32 0.0, %v2208
        %v2210 = vpop.f32.mrb[0].mxu0
        %2211 = vmatprep.mubr.bf16.mxu0 0
        %2212 = vmatmul.mubr.bf16.gmra.mrb[0].mxu0 %v979
        %v2213 = vpop.f32.mrb[0].mxu0
        %v2214 = vadd.f32 0.0, %v2213
        %v2215 = vpop.f32.mrb[0].mxu0
        %v2216 = vpop.f32.mrb[0].mxu0
        %v2217 = vadd.f32 0.0, %v2216
        %v2218 = vpop.f32.mrb[0].mxu0
        %2219 = vdwg.mxu0
        %v2220 = vadd.f32 %v2042, %v2158
        %v2221 = vadd.f32 %v2043, %v2161
        %v2222 = vadd.f32 %v2044, %v2166
        %v2223 = vadd.f32 %v2045, %v2169
        %v2224 = vadd.f32 %v2046, %v2174
        %v2225 = vadd.f32 %v2047, %v2177
        %v2226 = vadd.f32 %v2048, %v2182
        %v2227 = vadd.f32 %v2049, %v2185
        %v2228 = vadd.f32 %v2050, %v2190
        %v2229 = vadd.f32 %v2051, %v2193
        %v2230 = vadd.f32 %v2052, %v2198
        %v2231 = vadd.f32 %v2053, %v2201
        %v2232 = vadd.f32 %v2054, %v2206
        %v2233 = vadd.f32 %v2055, %v2209
        %v2234 = vadd.f32 %v2056, %v2214
        %v2235 = vadd.f32 %v2057, %v2217
        %s2236 = scalar_lea.vmem [#allocation10], 448
        %v2237 = vld [vmem:[%s2236] sm:$0xf]
        %v2238 = vld [vmem:[%s2236 + $0x4] sm:$0xf]
        %v2239 = vld [vmem:[%s2236 + $0x8] sm:$0xf]
        %v2240 = vld [vmem:[%s2236 + $0xc] sm:$0xf]
        %v2241 = vld [vmem:[%s2236 + $0x10] sm:$0xf]
        %v2242 = vld [vmem:[%s2236 + $0x14] sm:$0xf]
        %v2243 = vld [vmem:[%s2236 + $0x18] sm:$0xf]
        %v2244 = vld [vmem:[%s2236 + $0x1c] sm:$0xf]
        %v2245 = vld [vmem:[%s2236 + $0x20] sm:$0xf]
        %v2246 = vld [vmem:[%s2236 + $0x24] sm:$0xf]
        %v2247 = vld [vmem:[%s2236 + $0x28] sm:$0xf]
        %v2248 = vld [vmem:[%s2236 + $0x2c] sm:$0xf]
        %v2249 = vld [vmem:[%s2236 + $0x30] sm:$0xf]
        %v2250 = vld [vmem:[%s2236 + $0x34] sm:$0xf]
        %v2251 = vld [vmem:[%s2236 + $0x38] sm:$0xf]
        %v2252 = vld [vmem:[%s2236 + $0x3c] sm:$0xf]
        %v2269 = vunpack.c.l.b16 %v2237
        %v2270 = vunpack.c.l.b16 %v2238
        %v2271 = vunpack.c.l.b16 %v2239
        %v2272 = vunpack.c.l.b16 %v2240
        %v2273 = vunpack.c.l.b16 %v2241
        %v2274 = vunpack.c.l.b16 %v2242
        %v2275 = vunpack.c.l.b16 %v2243
        %v2276 = vunpack.c.l.b16 %v2244
        %v2277 = vunpack.c.l.b16 %v2245
        %v2278 = vunpack.c.l.b16 %v2246
        %v2279 = vunpack.c.l.b16 %v2247
        %v2280 = vunpack.c.l.b16 %v2248
        %v2281 = vunpack.c.l.b16 %v2249
        %v2282 = vunpack.c.l.b16 %v2250
        %v2283 = vunpack.c.l.b16 %v2251
        %v2284 = vunpack.c.l.b16 %v2252
        %v2285 = vpack.c.b16 %v2270, %v2269
        %v2286 = vpack.c.b16 %v2272, %v2271
        %v2287 = vpack.c.b16 %v2274, %v2273
        %v2288 = vpack.c.b16 %v2276, %v2275
        %v2289 = vpack.c.b16 %v2278, %v2277
        %v2290 = vpack.c.b16 %v2280, %v2279
        %v2291 = vpack.c.b16 %v2282, %v2281
        %v2292 = vpack.c.b16 %v2284, %v2283
        %2301 = vmatprep.subr.bf16.mxu0 0
        %2302 = vmatpush1.bf16.msra.mxu0 %v2285
        %2303 = vmatprep.subr.bf16.mxu0 0
        %2304 = vmatpush1.bf16.msra.mxu0 %v2286
        %2305 = vmatprep.subr.bf16.mxu0 0
        %2306 = vmatpush1.bf16.msra.mxu0 %v2287
        %2307 = vmatprep.subr.bf16.mxu0 0
        %2308 = vmatpush1.bf16.msra.mxu0 %v2288
        %2309 = vmatprep.subr.bf16.mxu0 0
        %2310 = vmatpush1.bf16.msra.mxu0 %v2289
        %2311 = vmatprep.subr.bf16.mxu0 0
        %2312 = vmatpush1.bf16.msra.mxu0 %v2290
        %2313 = vmatprep.subr.bf16.mxu0 0
        %2314 = vmatpush1.bf16.msra.mxu0 %v2291
        %2315 = vmatprep.subr.bf16.mxu0 0
        %2316 = vmatpush1.bf16.msra.mxu0 %v2292
        %2317 = vmatprep.subr.bf16.mxu0 0
        %2318 = vmatpush1.bf16.msra.mxu0 0
        %2319 = vmatprep.subr.bf16.mxu0 0
        %2320 = vmatpush1.bf16.msra.mxu0 0
        %2321 = vmatprep.subr.bf16.mxu0 0
        %2322 = vmatpush1.bf16.msra.mxu0 0
        %2323 = vmatprep.subr.bf16.mxu0 0
        %2324 = vmatpush1.bf16.msra.mxu0 0
        %2325 = vmatprep.subr.bf16.mxu0 0
        %2326 = vmatpush1.bf16.msra.mxu0 0
        %2327 = vmatprep.subr.bf16.mxu0 0
        %2328 = vmatpush1.bf16.msra.mxu0 0
        %2329 = vmatprep.subr.bf16.mxu0 0
        %2330 = vmatpush1.bf16.msra.mxu0 0
        %2331 = vmatprep.subr.bf16.mxu0 0
        %2332 = vmatpush1.bf16.msra.mxu0 0
        %2333 = vmatprep.mubr.bf16.mxu0 0
        %2334 = vmatmul.mubr.bf16.gmra.mrb[0].mxu0 %v879
        %v2335 = vpop.f32.mrb[0].mxu0
        %v2336 = vadd.f32 0.0, %v2335
        %v2337 = vpop.f32.mrb[0].mxu0
        %v2338 = vpop.f32.mrb[0].mxu0
        %v2339 = vadd.f32 0.0, %v2338
        %v2340 = vpop.f32.mrb[0].mxu0
        %2341 = vmatprep.mubr.bf16.mxu0 0
        %2342 = vmatmul.mubr.bf16.gmra.mrb[0].mxu0 %v880
        %v2343 = vpop.f32.mrb[0].mxu0
        %v2344 = vadd.f32 0.0, %v2343
        %v2345 = vpop.f32.mrb[0].mxu0
        %v2346 = vpop.f32.mrb[0].mxu0
        %v2347 = vadd.f32 0.0, %v2346
        %v2348 = vpop.f32.mrb[0].mxu0
        %2349 = vmatprep.mubr.bf16.mxu0 0
        %2350 = vmatmul.mubr.bf16.gmra.mrb[0].mxu0 %v881
        %v2351 = vpop.f32.mrb[0].mxu0
        %v2352 = vadd.f32 0.0, %v2351
        %v2353 = vpop.f32.mrb[0].mxu0
        %v2354 = vpop.f32.mrb[0].mxu0
        %v2355 = vadd.f32 0.0, %v2354
        %v2356 = vpop.f32.mrb[0].mxu0
        %2357 = vmatprep.mubr.bf16.mxu0 0
        %2358 = vmatmul.mubr.bf16.gmra.mrb[0].mxu0 %v882
        %v2359 = vpop.f32.mrb[0].mxu0
        %v2360 = vadd.f32 0.0, %v2359
        %v2361 = vpop.f32.mrb[0].mxu0
        %v2362 = vpop.f32.mrb[0].mxu0
        %v2363 = vadd.f32 0.0, %v2362
        %v2364 = vpop.f32.mrb[0].mxu0
        %2365 = vmatprep.mubr.bf16.mxu0 0
        %2366 = vmatmul.mubr.bf16.gmra.mrb[0].mxu0 %v883
        %v2367 = vpop.f32.mrb[0].mxu0
        %v2368 = vadd.f32 0.0, %v2367
        %v2369 = vpop.f32.mrb[0].mxu0
        %v2370 = vpop.f32.mrb[0].mxu0
        %v2371 = vadd.f32 0.0, %v2370
        %v2372 = vpop.f32.mrb[0].mxu0
        %2373 = vmatprep.mubr.bf16.mxu0 0
        %2374 = vmatmul.mubr.bf16.gmra.mrb[0].mxu0 %v884
        %v2375 = vpop.f32.mrb[0].mxu0
        %v2376 = vadd.f32 0.0, %v2375
        %v2377 = vpop.f32.mrb[0].mxu0
        %v2378 = vpop.f32.mrb[0].mxu0
        %v2379 = vadd.f32 0.0, %v2378
        %v2380 = vpop.f32.mrb[0].mxu0
        %2381 = vmatprep.mubr.bf16.mxu0 0
        %2382 = vmatmul.mubr.bf16.gmra.mrb[0].mxu0 %v885
        %v2383 = vpop.f32.mrb[0].mxu0
        %v2384 = vadd.f32 0.0, %v2383
        %v2385 = vpop.f32.mrb[0].mxu0
        %v2386 = vpop.f32.mrb[0].mxu0
        %v2387 = vadd.f32 0.0, %v2386
        %v2388 = vpop.f32.mrb[0].mxu0
        %2389 = vmatprep.mubr.bf16.mxu0 0
        %2390 = vmatmul.mubr.bf16.gmra.mrb[0].mxu0 %v886
        %v2391 = vpop.f32.mrb[0].mxu0
        %v2392 = vadd.f32 0.0, %v2391
        %v2393 = vpop.f32.mrb[0].mxu0
        %v2394 = vpop.f32.mrb[0].mxu0
        %v2395 = vadd.f32 0.0, %v2394
        %v2396 = vpop.f32.mrb[0].mxu0
        %2397 = vdwg.mxu0
        %v2398 = vadd.f32 %v2220, %v2336
        %v2399 = vadd.f32 %v2221, %v2339
        %v2400 = vadd.f32 %v2222, %v2344
        %v2401 = vadd.f32 %v2223, %v2347
        %v2402 = vadd.f32 %v2224, %v2352
        %v2403 = vadd.f32 %v2225, %v2355
        %v2404 = vadd.f32 %v2226, %v2360
        %v2405 = vadd.f32 %v2227, %v2363
        %v2406 = vadd.f32 %v2228, %v2368
        %v2407 = vadd.f32 %v2229, %v2371
        %v2408 = vadd.f32 %v2230, %v2376
        %v2409 = vadd.f32 %v2231, %v2379
        %v2410 = vadd.f32 %v2232, %v2384
        %v2411 = vadd.f32 %v2233, %v2387
        %v2412 = vadd.f32 %v2234, %v2392
        %v2413 = vadd.f32 %v2235, %v2395
        %s2414 = scalar_lea.vmem [#allocation10], 512
        %v2415 = vld [vmem:[%s2414] sm:$0xf]
        %v2416 = vld [vmem:[%s2414 + $0x4] sm:$0xf]
        %v2417 = vld [vmem:[%s2414 + $0x8] sm:$0xf]
        %v2418 = vld [vmem:[%s2414 + $0xc] sm:$0xf]
        %v2419 = vld [vmem:[%s2414 + $0x10] sm:$0xf]
        %v2420 = vld [vmem:[%s2414 + $0x14] sm:$0xf]
        %v2421 = vld [vmem:[%s2414 + $0x18] sm:$0xf]
        %v2422 = vld [vmem:[%s2414 + $0x1c] sm:$0xf]
        %v2423 = vld [vmem:[%s2414 + $0x20] sm:$0xf]
        %v2424 = vld [vmem:[%s2414 + $0x24] sm:$0xf]
        %v2425 = vld [vmem:[%s2414 + $0x28] sm:$0xf]
        %v2426 = vld [vmem:[%s2414 + $0x2c] sm:$0xf]
        %v2427 = vld [vmem:[%s2414 + $0x30] sm:$0xf]
        %v2428 = vld [vmem:[%s2414 + $0x34] sm:$0xf]
        %v2429 = vld [vmem:[%s2414 + $0x38] sm:$0xf]
        %v2430 = vld [vmem:[%s2414 + $0x3c] sm:$0xf]
        %v2447 = vunpack.c.l.b16 %v2415
        %v2448 = vunpack.c.l.b16 %v2416
        %v2449 = vunpack.c.l.b16 %v2417
        %v2450 = vunpack.c.l.b16 %v2418
        %v2451 = vunpack.c.l.b16 %v2419
        %v2452 = vunpack.c.l.b16 %v2420
        %v2453 = vunpack.c.l.b16 %v2421
        %v2454 = vunpack.c.l.b16 %v2422
        %v2455 = vunpack.c.l.b16 %v2423
        %v2456 = vunpack.c.l.b16 %v2424
        %v2457 = vunpack.c.l.b16 %v2425
        %v2458 = vunpack.c.l.b16 %v2426
        %v2459 = vunpack.c.l.b16 %v2427
        %v2460 = vunpack.c.l.b16 %v2428
        %v2461 = vunpack.c.l.b16 %v2429
        %v2462 = vunpack.c.l.b16 %v2430
        %v2463 = vpack.c.b16 %v2448, %v2447
        %v2464 = vpack.c.b16 %v2450, %v2449
        %v2465 = vpack.c.b16 %v2452, %v2451
        %v2466 = vpack.c.b16 %v2454, %v2453
        %v2467 = vpack.c.b16 %v2456, %v2455
        %v2468 = vpack.c.b16 %v2458, %v2457
        %v2469 = vpack.c.b16 %v2460, %v2459
        %v2470 = vpack.c.b16 %v2462, %v2461
        %2479 = vmatprep.subr.bf16.mxu0 0
        %2480 = vmatpush1.bf16.msra.mxu0 %v2463
        %2481 = vmatprep.subr.bf16.mxu0 0
        %2482 = vmatpush1.bf16.msra.mxu0 %v2464
        %2483 = vmatprep.subr.bf16.mxu0 0
        %2484 = vmatpush1.bf16.msra.mxu0 %v2465
        %2485 = vmatprep.subr.bf16.mxu0 0
        %2486 = vmatpush1.bf16.msra.mxu0 %v2466
        %2487 = vmatprep.subr.bf16.mxu0 0
        %2488 = vmatpush1.bf16.msra.mxu0 %v2467
        %2489 = vmatprep.subr.bf16.mxu0 0
        %2490 = vmatpush1.bf16.msra.mxu0 %v2468
        %2491 = vmatprep.subr.bf16.mxu0 0
        %2492 = vmatpush1.bf16.msra.mxu0 %v2469
        %2493 = vmatprep.subr.bf16.mxu0 0
        %2494 = vmatpush1.bf16.msra.mxu0 %v2470
        %2495 = vmatprep.subr.bf16.mxu0 0
        %2496 = vmatpush1.bf16.msra.mxu0 0
        %2497 = vmatprep.subr.bf16.mxu0 0
        %2498 = vmatpush1.bf16.msra.mxu0 0
        %2499 = vmatprep.subr.bf16.mxu0 0
        %2500 = vmatpush1.bf16.msra.mxu0 0
        %2501 = vmatprep.subr.bf16.mxu0 0
        %2502 = vmatpush1.bf16.msra.mxu0 0
        %2503 = vmatprep.subr.bf16.mxu0 0
        %2504 = vmatpush1.bf16.msra.mxu0 0
        %2505 = vmatprep.subr.bf16.mxu0 0
        %2506 = vmatpush1.bf16.msra.mxu0 0
        %2507 = vmatprep.subr.bf16.mxu0 0
        %2508 = vmatpush1.bf16.msra.mxu0 0
        %2509 = vmatprep.subr.bf16.mxu0 0
        %2510 = vmatpush1.bf16.msra.mxu0 0
        %2511 = vmatprep.mubr.bf16.mxu0 0
        %2512 = vmatmul.mubr.bf16.gmra.mrb[0].mxu0 %v1015
        %v2513 = vpop.f32.mrb[0].mxu0
        %v2514 = vadd.f32 0.0, %v2513
        %v2515 = vpop.f32.mrb[0].mxu0
        %v2516 = vpop.f32.mrb[0].mxu0
        %v2517 = vadd.f32 0.0, %v2516
        %v2518 = vpop.f32.mrb[0].mxu0
        %2519 = vmatprep.mubr.bf16.mxu0 0
        %2520 = vmatmul.mubr.bf16.gmra.mrb[0].mxu0 %v1016
        %v2521 = vpop.f32.mrb[0].mxu0
        %v2522 = vadd.f32 0.0, %v2521
        %v2523 = vpop.f32.mrb[0].mxu0
        %v2524 = vpop.f32.mrb[0].mxu0
        %v2525 = vadd.f32 0.0, %v2524
        %v2526 = vpop.f32.mrb[0].mxu0
        %2527 = vmatprep.mubr.bf16.mxu0 0
        %2528 = vmatmul.mubr.bf16.gmra.mrb[0].mxu0 %v1017
        %v2529 = vpop.f32.mrb[0].mxu0
        %v2530 = vadd.f32 0.0, %v2529
        %v2531 = vpop.f32.mrb[0].mxu0
        %v2532 = vpop.f32.mrb[0].mxu0
        %v2533 = vadd.f32 0.0, %v2532
        %v2534 = vpop.f32.mrb[0].mxu0
        %2535 = vmatprep.mubr.bf16.mxu0 0
        %2536 = vmatmul.mubr.bf16.gmra.mrb[0].mxu0 %v1018
        %v2537 = vpop.f32.mrb[0].mxu0
        %v2538 = vadd.f32 0.0, %v2537
        %v2539 = vpop.f32.mrb[0].mxu0
        %v2540 = vpop.f32.mrb[0].mxu0
        %v2541 = vadd.f32 0.0, %v2540
        %v2542 = vpop.f32.mrb[0].mxu0
        %2543 = vmatprep.mubr.bf16.mxu0 0
        %2544 = vmatmul.mubr.bf16.gmra.mrb[0].mxu0 %v1019
        %v2545 = vpop.f32.mrb[0].mxu0
        %v2546 = vadd.f32 0.0, %v2545
        %v2547 = vpop.f32.mrb[0].mxu0
        %v2548 = vpop.f32.mrb[0].mxu0
        %v2549 = vadd.f32 0.0, %v2548
        %v2550 = vpop.f32.mrb[0].mxu0
        %2551 = vmatprep.mubr.bf16.mxu0 0
        %2552 = vmatmul.mubr.bf16.gmra.mrb[0].mxu0 %v1020
        %v2553 = vpop.f32.mrb[0].mxu0
        %v2554 = vadd.f32 0.0, %v2553
        %v2555 = vpop.f32.mrb[0].mxu0
        %v2556 = vpop.f32.mrb[0].mxu0
        %v2557 = vadd.f32 0.0, %v2556
        %v2558 = vpop.f32.mrb[0].mxu0
        %2559 = vmatprep.mubr.bf16.mxu0 0
        %2560 = vmatmul.mubr.bf16.gmra.mrb[0].mxu0 %v1021
        %v2561 = vpop.f32.mrb[0].mxu0
        %v2562 = vadd.f32 0.0, %v2561
        %v2563 = vpop.f32.mrb[0].mxu0
        %v2564 = vpop.f32.mrb[0].mxu0
        %v2565 = vadd.f32 0.0, %v2564
        %v2566 = vpop.f32.mrb[0].mxu0
        %2567 = vmatprep.mubr.bf16.mxu0 0
        %2568 = vmatmul.mubr.bf16.gmra.mrb[0].mxu0 %v1022
        %v2569 = vpop.f32.mrb[0].mxu0
        %v2570 = vadd.f32 0.0, %v2569
        %v2571 = vpop.f32.mrb[0].mxu0
        %v2572 = vpop.f32.mrb[0].mxu0
        %v2573 = vadd.f32 0.0, %v2572
        %v2574 = vpop.f32.mrb[0].mxu0
        %2575 = vdwg.mxu0
        %v2576 = vadd.f32 %v2398, %v2514
        %v2577 = vadd.f32 %v2399, %v2517
        %v2578 = vadd.f32 %v2400, %v2522
        %v2579 = vadd.f32 %v2401, %v2525
        %v2580 = vadd.f32 %v2402, %v2530
        %v2581 = vadd.f32 %v2403, %v2533
        %v2582 = vadd.f32 %v2404, %v2538
        %v2583 = vadd.f32 %v2405, %v2541
        %v2584 = vadd.f32 %v2406, %v2546
        %v2585 = vadd.f32 %v2407, %v2549
        %v2586 = vadd.f32 %v2408, %v2554
        %v2587 = vadd.f32 %v2409, %v2557
        %v2588 = vadd.f32 %v2410, %v2562
        %v2589 = vadd.f32 %v2411, %v2565
        %v2590 = vadd.f32 %v2412, %v2570
        %v2591 = vadd.f32 %v2413, %v2573
        %v2592 = vld [vmem:[%s5] sm:$0x1]
        %v2594 = vlaneseq
        %v2595 = vshrl.u32 %v2594, 7
        %v2596 = vsub.s32 0, %v2595
        %v2597 = vrot.slane %v2592, %v2596
        %v2599 = vadd.f32 %v2576, %v2597
        %v2600 = vadd.f32 %v2577, %v2597
        %v2601 = vadd.f32 %v2578, %v2597
        %v2602 = vadd.f32 %v2579, %v2597
        %v2603 = vadd.f32 %v2580, %v2597
        %v2604 = vadd.f32 %v2581, %v2597
        %v2605 = vadd.f32 %v2582, %v2597
        %v2606 = vadd.f32 %v2583, %v2597
        %v2607 = vadd.f32 %v2584, %v2597
        %v2608 = vadd.f32 %v2585, %v2597
        %v2609 = vadd.f32 %v2586, %v2597
        %v2610 = vadd.f32 %v2587, %v2597
        %v2611 = vadd.f32 %v2588, %v2597
        %v2612 = vadd.f32 %v2589, %v2597
        %v2613 = vadd.f32 %v2590, %v2597
        %v2614 = vadd.f32 %v2591, %v2597
        %v2615 = vmax.f32 %v2599, 0.0
        %v2616 = vmax.f32 %v2600, 0.0
        %v2617 = vmax.f32 %v2601, 0.0
        %v2618 = vmax.f32 %v2602, 0.0
        %v2619 = vmax.f32 %v2603, 0.0
        %v2620 = vmax.f32 %v2604, 0.0
        %v2621 = vmax.f32 %v2605, 0.0
        %v2622 = vmax.f32 %v2606, 0.0
        %v2623 = vmax.f32 %v2607, 0.0
        %v2624 = vmax.f32 %v2608, 0.0
        %v2625 = vmax.f32 %v2609, 0.0
        %v2626 = vmax.f32 %v2610, 0.0
        %v2627 = vmax.f32 %v2611, 0.0
        %v2628 = vmax.f32 %v2612, 0.0
        %v2629 = vmax.f32 %v2613, 0.0
        %v2630 = vmax.f32 %v2614, 0.0
        %v2631 = vpack.c.bf16 %v2616, %v2615
        %v2632 = vpack.c.bf16 %v2618, %v2617
        %v2633 = vpack.c.bf16 %v2620, %v2619
        %v2634 = vpack.c.bf16 %v2622, %v2621
        %v2635 = vpack.c.bf16 %v2624, %v2623
        %v2636 = vpack.c.bf16 %v2626, %v2625
        %v2637 = vpack.c.bf16 %v2628, %v2627
        %v2638 = vpack.c.bf16 %v2630, %v2629
        %v2639 = vld [vmem:[#allocation11] sm:$0xf]
        %v2640 = vld [vmem:[#allocation11 + $0x4] sm:$0xf]
        %v2641 = vld [vmem:[#allocation11 + $0x8] sm:$0xf]
        %v2642 = vld [vmem:[#allocation11 + $0xc] sm:$0xf]
        %v2643 = vld [vmem:[#allocation11 + $0x10] sm:$0xf]
        %v2644 = vld [vmem:[#allocation11 + $0x14] sm:$0xf]
        %v2645 = vld [vmem:[#allocation11 + $0x18] sm:$0xf]
        %v2646 = vld [vmem:[#allocation11 + $0x1c] sm:$0xf]
        %v2647 = vld [vmem:[#allocation11 + $0x20] sm:$0xf]
        %v2648 = vld [vmem:[#allocation11 + $0x24] sm:$0xf]
        %v2649 = vld [vmem:[#allocation11 + $0x28] sm:$0xf]
        %v2650 = vld [vmem:[#allocation11 + $0x2c] sm:$0xf]
        %v2651 = vld [vmem:[#allocation11 + $0x30] sm:$0xf]
        %v2652 = vld [vmem:[#allocation11 + $0x34] sm:$0xf]
        %v2653 = vld [vmem:[#allocation11 + $0x38] sm:$0xf]
        %v2654 = vld [vmem:[#allocation11 + $0x3c] sm:$0xf]
        %v2655 = vld [vmem:[%s7] sm:$0x1]
        %v2657 = vlaneseq
        %v2658 = vshrl.u32 %v2657, 7
        %v2659 = vsub.s32 0, %v2658
        %v2660 = vrot.slane %v2655, %v2659
        %v2678 = vunpack.c.l.b16 %v2639
        %v2679 = vunpack.c.l.b16 %v2640
        %v2680 = vunpack.c.l.b16 %v2641
        %v2681 = vunpack.c.l.b16 %v2642
        %v2682 = vunpack.c.l.b16 %v2643
        %v2683 = vunpack.c.l.b16 %v2644
        %v2684 = vunpack.c.l.b16 %v2645
        %v2685 = vunpack.c.l.b16 %v2646
        %v2686 = vunpack.c.l.b16 %v2647
        %v2687 = vunpack.c.l.b16 %v2648
        %v2688 = vunpack.c.l.b16 %v2649
        %v2689 = vunpack.c.l.b16 %v2650
        %v2690 = vunpack.c.l.b16 %v2651
        %v2691 = vunpack.c.l.b16 %v2652
        %v2692 = vunpack.c.l.b16 %v2653
        %v2693 = vunpack.c.l.b16 %v2654
        %v2694 = vpack.c.b16 %v2679, %v2678
        %v2695 = vpack.c.b16 %v2681, %v2680
        %v2696 = vpack.c.b16 %v2683, %v2682
        %v2697 = vpack.c.b16 %v2685, %v2684
        %v2698 = vpack.c.b16 %v2687, %v2686
        %v2699 = vpack.c.b16 %v2689, %v2688
        %v2700 = vpack.c.b16 %v2691, %v2690
        %v2701 = vpack.c.b16 %v2693, %v2692
        %2710 = vmatprep.subr.bf16.mxu0 0
        %2711 = vmatpush1.bf16.msra.mxu0 %v2694
        %2712 = vmatprep.subr.bf16.mxu0 0
        %2713 = vmatpush1.bf16.msra.mxu0 %v2695
        %2714 = vmatprep.subr.bf16.mxu0 0
        %2715 = vmatpush1.bf16.msra.mxu0 %v2696
        %2716 = vmatprep.subr.bf16.mxu0 0
        %2717 = vmatpush1.bf16.msra.mxu0 %v2697
        %2718 = vmatprep.subr.bf16.mxu0 0
        %2719 = vmatpush1.bf16.msra.mxu0 %v2698
        %2720 = vmatprep.subr.bf16.mxu0 0
        %2721 = vmatpush1.bf16.msra.mxu0 %v2699
        %2722 = vmatprep.subr.bf16.mxu0 0
        %2723 = vmatpush1.bf16.msra.mxu0 %v2700
        %2724 = vmatprep.subr.bf16.mxu0 0
        %2725 = vmatpush1.bf16.msra.mxu0 %v2701
        %2726 = vmatprep.subr.bf16.mxu0 0
        %2727 = vmatpush1.bf16.msra.mxu0 0
        %2728 = vmatprep.subr.bf16.mxu0 0
        %2729 = vmatpush1.bf16.msra.mxu0 0
        %2730 = vmatprep.subr.bf16.mxu0 0
        %2731 = vmatpush1.bf16.msra.mxu0 0
        %2732 = vmatprep.subr.bf16.mxu0 0
        %2733 = vmatpush1.bf16.msra.mxu0 0
        %2734 = vmatprep.subr.bf16.mxu0 0
        %2735 = vmatpush1.bf16.msra.mxu0 0
        %2736 = vmatprep.subr.bf16.mxu0 0
        %2737 = vmatpush1.bf16.msra.mxu0 0
        %2738 = vmatprep.subr.bf16.mxu0 0
        %2739 = vmatpush1.bf16.msra.mxu0 0
        %2740 = vmatprep.subr.bf16.mxu0 0
        %2741 = vmatpush1.bf16.msra.mxu0 0
        %2742 = vmatprep.mubr.bf16.mxu0 0
        %2743 = vmatmul.mubr.bf16.gmra.mrb[0].mxu0 %v2631
        %v2744 = vpop.f32.mrb[0].mxu0
        %v2745 = vadd.f32 %v2660, %v2744
        %v2746 = vpop.f32.mrb[0].mxu0
        %v2747 = vpop.f32.mrb[0].mxu0
        %v2748 = vadd.f32 %v2660, %v2747
        %v2749 = vpop.f32.mrb[0].mxu0
        %2750 = vmatprep.mubr.bf16.mxu0 0
        %2751 = vmatmul.mubr.bf16.gmra.mrb[0].mxu0 %v2632
        %v2752 = vpop.f32.mrb[0].mxu0
        %v2753 = vadd.f32 %v2660, %v2752
        %v2754 = vpop.f32.mrb[0].mxu0
        %v2755 = vpop.f32.mrb[0].mxu0
        %v2756 = vadd.f32 %v2660, %v2755
        %v2757 = vpop.f32.mrb[0].mxu0
        %2758 = vmatprep.mubr.bf16.mxu0 0
        %2759 = vmatmul.mubr.bf16.gmra.mrb[0].mxu0 %v2633
        %v2760 = vpop.f32.mrb[0].mxu0
        %v2761 = vadd.f32 %v2660, %v2760
        %v2762 = vpop.f32.mrb[0].mxu0
        %v2763 = vpop.f32.mrb[0].mxu0
        %v2764 = vadd.f32 %v2660, %v2763
        %v2765 = vpop.f32.mrb[0].mxu0
        %2766 = vmatprep.mubr.bf16.mxu0 0
        %2767 = vmatmul.mubr.bf16.gmra.mrb[0].mxu0 %v2634
        %v2768 = vpop.f32.mrb[0].mxu0
        %v2769 = vadd.f32 %v2660, %v2768
        %v2770 = vpop.f32.mrb[0].mxu0
        %v2771 = vpop.f32.mrb[0].mxu0
        %v2772 = vadd.f32 %v2660, %v2771
        %v2773 = vpop.f32.mrb[0].mxu0
        %2774 = vmatprep.mubr.bf16.mxu0 0
        %2775 = vmatmul.mubr.bf16.gmra.mrb[0].mxu0 %v2635
        %v2776 = vpop.f32.mrb[0].mxu0
        %v2777 = vadd.f32 %v2660, %v2776
        %v2778 = vpop.f32.mrb[0].mxu0
        %v2779 = vpop.f32.mrb[0].mxu0
        %v2780 = vadd.f32 %v2660, %v2779
        %v2781 = vpop.f32.mrb[0].mxu0
        %2782 = vmatprep.mubr.bf16.mxu0 0
        %2783 = vmatmul.mubr.bf16.gmra.mrb[0].mxu0 %v2636
        %v2784 = vpop.f32.mrb[0].mxu0
        %v2785 = vadd.f32 %v2660, %v2784
        %v2786 = vpop.f32.mrb[0].mxu0
        %v2787 = vpop.f32.mrb[0].mxu0
        %v2788 = vadd.f32 %v2660, %v2787
        %v2789 = vpop.f32.mrb[0].mxu0
        %2790 = vmatprep.mubr.bf16.mxu0 0
        %2791 = vmatmul.mubr.bf16.gmra.mrb[0].mxu0 %v2637
        %v2792 = vpop.f32.mrb[0].mxu0
        %v2793 = vadd.f32 %v2660, %v2792
        %v2794 = vpop.f32.mrb[0].mxu0
        %v2795 = vpop.f32.mrb[0].mxu0
        %v2796 = vadd.f32 %v2660, %v2795
        %v2797 = vpop.f32.mrb[0].mxu0
        %2798 = vmatprep.mubr.bf16.mxu0 0
        %2799 = vmatmul.mubr.bf16.gmra.mrb[0].mxu0 %v2638
        %v2800 = vpop.f32.mrb[0].mxu0
        %v2801 = vadd.f32 %v2660, %v2800
        %v2802 = vpop.f32.mrb[0].mxu0
        %v2803 = vpop.f32.mrb[0].mxu0
        %v2804 = vadd.f32 %v2660, %v2803
        %v2805 = vpop.f32.mrb[0].mxu0
        %2806 = vdwg.mxu0
        %v2807 = vunpack.c.l.bf16 %v705
        %v2808 = vunpack.c.h.bf16 %v705
        %v2809 = vunpack.c.l.bf16 %v706
        %v2810 = vunpack.c.h.bf16 %v706
        %v2811 = vunpack.c.l.bf16 %v707
        %v2812 = vunpack.c.h.bf16 %v707
        %v2813 = vunpack.c.l.bf16 %v708
        %v2814 = vunpack.c.h.bf16 %v708
        %v2815 = vunpack.c.l.bf16 %v709
        %v2816 = vunpack.c.h.bf16 %v709
        %v2817 = vunpack.c.l.bf16 %v710
        %v2818 = vunpack.c.h.bf16 %v710
        %v2819 = vunpack.c.l.bf16 %v711
        %v2820 = vunpack.c.h.bf16 %v711
        %v2821 = vunpack.c.l.bf16 %v712
        %v2822 = vunpack.c.h.bf16 %v712
        %v2823 = vadd.f32 %v2745, %v2807
        %v2824 = vadd.f32 %v2748, %v2808
        %v2825 = vadd.f32 %v2753, %v2809
        %v2826 = vadd.f32 %v2756, %v2810
        %v2827 = vadd.f32 %v2761, %v2811
        %v2828 = vadd.f32 %v2764, %v2812
        %v2829 = vadd.f32 %v2769, %v2813
        %v2830 = vadd.f32 %v2772, %v2814
        %v2831 = vadd.f32 %v2777, %v2815
        %v2832 = vadd.f32 %v2780, %v2816
        %v2833 = vadd.f32 %v2785, %v2817
        %v2834 = vadd.f32 %v2788, %v2818
        %v2835 = vadd.f32 %v2793, %v2819
        %v2836 = vadd.f32 %v2796, %v2820
        %v2837 = vadd.f32 %v2801, %v2821
        %v2838 = vadd.f32 %v2804, %v2822
        %v2839 = vmax.f32 %v2823, 0.0
        %v2840 = vmax.f32 %v2824, 0.0
        %v2841 = vmax.f32 %v2825, 0.0
        %v2842 = vmax.f32 %v2826, 0.0
        %v2843 = vmax.f32 %v2827, 0.0
        %v2844 = vmax.f32 %v2828, 0.0
        %v2845 = vmax.f32 %v2829, 0.0
        %v2846 = vmax.f32 %v2830, 0.0
        %v2847 = vmax.f32 %v2831, 0.0
        %v2848 = vmax.f32 %v2832, 0.0
        %v2849 = vmax.f32 %v2833, 0.0
        %v2850 = vmax.f32 %v2834, 0.0
        %v2851 = vmax.f32 %v2835, 0.0
        %v2852 = vmax.f32 %v2836, 0.0
        %v2853 = vmax.f32 %v2837, 0.0
        %v2854 = vmax.f32 %v2838, 0.0
        %2855 = vst [vmem:[%s360] sm:$0xff] %v2839
        %2856 = vst [vmem:[%s360 + $0x8] sm:$0xff] %v2840
        %2857 = vst [vmem:[%s360 + $0x10] sm:$0xff] %v2841
        %2858 = vst [vmem:[%s360 + $0x18] sm:$0xff] %v2842
        %2859 = vst [vmem:[%s360 + $0x20] sm:$0xff] %v2843
        %2860 = vst [vmem:[%s360 + $0x28] sm:$0xff] %v2844
        %2861 = vst [vmem:[%s360 + $0x30] sm:$0xff] %v2845
        %2862 = vst [vmem:[%s360 + $0x38] sm:$0xff] %v2846
        %2863 = vst [vmem:[%s360 + $0x40] sm:$0xff] %v2847
        %2864 = vst [vmem:[%s360 + $0x48] sm:$0xff] %v2848
        %2865 = vst [vmem:[%s360 + $0x50] sm:$0xff] %v2849
        %2866 = vst [vmem:[%s360 + $0x58] sm:$0xff] %v2850
        %2867 = vst [vmem:[%s360 + $0x60] sm:$0xff] %v2851
        %2868 = vst [vmem:[%s360 + $0x68] sm:$0xff] %v2852
        %2869 = vst [vmem:[%s360 + $0x70] sm:$0xff] %v2853
        %2870 = vst [vmem:[%s360 + $0x78] sm:$0xff] %v2854
        %s2871 = sand.u32 %s203, 1
        %s2872 = scalar_lea.sflag [#allocation7], %s2871
        %s2873 = sand.u32 %s203, 1
        %s2874 = smul.addr %s2873, 128
        %s2875 = scalar_lea.vmem [#allocation13], %s2874
        // Predicated region
        $region81: #{tpu_custom_call.1} parent=47 // pred_check
          %p2876 = pneg %p213
        $region82: #{tpu_custom_call.1} parent=47 // pred_check_branch
          %2878 = sbr.rel (%p2876) target = $region84
        $region83: #{tpu_custom_call.1} parent=47 // pred_region
          %s2879 = smul.u32 8, %s32
          %s2881 = ssub.s32 2048, 2048
          %2882 = vsyncadd %s2872, %s2881
          %s2883 = smul.addr %s2879, 2
          %s2884 = smul.addr %s31, 32
          %s2885 = sadd.s32 %s2883, %s2884
          %s2886 = smul.addr %s2885, 128
          %s2887 = scalar_lea.hbm %s8, %s2886
          %s2888 = sshll.u32 %s2875, 4
          %s2889 = int_to_ptr.vmem [resolvable:$true] %s2888
          %2894 = dma.vmem_to_hbm [thread:$0]  %s2889, 2048, %s2887, %s2872, 128, 128, 8
        $region84: #{tpu_custom_call.1} parent=47 // pred_fallthru
          _
      $region48: #{tpu_custom_call.1} parent=5 // pred_fallthru
        _
      %p2895 = scmp.le.s32.totalorder 2, %s22
      // Predicated region
      $region85: #{tpu_custom_call.1} parent=5 // pred_check
        %p2896 = pneg %p2895
      $region86: #{tpu_custom_call.1} parent=5 // pred_check_branch
        %2898 = sbr.rel (%p2896) target = $region88
      $region87: #{tpu_custom_call.1} parent=5 // pred_region
        %s2899 = ssub.s32 %s22, 2
        // Predicated region
        $region89: #{tpu_custom_call.1} parent=87 // pred_check
          %p2900 = pneg %p219
        $region90: #{tpu_custom_call.1} parent=87 // pred_check_branch
          %2902 = sbr.rel (%p2900) target = $region92
        $region91: #{tpu_custom_call.1} parent=87 // pred_region
          %s2903 = sand.u32 %s204, 1
          %s2904 = scalar_lea.sflag [#allocation7], %s2903
          %s2905 = sand.u32 %s204, 1
          %s2906 = smul.addr %s2905, 128
          %s2907 = scalar_lea.vmem [#allocation13], %s2906
          %2908 = dma.done %s2904, 2048
        $region92: #{tpu_custom_call.1} parent=87 // pred_fallthru
          _
      $region88: #{tpu_custom_call.1} parent=5 // pred_fallthru
        _
    $region6: #{tpu_custom_call.1} parent=1 // loop_footer
      %s26 = sadd.s32 1, %s22
    $region7: #{tpu_custom_call.1} parent=1 // loop_footer_branch
      %21 = sbr.rel target = $region3
    $region8: #{tpu_custom_call.1} parent=1 // loop_exit
      _
    %2909 = vsyncpa [#allocation6], 1
    %s2910 = scalar_lea.sflag [#allocation6], 1
    %2911 = vsyncpa %s2910, 1
    %2912 = vsyncpa [#allocation9], 1
    %2913 = vsyncpa [#allocation12], 1
    %2914 = vsyncpa [#allocation7], 1
    %s2915 = scalar_lea.sflag [#allocation7], 1
    %2916 = vsyncpa %s2915, 1
  %2917 = vsyncmov [#allocation4]
  %s2918 = vpop.sfrf %2917
  %p2919 = scmp.eq.s32.totalorder %s2918, 0
  %p2920 = pneg %p2919
  %2922 = shalt.err (%p2920)
  %s2923 = scalar_lea.sflag [#allocation4], 1
  %2924 = vsyncmov %s2923
  %s2925 = vpop.sfrf %2924
  %p2926 = scmp.eq.s32.totalorder %s2925, 0
  %p2927 = pneg %p2926
  %2929 = shalt.err (%p2927)

</llo_original>
